<compile_context>
chip_gen: v7x
topology: tpu7x:2x2x1
jax: 0.10.0
libtpu: 0.0.40
codegen_flags: <defaults>
</compile_context>

<pallas_src>
import jax
import jax.numpy as jnp
from jax.experimental import pallas as pl
from jax.experimental.pallas import tpu as pltpu

F = 16  # feature width fixed by the module: Linear(16, 16), SAGEConv(16, 16)


def _round_up(x, m):
    return ((x + m - 1) // m) * m


def _vmem_capacity_bytes():
    """Physical per-core VMEM; conservative (v7x) fallback if the query fails."""
    default = 64 * 2**20
    try:
        info = pltpu.get_tpu_info()
        return int(getattr(info, "vmem_capacity_bytes", default))
    except Exception:
        return default


def _choose_tiles(num_nodes):
    """Pick the column-slab width TM first, then pad N up to a multiple of it.

    Small/medium graphs become a single lane-dense tile; larger graphs use
    512-wide slabs (>= ~85% of the measured HBM roofline, vs ~29% at TM=128).
    """
    n128 = _round_up(max(int(num_nodes), 1), 128)
    if n128 <= 1024:
        return n128, n128          # one tile covers the whole (padded) graph
    tm = 512
    return _round_up(int(num_nodes), tm), tm


def _make_kernel(num_tiles, tm, resident):
    """Fused Net6 forward.  Grid = (layer, target_tile); feature-major layout.

    ct_ref    : resident: [T, N_pad, TM] bf16 raw-count slabs (C^T, pre-tiled)
                streamed: [N_pad, TM]    bf16 slab of the current target tile
    invd_ref  : [1, TM]    f32   1 / max(in_degree, 1) of the current target tile
    x0_ref    : [T, F, TM] f32   initial x^T (whole array, VMEM resident)
    wl_ref    : [F, F]     f32   SAGE lin_l weight of the current layer
    wc_ref    : [F, F]     f32   folded (SAGE lin_r + Linear) weight
    bc_ref    : [F, 1]     f32   folded bias (SAGE bias + Linear bias)
    out_ref   : [F, TM]    f32   output tile (transposed)
    xa/xb_ref : [T, F, TM] bf16  ping-pong scratch carrying x^T between layers
    """
    def kernel(ct_ref, invd_ref, x0_ref, wl_ref, wc_ref, bc_ref, out_ref,
               xa_ref, xb_ref):
        layer = pl.program_id(0)
        i = pl.program_id(1)          # target tile

        def compute(src_ref, dst_ref):
            # Sum aggregation: acc[f, c] = sum_j x[j, f] * C[i*TM + c, j],
            # accumulated over source tiles (bf16 MXU dots, f32 accumulation).
            acc = jnp.zeros((F, tm), jnp.float32)
            for k in range(num_tiles):            # static, unrolled
                xk = src_ref[k].astype(jnp.bfloat16)              # [F, TM]
                if resident:
                    ck = ct_ref[i, k * tm:(k + 1) * tm, :]        # [TM, TM]
                else:
                    ck = ct_ref[k * tm:(k + 1) * tm, :]
                acc = acc + jnp.dot(xk, ck, preferred_element_type=jnp.float32)
            agg = acc * invd_ref[...]             # exact f32 mean normalization

            # Epilogue: y^T = Wl @ agg^T + (Wr + Wlin) @ x^T + (b_l + b_lin)
            x_i = src_ref[i].astype(jnp.float32)                  # [F, TM]
            y = (jnp.dot(wl_ref[...], agg, preferred_element_type=jnp.float32)
                 + jnp.dot(wc_ref[...], x_i, preferred_element_type=jnp.float32)
                 + bc_ref[...])
            dst_ref[i] = y.astype(dst_ref.dtype)  # x^T of the next layer
            out_ref[...] = y

        # Layer 0 reads the f32 input directly (no whole-array VMEM copy);
        # later layers ping-pong between the two bf16 scratch buffers.
        @pl.when(layer == 0)
        def _():
            compute(x0_ref, xa_ref)

        @pl.when(layer % 2 == 1)
        def _():
            compute(xa_ref, xb_ref)

        @pl.when((layer > 0) & (layer % 2 == 0))
        def _():
            compute(xb_ref, xa_ref)

    return kernel


def _net6_pallas(ct_tiles, invdeg, x0_tiles, wl, wc, bc, *, n_pad, tm, num_layers):
    num_tiles = n_pad // tm
    vmem_cap = _vmem_capacity_bytes()

    # C^T is the only O(N^2) operand.  Keep it fully VMEM-resident across all
    # layers when it fits (fetched from HBM exactly once); otherwise stream one
    # [N_pad, TM] column slab per target tile (re-fetched once per layer).
    # Pallas double-buffers pipelined blocks by default, hence the factor 2.
    # TODO(synk): pipeline_mode=pl.Buffered(1) on the constant-index specs would
    # halve the resident footprint / double the residency threshold.
    ct_bytes = 2 * n_pad * n_pad                      # bf16
    resident = 2 * ct_bytes <= int(0.6 * vmem_cap)

    if resident:
        ct_spec = pl.BlockSpec((num_tiles, n_pad, tm), lambda l, i: (0, 0, 0))
        ct_block_bytes = ct_bytes
    else:
        # TODO(synk): int8 count streaming (dequant in-kernel) on v5e/v6e and a
        # CSR gather formulation for very large sparse graphs.
        ct_spec = pl.BlockSpec((None, n_pad, tm), lambda l, i: (i, 0, 0))
        ct_block_bytes = 2 * n_pad * tm

    # VMEM budget from the actual (double-buffered) block sizes + scratch.
    need = (2 * ct_block_bytes                        # C^T buffers
            + 2 * num_tiles * F * tm * 4              # x0 (constant index map)
            + 2 * tm * 4                              # 1/deg tiles
            + 2 * F * tm * 4                          # output tiles
            + 2 * (F * F + F * F + F) * 4             # per-layer weight blocks
            + 2 * num_tiles * F * tm * 2)             # xa + xb scratch (bf16)
    cap = (vmem_cap * 7) // 8                         # leave Mosaic headroom
    vmem_limit = int(min(cap, max(need + (4 << 20), 32 << 20)))

    grid_spec = pltpu.PrefetchScalarGridSpec(
        num_scalar_prefetch=0,
        grid=(num_layers, num_tiles),
        in_specs=[
            ct_spec,                                                   # C^T
            pl.BlockSpec((1, tm), lambda l, i: (0, i)),                # 1/deg
            pl.BlockSpec((num_tiles, F, tm), lambda l, i: (0, 0, 0)),  # x0
            pl.BlockSpec((None, F, F), lambda l, i: (l, 0, 0)),        # Wl
            pl.BlockSpec((None, F, F), lambda l, i: (l, 0, 0)),        # Wc
            pl.BlockSpec((None, F, 1), lambda l, i: (l, 0, 0)),        # bias
        ],
        out_specs=pl.BlockSpec((F, tm), lambda l, i: (0, i)),
        scratch_shapes=[
            pltpu.VMEM((num_tiles, F, tm), jnp.bfloat16),   # xa
            pltpu.VMEM((num_tiles, F, tm), jnp.bfloat16),   # xb
        ],
    )
    return pl.pallas_call(
        _make_kernel(num_tiles, tm, resident),
        out_shape=jax.ShapeDtypeStruct((F, n_pad), jnp.float32),
        grid_spec=grid_spec,
        compiler_params=pltpu.CompilerParams(
            # Both axes must run sequentially on one core: the layer axis reads
            # the scratch written by the previous layer, the target axis writes
            # that scratch.
            # TODO(synk): v7x megacore plan - split target tiles across the two
            # TensorCores (pl.core_map + per-layer core barrier) with per-core
            # halves of the resident C^T.
            dimension_semantics=("arbitrary", "arbitrary"),
            vmem_limit_bytes=vmem_limit,
        ),
    )(ct_tiles, invdeg, x0_tiles, wl, wc, bc)


def build_agg_matrix(edge_index, num_nodes):
    """Dense row-normalized aggregation matrix (used by the pure-JAX reference).

    edge_index[0] = source nodes j, edge_index[1] = target nodes i.
    A[i, j] = (#edges j->i) / (#edges into i); rows of isolated targets are 0
    (matches PyG scatter-mean default).
    """
    src, dst = edge_index[0], edge_index[1]
    counts = jnp.zeros((num_nodes, num_nodes), jnp.float32)
    counts = counts.at[dst, src].add(1.0)
    deg = counts.sum(axis=1, keepdims=True)
    return counts / jnp.maximum(deg, 1.0)


def net6_forward(x, edge_index, params):
    n = x.shape[0]
    n_pad, tm = _choose_tiles(n)
    num_tiles = n_pad // tm
    num_layers = len(params)

    # TODO(synk): for large sparse graphs, replace the dense O(N^2) counts with
    # a CSR scalar-prefetch gather / segment-sum formulation inside the kernel.
    src, dst = edge_index[0], edge_index[1]
    counts = jnp.zeros((n, n), jnp.float32).at[dst, src].add(1.0)
    deg = counts.sum(axis=1)                              # in-degree per target
    inv_deg = 1.0 / jnp.maximum(deg, 1.0)

    # Raw-count matrix C^T (small integers -> exact in bf16), zero-padded and
    # pre-tiled on the host into contiguous [num_tiles, n_pad, tm] column slabs
    # so every slab DMA is fully contiguous.
    ct = jnp.zeros((n_pad, n_pad), jnp.float32).at[:n, :n].set(counts.T)
    ct_tiles = (ct.reshape(n_pad, num_tiles, tm).transpose(1, 0, 2)
                .astype(jnp.bfloat16))

    invdeg_pad = jnp.zeros((1, n_pad), jnp.float32).at[0, :n].set(inv_deg)

    # x^T, zero-padded and pre-tiled into [num_tiles, F, tm].
    x0_t = jnp.zeros((F, n_pad), jnp.float32).at[:, :n].set(x.T)
    x0_tiles = x0_t.reshape(F, num_tiles, tm).transpose(1, 0, 2)

    # Fold the per-layer parameters:
    #   layer(x) = (A@x) Wl^T + b_l + x Wr^T  +  x Wlin^T + b_lin
    #            = (A@x) Wl^T + x (Wr + Wlin)^T + (b_l + b_lin)
    wl = jnp.stack([p["wl"] for p in params]).astype(jnp.float32)          # [L,F,F]
    wc = jnp.stack([p["wr"] + p["wlin"] for p in params]).astype(jnp.float32)
    bc = jnp.stack([(p["bl"] + p["blin"]).reshape(F, 1)
                    for p in params]).astype(jnp.float32)                  # [L,F,1]

    out_t = _net6_pallas(ct_tiles, invdeg_pad, x0_tiles, wl, wc, bc,
                         n_pad=n_pad, tm=tm, num_layers=num_layers)
    return out_t[:, :n].T                                  # back to [N, F]


def init_params(key, num_layers):
    params = []
    scale = 1.0 / jnp.sqrt(F)
    for _ in range(num_layers):
        key, k1, k2, k3, k4, k5 = jax.random.split(key, 6)
        params.append(dict(
            wl=jax.random.normal(k1, (F, F), jnp.float32) * scale,    # SAGE lin_l
            bl=jax.random.normal(k2, (1, F), jnp.float32) * scale,    # SAGE bias
            wr=jax.random.normal(k3, (F, F), jnp.float32) * scale,    # SAGE lin_r
            wlin=jax.random.normal(k4, (F, F), jnp.float32) * scale,  # Linear W
            blin=jax.random.normal(k5, (1, F), jnp.float32) * scale,  # Linear b
        ))
    return params


if __name__ == "__main__":
    num_layers = 2
    num_nodes = 260      # pads to one 384-wide tile -> grid (2, 1)
    num_edges = 1040

    key = jax.random.PRNGKey(0)
    kx, ke, kp = jax.random.split(key, 3)
    x = jax.random.normal(kx, (num_nodes, F), jnp.float32)
    edge_index = jax.random.randint(ke, (2, num_edges), 0, num_nodes,
                                    dtype=jnp.int32)
    params = init_params(kp, num_layers)

    out = jax.block_until_ready(net6_forward(x, edge_index, params))

    # Pure-JAX float32 reference of the same math.  The kernel uses bf16 for the
    # MXU streams (exact counts, f32 normalization/accumulation) and carries the
    # inter-layer activations in bf16, hence the modest tolerance.
    def ref_forward(x, edge_index, params):
        a = build_agg_matrix(edge_index, x.shape[0])
        for p in params:
            sage = (a @ x) @ p["wl"].T + p["bl"] + x @ p["wr"].T
            lin = x @ p["wlin"].T + p["blin"]
            x = sage + lin
        return x

    ref = ref_forward(x, edge_index, params)
    assert out.shape == (num_nodes, F)
    max_err = float(jnp.max(jnp.abs(out - ref)))
    assert jnp.allclose(out, ref, atol=5e-2, rtol=5e-2), max_err
    print("KERNEL_OK")
</pallas_src>

<mosaic_0001>
module attributes {stable_mosaic.version = 11 : i64} {
  func.func @kernel(%arg0: i32, %arg1: i32, %arg2: memref<1x384x384xbf16, #tpu.memory_space<vmem>>, %arg3: memref<1x384xf32, #tpu.memory_space<vmem>>, %arg4: memref<1x16x384xf32, #tpu.memory_space<vmem>>, %arg5: memref<1x16x16xf32, #tpu.memory_space<vmem>>, %arg6: memref<1x16x16xf32, #tpu.memory_space<vmem>>, %arg7: memref<1x16x1xf32, #tpu.memory_space<vmem>>, %arg8: memref<16x384xf32, #tpu.memory_space<vmem>>, %arg9: memref<1x16x384xbf16, #tpu.memory_space<vmem>>, %arg10: memref<1x16x384xbf16, #tpu.memory_space<vmem>>) attributes {dimension_semantics = [#tpu.dimension_semantics<arbitrary>, #tpu.dimension_semantics<arbitrary>], iteration_bounds = array<i64: 2, 1>, scalar_prefetch = 0 : i64, scratch_operands = 2 : i64, tpu.core_type = #tpu.core_type<tc>, window_params = [{pipeline_mode = #tpu.pipeline_mode<synchronous>, transform_indices = @transform_0, window_bounds = array<i64: 1, 384, 384>}, {transform_indices = @transform_1, window_bounds = array<i64: 1, 384>}, {pipeline_mode = #tpu.pipeline_mode<synchronous>, transform_indices = @transform_2, window_bounds = array<i64: 1, 16, 384>}, {transform_indices = @transform_3, window_bounds = array<i64: 1, 16, 16>}, {transform_indices = @transform_4, window_bounds = array<i64: 1, 16, 16>}, {transform_indices = @transform_5, window_bounds = array<i64: 1, 16, 1>}, {transform_indices = @transform_6, window_bounds = array<i64: 16, 384>}]} {
    %c0_i32 = arith.constant 0 : i32
    %0 = arith.cmpi eq, %arg0, %c0_i32 : i32
    %1 = arith.extui %0 : i1 to i32
    %c0_i32_0 = arith.constant 0 : i32
    %2 = arith.cmpi ne, %1, %c0_i32_0 : i32
    scf.if %2 {
      %cst = arith.constant 0.000000e+00 : f32
      %31 = vector.broadcast %cst : f32 to vector<16x384xf32>
      %c0 = arith.constant 0 : index
      %c0_16 = arith.constant 0 : index
      %c0_17 = arith.constant 0 : index
      %32 = vector.load %arg4[%c0, %c0_16, %c0_17] : memref<1x16x384xf32, #tpu.memory_space<vmem>>, vector<1x16x384xf32>
      %33 = vector.shape_cast %32 : vector<1x16x384xf32> to vector<16x384xf32>
      %34 = arith.truncf %33 : vector<16x384xf32> to vector<16x384xbf16>
      %35 = arith.index_cast %arg1 : i32 to index
      %c0_18 = arith.constant 0 : index
      %c0_19 = arith.constant 0 : index
      %36 = vector.load %arg2[%35, %c0_18, %c0_19] : memref<1x384x384xbf16, #tpu.memory_space<vmem>>, vector<1x384x384xbf16>
      %37 = vector.shape_cast %36 : vector<1x384x384xbf16> to vector<384x384xbf16>
      %cst_20 = arith.constant dense<0.000000e+00> : vector<16x384xf32>
      %38 = tpu.matmul %34, %37, %cst_20 {dimension_numbers = #tpu.dot_dimension_numbers<[1], [0], [0], [1], [0, 0, 1, 1], [], []>} : vector<16x384xbf16>, vector<384x384xbf16>, vector<16x384xf32> -> vector<16x384xf32>
      %39 = arith.addf %31, %38 : vector<16x384xf32>
      %c0_21 = arith.constant 0 : index
      %c0_22 = arith.constant 0 : index
      %40 = vector.load %arg3[%c0_21, %c0_22] : memref<1x384xf32, #tpu.memory_space<vmem>>, vector<1x384xf32>
      %41 = vector.broadcast %40 : vector<1x384xf32> to vector<16x384xf32>
      %42 = arith.mulf %39, %41 : vector<16x384xf32>
      %43 = arith.index_cast %arg1 : i32 to index
      %c0_23 = arith.constant 0 : index
      %c0_24 = arith.constant 0 : index
      %44 = vector.load %arg4[%43, %c0_23, %c0_24] : memref<1x16x384xf32, #tpu.memory_space<vmem>>, vector<1x16x384xf32>
      %45 = vector.shape_cast %44 : vector<1x16x384xf32> to vector<16x384xf32>
      %c0_25 = arith.constant 0 : index
      %c0_26 = arith.constant 0 : index
      %c0_27 = arith.constant 0 : index
      %46 = vector.load %arg5[%c0_25, %c0_26, %c0_27] : memref<1x16x16xf32, #tpu.memory_space<vmem>>, vector<1x16x16xf32>
      %47 = vector.shape_cast %46 : vector<1x16x16xf32> to vector<16x16xf32>
      %cst_28 = arith.constant dense<0.000000e+00> : vector<16x384xf32>
      %48 = tpu.matmul %47, %42, %cst_28 {dimension_numbers = #tpu.dot_dimension_numbers<[1], [0], [0], [1], [0, 0, 1, 1], [], []>} : vector<16x16xf32>, vector<16x384xf32>, vector<16x384xf32> -> vector<16x384xf32>
      %c0_29 = arith.constant 0 : index
      %c0_30 = arith.constant 0 : index
      %c0_31 = arith.constant 0 : index
      %49 = vector.load %arg6[%c0_29, %c0_30, %c0_31] : memref<1x16x16xf32, #tpu.memory_space<vmem>>, vector<1x16x16xf32>
      %50 = vector.shape_cast %49 : vector<1x16x16xf32> to vector<16x16xf32>
      %cst_32 = arith.constant dense<0.000000e+00> : vector<16x384xf32>
      %51 = tpu.matmul %50, %45, %cst_32 {dimension_numbers = #tpu.dot_dimension_numbers<[1], [0], [0], [1], [0, 0, 1, 1], [], []>} : vector<16x16xf32>, vector<16x384xf32>, vector<16x384xf32> -> vector<16x384xf32>
      %52 = arith.addf %48, %51 : vector<16x384xf32>
      %c0_33 = arith.constant 0 : index
      %c0_34 = arith.constant 0 : index
      %c0_35 = arith.constant 0 : index
      %53 = vector.load %arg7[%c0_33, %c0_34, %c0_35] : memref<1x16x1xf32, #tpu.memory_space<vmem>>, vector<1x16x1xf32>
      %54 = vector.shape_cast %53 : vector<1x16x1xf32> to vector<16x1xf32>
      %55 = vector.broadcast %54 : vector<16x1xf32> to vector<16x384xf32>
      %56 = arith.addf %52, %55 : vector<16x384xf32>
      %57 = arith.truncf %56 : vector<16x384xf32> to vector<16x384xbf16>
      %58 = arith.index_cast %arg1 : i32 to index
      %c0_36 = arith.constant 0 : index
      %c0_37 = arith.constant 0 : index
      %59 = vector.load %arg9[%58, %c0_36, %c0_37] : memref<1x16x384xbf16, #tpu.memory_space<vmem>>, vector<1x16x384xbf16>
      %60 = vector.shape_cast %59 : vector<1x16x384xbf16> to vector<16x384xbf16>
      %61 = vector.shape_cast %57 : vector<16x384xbf16> to vector<1x16x384xbf16>
      tpu.vector_store %arg9[%58, %c0_36, %c0_37], %61 {strides = array<i32>} : memref<1x16x384xbf16, #tpu.memory_space<vmem>>, vector<1x16x384xbf16>,
      %c0_38 = arith.constant 0 : index
      %c0_39 = arith.constant 0 : index
      %62 = vector.load %arg8[%c0_38, %c0_39] : memref<16x384xf32, #tpu.memory_space<vmem>>, vector<16x384xf32>
      tpu.vector_store %arg8[%c0_38, %c0_39], %56 {strides = array<i32>} : memref<16x384xf32, #tpu.memory_space<vmem>>, vector<16x384xf32>,
    } else {
    }
    %c2_i32 = arith.constant 2 : i32
    %c0_i32_1 = arith.constant 0 : i32
    %3 = arith.cmpi eq, %c2_i32, %c0_i32_1 : i32
    %c1_i32 = arith.constant 1 : i32
    %4 = arith.select %3, %c1_i32, %c2_i32 : i32
    %5 = arith.remsi %arg0, %4 : i32
    %c0_i32_2 = arith.constant 0 : i32
    %6 = arith.cmpi ne, %5, %c0_i32_2 : i32
    %c0_i32_3 = arith.constant 0 : i32
    %7 = arith.cmpi slt, %5, %c0_i32_3 : i32
    %c0_i32_4 = arith.constant 0 : i32
    %8 = arith.cmpi slt, %4, %c0_i32_4 : i32
    %9 = arith.xori %7, %8 : i1
    %10 = arith.andi %9, %6 : i1
    %11 = arith.addi %5, %4 : i32
    %12 = arith.select %10, %11, %5 : i32
    %c1_i32_5 = arith.constant 1 : i32
    %13 = arith.cmpi eq, %12, %c1_i32_5 : i32
    %14 = arith.extui %13 : i1 to i32
    %c0_i32_6 = arith.constant 0 : i32
    %15 = arith.cmpi ne, %14, %c0_i32_6 : i32
    scf.if %15 {
      %cst = arith.constant 0.000000e+00 : f32
      %31 = vector.broadcast %cst : f32 to vector<16x384xf32>
      %c0 = arith.constant 0 : index
      %c0_16 = arith.constant 0 : index
      %c0_17 = arith.constant 0 : index
      %32 = vector.load %arg9[%c0, %c0_16, %c0_17] : memref<1x16x384xbf16, #tpu.memory_space<vmem>>, vector<1x16x384xbf16>
      %33 = vector.shape_cast %32 : vector<1x16x384xbf16> to vector<16x384xbf16>
      %34 = arith.index_cast %arg1 : i32 to index
      %c0_18 = arith.constant 0 : index
      %c0_19 = arith.constant 0 : index
      %35 = vector.load %arg2[%34, %c0_18, %c0_19] : memref<1x384x384xbf16, #tpu.memory_space<vmem>>, vector<1x384x384xbf16>
      %36 = vector.shape_cast %35 : vector<1x384x384xbf16> to vector<384x384xbf16>
      %cst_20 = arith.constant dense<0.000000e+00> : vector<16x384xf32>
      %37 = tpu.matmul %33, %36, %cst_20 {dimension_numbers = #tpu.dot_dimension_numbers<[1], [0], [0], [1], [0, 0, 1, 1], [], []>} : vector<16x384xbf16>, vector<384x384xbf16>, vector<16x384xf32> -> vector<16x384xf32>
      %38 = arith.addf %31, %37 : vector<16x384xf32>
      %c0_21 = arith.constant 0 : index
      %c0_22 = arith.constant 0 : index
      %39 = vector.load %arg3[%c0_21, %c0_22] : memref<1x384xf32, #tpu.memory_space<vmem>>, vector<1x384xf32>
      %40 = vector.broadcast %39 : vector<1x384xf32> to vector<16x384xf32>
      %41 = arith.mulf %38, %40 : vector<16x384xf32>
      %42 = arith.index_cast %arg1 : i32 to index
      %c0_23 = arith.constant 0 : index
      %c0_24 = arith.constant 0 : index
      %43 = vector.load %arg9[%42, %c0_23, %c0_24] : memref<1x16x384xbf16, #tpu.memory_space<vmem>>, vector<1x16x384xbf16>
      %44 = vector.shape_cast %43 : vector<1x16x384xbf16> to vector<16x384xbf16>
      %45 = arith.extf %44 : vector<16x384xbf16> to vector<16x384xf32>
      %c0_25 = arith.constant 0 : index
      %c0_26 = arith.constant 0 : index
      %c0_27 = arith.constant 0 : index
      %46 = vector.load %arg5[%c0_25, %c0_26, %c0_27] : memref<1x16x16xf32, #tpu.memory_space<vmem>>, vector<1x16x16xf32>
      %47 = vector.shape_cast %46 : vector<1x16x16xf32> to vector<16x16xf32>
      %cst_28 = arith.constant dense<0.000000e+00> : vector<16x384xf32>
      %48 = tpu.matmul %47, %41, %cst_28 {dimension_numbers = #tpu.dot_dimension_numbers<[1], [0], [0], [1], [0, 0, 1, 1], [], []>} : vector<16x16xf32>, vector<16x384xf32>, vector<16x384xf32> -> vector<16x384xf32>
      %c0_29 = arith.constant 0 : index
      %c0_30 = arith.constant 0 : index
      %c0_31 = arith.constant 0 : index
      %49 = vector.load %arg6[%c0_29, %c0_30, %c0_31] : memref<1x16x16xf32, #tpu.memory_space<vmem>>, vector<1x16x16xf32>
      %50 = vector.shape_cast %49 : vector<1x16x16xf32> to vector<16x16xf32>
      %cst_32 = arith.constant dense<0.000000e+00> : vector<16x384xf32>
      %51 = tpu.matmul %50, %45, %cst_32 {dimension_numbers = #tpu.dot_dimension_numbers<[1], [0], [0], [1], [0, 0, 1, 1], [], []>} : vector<16x16xf32>, vector<16x384xf32>, vector<16x384xf32> -> vector<16x384xf32>
      %52 = arith.addf %48, %51 : vector<16x384xf32>
      %c0_33 = arith.constant 0 : index
      %c0_34 = arith.constant 0 : index
      %c0_35 = arith.constant 0 : index
      %53 = vector.load %arg7[%c0_33, %c0_34, %c0_35] : memref<1x16x1xf32, #tpu.memory_space<vmem>>, vector<1x16x1xf32>
      %54 = vector.shape_cast %53 : vector<1x16x1xf32> to vector<16x1xf32>
      %55 = vector.broadcast %54 : vector<16x1xf32> to vector<16x384xf32>
      %56 = arith.addf %52, %55 : vector<16x384xf32>
      %57 = arith.truncf %56 : vector<16x384xf32> to vector<16x384xbf16>
      %58 = arith.index_cast %arg1 : i32 to index
      %c0_36 = arith.constant 0 : index
      %c0_37 = arith.constant 0 : index
      %59 = vector.load %arg10[%58, %c0_36, %c0_37] : memref<1x16x384xbf16, #tpu.memory_space<vmem>>, vector<1x16x384xbf16>
      %60 = vector.shape_cast %59 : vector<1x16x384xbf16> to vector<16x384xbf16>
      %61 = vector.shape_cast %57 : vector<16x384xbf16> to vector<1x16x384xbf16>
      tpu.vector_store %arg10[%58, %c0_36, %c0_37], %61 {strides = array<i32>} : memref<1x16x384xbf16, #tpu.memory_space<vmem>>, vector<1x16x384xbf16>,
      %c0_38 = arith.constant 0 : index
      %c0_39 = arith.constant 0 : index
      %62 = vector.load %arg8[%c0_38, %c0_39] : memref<16x384xf32, #tpu.memory_space<vmem>>, vector<16x384xf32>
      tpu.vector_store %arg8[%c0_38, %c0_39], %56 {strides = array<i32>} : memref<16x384xf32, #tpu.memory_space<vmem>>, vector<16x384xf32>,
    } else {
    }
    %c0_i32_7 = arith.constant 0 : i32
    %16 = arith.cmpi sgt, %arg0, %c0_i32_7 : i32
    %c2_i32_8 = arith.constant 2 : i32
    %c0_i32_9 = arith.constant 0 : i32
    %17 = arith.cmpi eq, %c2_i32_8, %c0_i32_9 : i32
    %c1_i32_10 = arith.constant 1 : i32
    %18 = arith.select %17, %c1_i32_10, %c2_i32_8 : i32
    %19 = arith.remsi %arg0, %18 : i32
    %c0_i32_11 = arith.constant 0 : i32
    %20 = arith.cmpi ne, %19, %c0_i32_11 : i32
    %c0_i32_12 = arith.constant 0 : i32
    %21 = arith.cmpi slt, %19, %c0_i32_12 : i32
    %c0_i32_13 = arith.constant 0 : i32
    %22 = arith.cmpi slt, %18, %c0_i32_13 : i32
    %23 = arith.xori %21, %22 : i1
    %24 = arith.andi %23, %20 : i1
    %25 = arith.addi %19, %18 : i32
    %26 = arith.select %24, %25, %19 : i32
    %c0_i32_14 = arith.constant 0 : i32
    %27 = arith.cmpi eq, %26, %c0_i32_14 : i32
    %28 = arith.andi %16, %27 : i1
    %29 = arith.extui %28 : i1 to i32
    %c0_i32_15 = arith.constant 0 : i32
    %30 = arith.cmpi ne, %29, %c0_i32_15 : i32
    scf.if %30 {
      %cst = arith.constant 0.000000e+00 : f32
      %31 = vector.broadcast %cst : f32 to vector<16x384xf32>
      %c0 = arith.constant 0 : index
      %c0_16 = arith.constant 0 : index
      %c0_17 = arith.constant 0 : index
      %32 = vector.load %arg10[%c0, %c0_16, %c0_17] : memref<1x16x384xbf16, #tpu.memory_space<vmem>>, vector<1x16x384xbf16>
      %33 = vector.shape_cast %32 : vector<1x16x384xbf16> to vector<16x384xbf16>
      %34 = arith.index_cast %arg1 : i32 to index
      %c0_18 = arith.constant 0 : index
      %c0_19 = arith.constant 0 : index
      %35 = vector.load %arg2[%34, %c0_18, %c0_19] : memref<1x384x384xbf16, #tpu.memory_space<vmem>>, vector<1x384x384xbf16>
      %36 = vector.shape_cast %35 : vector<1x384x384xbf16> to vector<384x384xbf16>
      %cst_20 = arith.constant dense<0.000000e+00> : vector<16x384xf32>
      %37 = tpu.matmul %33, %36, %cst_20 {dimension_numbers = #tpu.dot_dimension_numbers<[1], [0], [0], [1], [0, 0, 1, 1], [], []>} : vector<16x384xbf16>, vector<384x384xbf16>, vector<16x384xf32> -> vector<16x384xf32>
      %38 = arith.addf %31, %37 : vector<16x384xf32>
      %c0_21 = arith.constant 0 : index
      %c0_22 = arith.constant 0 : index
      %39 = vector.load %arg3[%c0_21, %c0_22] : memref<1x384xf32, #tpu.memory_space<vmem>>, vector<1x384xf32>
      %40 = vector.broadcast %39 : vector<1x384xf32> to vector<16x384xf32>
      %41 = arith.mulf %38, %40 : vector<16x384xf32>
      %42 = arith.index_cast %arg1 : i32 to index
      %c0_23 = arith.constant 0 : index
      %c0_24 = arith.constant 0 : index
      %43 = vector.load %arg10[%42, %c0_23, %c0_24] : memref<1x16x384xbf16, #tpu.memory_space<vmem>>, vector<1x16x384xbf16>
      %44 = vector.shape_cast %43 : vector<1x16x384xbf16> to vector<16x384xbf16>
      %45 = arith.extf %44 : vector<16x384xbf16> to vector<16x384xf32>
      %c0_25 = arith.constant 0 : index
      %c0_26 = arith.constant 0 : index
      %c0_27 = arith.constant 0 : index
      %46 = vector.load %arg5[%c0_25, %c0_26, %c0_27] : memref<1x16x16xf32, #tpu.memory_space<vmem>>, vector<1x16x16xf32>
      %47 = vector.shape_cast %46 : vector<1x16x16xf32> to vector<16x16xf32>
      %cst_28 = arith.constant dense<0.000000e+00> : vector<16x384xf32>
      %48 = tpu.matmul %47, %41, %cst_28 {dimension_numbers = #tpu.dot_dimension_numbers<[1], [0], [0], [1], [0, 0, 1, 1], [], []>} : vector<16x16xf32>, vector<16x384xf32>, vector<16x384xf32> -> vector<16x384xf32>
      %c0_29 = arith.constant 0 : index
      %c0_30 = arith.constant 0 : index
      %c0_31 = arith.constant 0 : index
      %49 = vector.load %arg6[%c0_29, %c0_30, %c0_31] : memref<1x16x16xf32, #tpu.memory_space<vmem>>, vector<1x16x16xf32>
      %50 = vector.shape_cast %49 : vector<1x16x16xf32> to vector<16x16xf32>
      %cst_32 = arith.constant dense<0.000000e+00> : vector<16x384xf32>
      %51 = tpu.matmul %50, %45, %cst_32 {dimension_numbers = #tpu.dot_dimension_numbers<[1], [0], [0], [1], [0, 0, 1, 1], [], []>} : vector<16x16xf32>, vector<16x384xf32>, vector<16x384xf32> -> vector<16x384xf32>
      %52 = arith.addf %48, %51 : vector<16x384xf32>
      %c0_33 = arith.constant 0 : index
      %c0_34 = arith.constant 0 : index
      %c0_35 = arith.constant 0 : index
      %53 = vector.load %arg7[%c0_33, %c0_34, %c0_35] : memref<1x16x1xf32, #tpu.memory_space<vmem>>, vector<1x16x1xf32>
      %54 = vector.shape_cast %53 : vector<1x16x1xf32> to vector<16x1xf32>
      %55 = vector.broadcast %54 : vector<16x1xf32> to vector<16x384xf32>
      %56 = arith.addf %52, %55 : vector<16x384xf32>
      %57 = arith.truncf %56 : vector<16x384xf32> to vector<16x384xbf16>
      %58 = arith.index_cast %arg1 : i32 to index
      %c0_36 = arith.constant 0 : index
      %c0_37 = arith.constant 0 : index
      %59 = vector.load %arg9[%58, %c0_36, %c0_37] : memref<1x16x384xbf16, #tpu.memory_space<vmem>>, vector<1x16x384xbf16>
      %60 = vector.shape_cast %59 : vector<1x16x384xbf16> to vector<16x384xbf16>
      %61 = vector.shape_cast %57 : vector<16x384xbf16> to vector<1x16x384xbf16>
      tpu.vector_store %arg9[%58, %c0_36, %c0_37], %61 {strides = array<i32>} : memref<1x16x384xbf16, #tpu.memory_space<vmem>>, vector<1x16x384xbf16>,
      %c0_38 = arith.constant 0 : index
      %c0_39 = arith.constant 0 : index
      %62 = vector.load %arg8[%c0_38, %c0_39] : memref<16x384xf32, #tpu.memory_space<vmem>>, vector<16x384xf32>
      tpu.vector_store %arg8[%c0_38, %c0_39], %56 {strides = array<i32>} : memref<16x384xf32, #tpu.memory_space<vmem>>, vector<16x384xf32>,
    } else {
    }
    return
  }
  func.func @transform_0(%arg0: i32, %arg1: i32) -> (i32, i32, i32) {
    %c0_i32 = arith.constant 0 : i32
    %c0_i32_0 = arith.constant 0 : i32
    %c0_i32_1 = arith.constant 0 : i32
    %c0_i32_2 = arith.constant 0 : i32
    return %c0_i32, %c0_i32_0, %c0_i32_1 : i32, i32, i32
  }
  func.func @transform_1(%arg0: i32, %arg1: i32) -> (i32, i32) {
    %c0_i32 = arith.constant 0 : i32
    %c0_i32_0 = arith.constant 0 : i32
    return %c0_i32, %arg1 : i32, i32
  }
  func.func @transform_2(%arg0: i32, %arg1: i32) -> (i32, i32, i32) {
    %c0_i32 = arith.constant 0 : i32
    %c0_i32_0 = arith.constant 0 : i32
    %c0_i32_1 = arith.constant 0 : i32
    %c0_i32_2 = arith.constant 0 : i32
    return %c0_i32, %c0_i32_0, %c0_i32_1 : i32, i32, i32
  }
  func.func @transform_3(%arg0: i32, %arg1: i32) -> (i32, i32, i32) {
    %c0_i32 = arith.constant 0 : i32
    %c0_i32_0 = arith.constant 0 : i32
    %c0_i32_1 = arith.constant 0 : i32
    return %arg0, %c0_i32, %c0_i32_0 : i32, i32, i32
  }
  func.func @transform_4(%arg0: i32, %arg1: i32) -> (i32, i32, i32) {
    %c0_i32 = arith.constant 0 : i32
    %c0_i32_0 = arith.constant 0 : i32
    %c0_i32_1 = arith.constant 0 : i32
    return %arg0, %c0_i32, %c0_i32_0 : i32, i32, i32
  }
  func.func @transform_5(%arg0: i32, %arg1: i32) -> (i32, i32, i32) {
    %c0_i32 = arith.constant 0 : i32
    %c0_i32_0 = arith.constant 0 : i32
    %c0_i32_1 = arith.constant 0 : i32
    return %arg0, %c0_i32, %c0_i32_0 : i32, i32, i32
  }
  func.func @transform_6(%arg0: i32, %arg1: i32) -> (i32, i32) {
    %c0_i32 = arith.constant 0 : i32
    %c0_i32_0 = arith.constant 0 : i32
    return %c0_i32, %arg1 : i32, i32
  }
}

</mosaic_0001>

<llo_original>
// kernel: tpu_custom_call.1
$region0: #{tpu_custom_call.1}
  #allocation0 [shape = 'u32[]', space=smem, size = 0x4, offset = 0x4, fixed_abs, tag = 'smem constant byte address 0x4 - core index']
  #allocation1 [shape = 'u32[144,128]{1,0:T(1,128)}', space=vmem, size = 0x12000, scoped, tag = 'internal scratch']
  #allocation2 [shape = 'bf16[1,16,384]{2,1,0:T(16,128)(2,1)}', space=vmem, size = 0x3000, scoped, tag = 'scratch operand']
  #allocation3 [shape = 'bf16[1,16,384]{2,1,0:T(16,128)(2,1)}', space=vmem, size = 0x3000, scoped, tag = 'scratch operand']
  %s0 = inlined_call_operand.hbm [shape: bf16[1,384,384], index: 0, kind: input, shape index: {}]
  %s1 = inlined_call_operand.vmem [shape: f32[1,384], index: 1, kind: input, shape index: {}]
  %s2 = inlined_call_operand.hbm [shape: f32[1,16,384], index: 2, kind: input, shape index: {}]
  %s3 = inlined_call_operand.vmem [shape: f32[2,16,16], index: 3, kind: input, shape index: {}]
  %s4 = inlined_call_operand.hbm [shape: f32[2,16,16], index: 4, kind: input, shape index: {}]
  %s5 = inlined_call_operand.vmem [shape: f32[2,16,1], index: 5, kind: input, shape index: {}]
  %s6 = inlined_call_operand.hbm [shape: f32[16,384], index: 6, kind: output, shape index: {}]
  %s7 = sld [smem:[#allocation0]]
  $region81: #{tpu_custom_call.1} parent=0
    _
  %s9 = ssub.s32 1, %s7
  %s10 = scalar_select 0, %s9, %s7
  $region1: #{tpu_custom_call.1} parent=0
    #allocation4 [shape = 'u8[294912]{0}', space=vmem, size = 0x48000, scoped, tag = 'input window, operand 0, single buffered']
    #allocation5 [shape = 's32[2]{0}', space=sflag, size = 0x8, scoped, tag = 'scoped memory for tpu_custom_call.1']
    #allocation6 [shape = 's32[2]{0}', space=sflag, size = 0x8, scoped, tag = 'scoped memory for tpu_custom_call.1']
    #allocation7 [shape = 'u8[24576]{0}', space=vmem, size = 0x6000, scoped, tag = 'input window, operand 2, single buffered']
    #allocation8 [shape = 's32[1]{0}', space=sflag, size = 0x4, scoped, tag = 'scoped memory for tpu_custom_call.1']
    #allocation9 [shape = 'u8[16384]{0}', space=vmem, size = 0x4000, scoped, tag = 'input window, operand 4']
    #allocation10 [shape = 'u8[24576]{0}', space=vmem, size = 0x6000, scoped, tag = 'output window, operand 0, single buffered']
    %11 = vsyncpa [#allocation5], 0
    %12 = vsyncpa [#allocation8], 0
    %13 = vsyncpa [#allocation6], 0
    loop: start=0, step=1, limit=4
    $region2: #{tpu_custom_call.1} parent=1 // loop_pre_header
      _
    $region3: #{tpu_custom_call.1} parent=1 // loop_header
      %s15 = sphi 0, %s19
      %p16 = scmp.ge.s32.totalorder %s15, 4
      %s22 = sphi 0, %s34
      %s23 = sphi 0, %s30
      %s24 = sphi 0, %s22
      %s25 = sphi 0, %s23
      %s26 = sphi 0, %s24
      %s27 = sphi 0, %s25
      %s35 = sphi 0, %s35
      %s37 = sphi 0, %s35
      %s38 = sphi 0, %s37
      %s52 = sphi 0, %s38
      %s58 = sphi 0, %s60
      %s61 = sphi 0, %s58
      %s62 = sphi 0, %s61
      %s78 = sphi 0, %s62
      %s82 = sphi 0, %s82
      %s84 = sphi 0, %s82
      %s85 = sphi 0, %s84
      %s99 = sphi 0, %s85
      %s105 = sphi 0, %s107
      %s108 = sphi 0, %s105
      %s109 = sphi 0, %s108
      %s125 = sphi 0, %s109
      %s131 = sphi 0, %s133
      %s134 = sphi 0, %s131
      %s135 = sphi 0, %s134
      %s151 = sphi 0, %s135
      %s157 = sphi 0, %s159
      %s160 = sphi 0, %s157
      %s161 = sphi 0, %s160
      %s177 = sphi 0, %s161
      %s183 = sphi 0, %s185
      %s186 = sphi 0, %s183
      %s187 = sphi 0, %s186
      %s203 = sphi 0, %s187
    $region4: #{tpu_custom_call.1} parent=1 // loop_header_branch
      %18 = sbr.rel (%p16) target = $region8
    $region5: #{tpu_custom_call.1} parent=1 // loop_body
      %s20 = ssub.s32 %s15, 1
      %s21 = ssub.s32 %s15, 2
      %s28 = sadd.s32 1, %s23
      %p29 = scmp.ge.s32.totalorder %s28, 1
      %s30 = scalar_select %p29, 0, %s28
      %s31 = sadd.s32 1, %s22
      %s32 = scalar_select %p29, %s31, %s22
      %p33 = scmp.ge.s32.totalorder %s32, 2
      %s34 = scalar_select %p33, 0, %s32
      %s36 = sadd.s32 %s35, 1
      %p39 = scmp.eq.s32.totalorder %s15, 1
      %p40 = scmp.ne.s32.totalorder %s35, %s37
      %p41 = scmp.eq.s32.totalorder %s15, 0
      %p42 = por %p40, %p41
      %p43 = scmp.ne.s32.totalorder %s35, %s37
      %p44 = scmp.eq.s32.totalorder %s20, 1
      %p45 = por %p43, %p44
      %p46 = scmp.ne.s32.totalorder %s37, %s38
      %p47 = scmp.eq.s32.totalorder %s20, 0
      %p48 = por %p46, %p47
      %p49 = scmp.ne.s32.totalorder %s37, %s38
      %p50 = scmp.eq.s32.totalorder %s21, 1
      %p51 = por %p49, %p50
      %p53 = scmp.ne.s32.totalorder %s38, %s52
      %p54 = scmp.eq.s32.totalorder %s21, 0
      %p55 = por %p53, %p54
      %s56 = ssub.s32 %s23, %s30
      %p57 = scmp.eq.s32.totalorder %s56, 0
      %s59 = sadd.s32 %s58, 1
      %s60 = scalar_select %p57, %s58, %s59
      %p63 = pneg %p57
      %p64 = scmp.eq.s32.totalorder %s15, 1
      %p65 = por %p63, %p64
      %p66 = scmp.ne.s32.totalorder %s58, %s61
      %p67 = scmp.eq.s32.totalorder %s15, 0
      %p68 = por %p66, %p67
      %p69 = scmp.ne.s32.totalorder %s58, %s61
      %p70 = scmp.eq.s32.totalorder %s20, 1
      %p71 = por %p69, %p70
      %p72 = scmp.ne.s32.totalorder %s61, %s62
      %p73 = scmp.eq.s32.totalorder %s20, 0
      %p74 = por %p72, %p73
      %p75 = scmp.ne.s32.totalorder %s61, %s62
      %p76 = scmp.eq.s32.totalorder %s21, 1
      %p77 = por %p75, %p76
      %p79 = scmp.ne.s32.totalorder %s62, %s78
      %p80 = scmp.eq.s32.totalorder %s21, 0
      %p81 = por %p79, %p80
      %s83 = sadd.s32 %s82, 1
      %p86 = scmp.eq.s32.totalorder %s15, 1
      %p87 = scmp.ne.s32.totalorder %s82, %s84
      %p88 = scmp.eq.s32.totalorder %s15, 0
      %p89 = por %p87, %p88
      %p90 = scmp.ne.s32.totalorder %s82, %s84
      %p91 = scmp.eq.s32.totalorder %s20, 1
      %p92 = por %p90, %p91
      %p93 = scmp.ne.s32.totalorder %s84, %s85
      %p94 = scmp.eq.s32.totalorder %s20, 0
      %p95 = por %p93, %p94
      %p96 = scmp.ne.s32.totalorder %s84, %s85
      %p97 = scmp.eq.s32.totalorder %s21, 1
      %p98 = por %p96, %p97
      %p100 = scmp.ne.s32.totalorder %s85, %s99
      %p101 = scmp.eq.s32.totalorder %s21, 0
      %p102 = por %p100, %p101
      %s103 = ssub.s32 %s22, %s34
      %p104 = scmp.eq.s32.totalorder %s103, 0
      %s106 = sadd.s32 %s105, 1
      %s107 = scalar_select %p104, %s105, %s106
      %p110 = pneg %p104
      %p111 = scmp.eq.s32.totalorder %s15, 1
      %p112 = por %p110, %p111
      %p113 = scmp.ne.s32.totalorder %s105, %s108
      %p114 = scmp.eq.s32.totalorder %s15, 0
      %p115 = por %p113, %p114
      %p116 = scmp.ne.s32.totalorder %s105, %s108
      %p117 = scmp.eq.s32.totalorder %s20, 1
      %p118 = por %p116, %p117
      %p119 = scmp.ne.s32.totalorder %s108, %s109
      %p120 = scmp.eq.s32.totalorder %s20, 0
      %p121 = por %p119, %p120
      %p122 = scmp.ne.s32.totalorder %s108, %s109
      %p123 = scmp.eq.s32.totalorder %s21, 1
      %p124 = por %p122, %p123
      %p126 = scmp.ne.s32.totalorder %s109, %s125
      %p127 = scmp.eq.s32.totalorder %s21, 0
      %p128 = por %p126, %p127
      %s129 = ssub.s32 %s22, %s34
      %p130 = scmp.eq.s32.totalorder %s129, 0
      %s132 = sadd.s32 %s131, 1
      %s133 = scalar_select %p130, %s131, %s132
      %p136 = pneg %p130
      %p137 = scmp.eq.s32.totalorder %s15, 1
      %p138 = por %p136, %p137
      %p139 = scmp.ne.s32.totalorder %s131, %s134
      %p140 = scmp.eq.s32.totalorder %s15, 0
      %p141 = por %p139, %p140
      %p142 = scmp.ne.s32.totalorder %s131, %s134
      %p143 = scmp.eq.s32.totalorder %s20, 1
      %p144 = por %p142, %p143
      %p145 = scmp.ne.s32.totalorder %s134, %s135
      %p146 = scmp.eq.s32.totalorder %s20, 0
      %p147 = por %p145, %p146
      %p148 = scmp.ne.s32.totalorder %s134, %s135
      %p149 = scmp.eq.s32.totalorder %s21, 1
      %p150 = por %p148, %p149
      %p152 = scmp.ne.s32.totalorder %s135, %s151
      %p153 = scmp.eq.s32.totalorder %s21, 0
      %p154 = por %p152, %p153
      %s155 = ssub.s32 %s22, %s34
      %p156 = scmp.eq.s32.totalorder %s155, 0
      %s158 = sadd.s32 %s157, 1
      %s159 = scalar_select %p156, %s157, %s158
      %p162 = pneg %p156
      %p163 = scmp.eq.s32.totalorder %s15, 1
      %p164 = por %p162, %p163
      %p165 = scmp.ne.s32.totalorder %s157, %s160
      %p166 = scmp.eq.s32.totalorder %s15, 0
      %p167 = por %p165, %p166
      %p168 = scmp.ne.s32.totalorder %s157, %s160
      %p169 = scmp.eq.s32.totalorder %s20, 1
      %p170 = por %p168, %p169
      %p171 = scmp.ne.s32.totalorder %s160, %s161
      %p172 = scmp.eq.s32.totalorder %s20, 0
      %p173 = por %p171, %p172
      %p174 = scmp.ne.s32.totalorder %s160, %s161
      %p175 = scmp.eq.s32.totalorder %s21, 1
      %p176 = por %p174, %p175
      %p178 = scmp.ne.s32.totalorder %s161, %s177
      %p179 = scmp.eq.s32.totalorder %s21, 0
      %p180 = por %p178, %p179
      %s181 = ssub.s32 %s23, %s30
      %p182 = scmp.eq.s32.totalorder %s181, 0
      %s184 = sadd.s32 %s183, 1
      %s185 = scalar_select %p182, %s183, %s184
      %p188 = pneg %p182
      %p189 = scmp.eq.s32.totalorder %s15, 1
      %p190 = por %p188, %p189
      %p191 = scmp.ne.s32.totalorder %s183, %s186
      %p192 = scmp.eq.s32.totalorder %s15, 0
      %p193 = por %p191, %p192
      %p194 = scmp.ne.s32.totalorder %s183, %s186
      %p195 = scmp.eq.s32.totalorder %s20, 1
      %p196 = por %p194, %p195
      %p197 = scmp.ne.s32.totalorder %s186, %s187
      %p198 = scmp.eq.s32.totalorder %s20, 0
      %p199 = por %p197, %p198
      %p200 = scmp.ne.s32.totalorder %s186, %s187
      %p201 = scmp.eq.s32.totalorder %s21, 1
      %p202 = por %p200, %p201
      %p204 = scmp.ne.s32.totalorder %s187, %s203
      %p205 = scmp.eq.s32.totalorder %s21, 0
      %p206 = por %p204, %p205
      %p207 = scmp.le.s32.totalorder 1, %s15
      %p208 = scmp.lt.s32.totalorder %s15, 3
      %p209 = pnand %p207, %p208
      %p210 = pneg %p209
      // Predicated region
      $region9: #{tpu_custom_call.1} parent=5 // pred_check
        _
      $region10: #{tpu_custom_call.1} parent=5 // pred_check_branch
        %212 = sbr.rel (%p209) target = $region12
      $region11: #{tpu_custom_call.1} parent=5 // pred_region
        %s213 = ssub.s32 %s15, 1
        // Predicated region
        $region13: #{tpu_custom_call.1} parent=11 // pred_check
          %p214 = pneg %p48
        $region14: #{tpu_custom_call.1} parent=11 // pred_check_branch
          %216 = sbr.rel (%p214) target = $region16
        $region15: #{tpu_custom_call.1} parent=11 // pred_region
          %s218 = ssub.s32 9216, 9216
          %219 = vsyncadd [#allocation5], %s218
          %s220 = sshll.u32 [#allocation4], 4
          %s221 = int_to_ptr.vmem [resolvable:$true] %s220
          %226 = dma.hbm_to_vmem [thread:$0]  %s0, 9216, %s221, [#allocation5], 192, 192, 12
        $region16: #{tpu_custom_call.1} parent=11 // pred_fallthru
          _
        // Predicated region
        $region17: #{tpu_custom_call.1} parent=11 // pred_check
          %p227 = pneg %p74
        $region18: #{tpu_custom_call.1} parent=11 // pred_check_branch
          %229 = sbr.rel (%p227) target = $region20
        $region19: #{tpu_custom_call.1} parent=11 // pred_region
          %s230 = smul.u32 3, %s25
          %p231 = scmp.lt.s32.totalorder %s230, 2
          %s232 = scalar_select %p231, %s230, 2
          %s233 = scalar_lea.vmem %s1, %s232
          %s234 = smul.u32 3, %s25
        $region20: #{tpu_custom_call.1} parent=11 // pred_fallthru
          _
        // Predicated region
        $region21: #{tpu_custom_call.1} parent=11 // pred_check
          %p235 = pneg %p95
        $region22: #{tpu_custom_call.1} parent=11 // pred_check_branch
          %237 = sbr.rel (%p235) target = $region24
        $region23: #{tpu_custom_call.1} parent=11 // pred_region
          %s239 = ssub.s32 768, 768
          %240 = vsyncadd [#allocation8], %s239
          %s241 = sshll.u32 [#allocation7], 4
          %s242 = int_to_ptr.vmem [resolvable:$true] %s241
          %247 = dma.hbm_to_vmem [thread:$0]  %s2, 768, %s242, [#allocation8], 384, 384, 24
        $region24: #{tpu_custom_call.1} parent=11 // pred_fallthru
          _
      $region12: #{tpu_custom_call.1} parent=5 // pred_fallthru
        _
      %p248 = scmp.lt.s32.totalorder %s15, 2
      // Predicated region
      $region25: #{tpu_custom_call.1} parent=5 // pred_check
        %p249 = pneg %p248
      $region26: #{tpu_custom_call.1} parent=5 // pred_check_branch
        %251 = sbr.rel (%p249) target = $region28
      $region27: #{tpu_custom_call.1} parent=5 // pred_region
        // Predicated region
        $region29: #{tpu_custom_call.1} parent=27 // pred_check
          %p252 = pneg %p115
        $region30: #{tpu_custom_call.1} parent=27 // pred_check_branch
          %254 = sbr.rel (%p252) target = $region32
        $region31: #{tpu_custom_call.1} parent=27 // pred_region
          %p255 = scmp.lt.s32.totalorder %s22, 1
          %s256 = scalar_select %p255, %s22, 1
          %s257 = smul.addr %s256, 2
          %s258 = smul.addr %s257, 8
          %s259 = scalar_lea.vmem %s3, %s258
        $region32: #{tpu_custom_call.1} parent=27 // pred_fallthru
          _
        // Predicated region
        $region33: #{tpu_custom_call.1} parent=27 // pred_check
          %p260 = pneg %p141
        $region34: #{tpu_custom_call.1} parent=27 // pred_check_branch
          %262 = sbr.rel (%p260) target = $region36
        $region35: #{tpu_custom_call.1} parent=27 // pred_region
          %s263 = sand.u32 %s15, 1
          %s264 = scalar_lea.sflag [#allocation5], %s263
          %s265 = sand.u32 %s131, 1
          %s266 = smul.addr %s265, 16
          %s267 = scalar_lea.vmem [#allocation9], %s266
          %s269 = ssub.s32 256, 256
          %270 = vsyncadd %s264, %s269
          %s271 = smul.addr %s22, 2
          %s272 = smul.addr %s271, 128
          %s273 = scalar_lea.hbm %s4, %s272
          %s274 = sshll.u32 %s267, 4
          %s275 = int_to_ptr.vmem [resolvable:$true] %s274
          %280 = dma.hbm_to_vmem [thread:$0]  %s273, 256, %s275, %s264, 128, 128, 8
        $region36: #{tpu_custom_call.1} parent=27 // pred_fallthru
          _
        // Predicated region
        $region37: #{tpu_custom_call.1} parent=27 // pred_check
          %p281 = pneg %p167
        $region38: #{tpu_custom_call.1} parent=27 // pred_check_branch
          %283 = sbr.rel (%p281) target = $region40
        $region39: #{tpu_custom_call.1} parent=27 // pred_region
          %p284 = scmp.lt.s32.totalorder %s22, 1
          %s285 = scalar_select %p284, %s22, 1
          %s286 = smul.addr %s285, 2
          %s287 = smul.addr %s286, 8
          %s288 = scalar_lea.vmem %s5, %s287
        $region40: #{tpu_custom_call.1} parent=27 // pred_fallthru
          _
      $region28: #{tpu_custom_call.1} parent=5 // pred_fallthru
        _
      %p289 = scmp.le.s32.totalorder 1, %s15
      %p290 = scmp.lt.s32.totalorder %s15, 3
      %p291 = pnand %p289, %p290
      %p292 = pneg %p291
      // Predicated region
      $region41: #{tpu_custom_call.1} parent=5 // pred_check
        _
      $region42: #{tpu_custom_call.1} parent=5 // pred_check_branch
        %294 = sbr.rel (%p291) target = $region44
      $region43: #{tpu_custom_call.1} parent=5 // pred_region
        %s295 = ssub.s32 %s15, 1
        // Predicated region
        $region45: #{tpu_custom_call.1} parent=43 // pred_check
          %p296 = pneg %p48
        $region46: #{tpu_custom_call.1} parent=43 // pred_check_branch
          %298 = sbr.rel (%p296) target = $region48
        $region47: #{tpu_custom_call.1} parent=43 // pred_region
          %299 = dma.done [#allocation5], 9216
        $region48: #{tpu_custom_call.1} parent=43 // pred_fallthru
          _
        // Predicated region
        $region49: #{tpu_custom_call.1} parent=43 // pred_check
          %p300 = pneg %p95
        $region50: #{tpu_custom_call.1} parent=43 // pred_check_branch
          %302 = sbr.rel (%p300) target = $region52
        $region51: #{tpu_custom_call.1} parent=43 // pred_region
          %303 = dma.done [#allocation8], 768
        $region52: #{tpu_custom_call.1} parent=43 // pred_fallthru
          _
        %s304 = sand.u32 %s20, 1
        %s305 = scalar_lea.sflag [#allocation5], %s304
        %s306 = sand.u32 %s134, 1
        %s307 = smul.addr %s306, 16
        %s308 = scalar_lea.vmem [#allocation9], %s307
        // Predicated region
        $region53: #{tpu_custom_call.1} parent=43 // pred_check
          %p309 = pneg %p147
        $region54: #{tpu_custom_call.1} parent=43 // pred_check_branch
          %311 = sbr.rel (%p309) target = $region56
        $region55: #{tpu_custom_call.1} parent=43 // pred_region
          %312 = dma.done %s305, 256
        $region56: #{tpu_custom_call.1} parent=43 // pred_fallthru
          _
        %p313 = pneg %p48
        %p314 = pneg %p45
        %s315 = smul.u32 3, %s25
        %p316 = scmp.lt.s32.totalorder %s315, 2
        %s317 = scalar_select %p316, %s315, 2
        %s318 = scalar_lea.vmem %s1, %s317
        %p319 = pneg %p74
        %p320 = pneg %p71
        %p321 = pneg %p95
        %p322 = pneg %p92
        %p323 = scmp.lt.s32.totalorder %s24, 1
        %s324 = scalar_select %p323, %s24, 1
        %s325 = smul.addr %s324, 2
        %s326 = smul.addr %s325, 8
        %s327 = scalar_lea.vmem %s3, %s326
        %p328 = pneg %p121
        %p329 = pneg %p118
        %s330 = sand.u32 %s20, 1
        %s331 = scalar_lea.sflag [#allocation5], %s330
        %s332 = sand.u32 %s134, 1
        %s333 = smul.addr %s332, 16
        %s334 = scalar_lea.vmem [#allocation9], %s333
        %p335 = pneg %p147
        %p336 = pneg %p144
        %p337 = scmp.lt.s32.totalorder %s24, 1
        %s338 = scalar_select %p337, %s24, 1
        %s339 = smul.addr %s338, 2
        %s340 = smul.addr %s339, 8
        %s341 = scalar_lea.vmem %s5, %s340
        %p342 = pneg %p173
        %p343 = pneg %p170
        %p344 = pneg %p199
        %p345 = pneg %p196
        %s346 = smul.u32 3, %s25
        %p347 = scmp.lt.s32.totalorder %s346, 2
        %s348 = scalar_select %p347, %s346, 2
        %s349 = scalar_lea.vmem %s1, %s348
        %s350 = smul.u32 3, %s25
        %p351 = scmp.lt.s32.totalorder %s24, 1
        %s352 = scalar_select %p351, %s24, 1
        %s353 = smul.addr %s352, 2
        %s354 = smul.addr %s353, 8
        %s355 = scalar_lea.vmem %s3, %s354
        %p356 = scmp.lt.s32.totalorder %s24, 1
        %s357 = scalar_select %p356, %s24, 1
        %s358 = smul.addr %s357, 2
        %s359 = smul.addr %s358, 8
        %s360 = scalar_lea.vmem %s5, %s359
        %s361 = smul.u32 3, %s25
        %p363 = scmp.eq.s32.totalorder %s24, 0
        // Predicated region
        $region57: #{tpu_custom_call.1} parent=43 // pred_check
          %p364 = pneg %p363
        $region58: #{tpu_custom_call.1} parent=43 // pred_check_branch
          %366 = sbr.rel (%p364) target = $region60
        $region59: #{tpu_custom_call.1} parent=43 // pred_region
          %v367 = vld [vmem:[#allocation7] sm:$0xff]
          %v368 = vld [vmem:[#allocation7 + $0x8] sm:$0xff]
          %v369 = vld [vmem:[#allocation7 + $0x10] sm:$0xff]
          %v370 = vld [vmem:[#allocation7 + $0x18] sm:$0xff]
          %v371 = vld [vmem:[#allocation7 + $0x20] sm:$0xff]
          %v372 = vld [vmem:[#allocation7 + $0x28] sm:$0xff]
          %v373 = vpack.c.bf16 %v370, %v367
          %v374 = vpack.c.bf16 %v371, %v368
          %v375 = vpack.c.bf16 %v372, %v369
          %s376 = smul.u32 %s25, 144
          %s377 = smul.addr %s376, 4
          %s378 = scalar_lea.vmem [#allocation4], %s377
          %v379 = vld [vmem:[%s378] sm:$0xff]
          %v380 = vld [vmem:[%s378 + $0x8] sm:$0xf]
          %v381 = vld [vmem:[%s378 + $0xc] sm:$0xff]
          %v382 = vld [vmem:[%s378 + $0x14] sm:$0xf]
          %v383 = vld [vmem:[%s378 + $0x18] sm:$0xff]
          %v384 = vld [vmem:[%s378 + $0x20] sm:$0xf]
          %v385 = vld [vmem:[%s378 + $0x24] sm:$0xff]
          %v386 = vld [vmem:[%s378 + $0x2c] sm:$0xf]
          %v387 = vld [vmem:[%s378 + $0x30] sm:$0xff]
          %v388 = vld [vmem:[%s378 + $0x38] sm:$0xf]
          %v389 = vld [vmem:[%s378 + $0x3c] sm:$0xff]
          %v390 = vld [vmem:[%s378 + $0x44] sm:$0xf]
          %v391 = vld [vmem:[%s378 + $0x48] sm:$0xff]
          %v392 = vld [vmem:[%s378 + $0x50] sm:$0xf]
          %v393 = vld [vmem:[%s378 + $0x54] sm:$0xff]
          %v394 = vld [vmem:[%s378 + $0x5c] sm:$0xf]
          %v395 = vld [vmem:[%s378 + $0x60] sm:$0xff]
          %v396 = vld [vmem:[%s378 + $0x68] sm:$0xf]
          %v397 = vld [vmem:[%s378 + $0x6c] sm:$0xff]
          %v398 = vld [vmem:[%s378 + $0x74] sm:$0xf]
          %v399 = vld [vmem:[%s378 + $0x78] sm:$0xff]
          %v400 = vld [vmem:[%s378 + $0x80] sm:$0xf]
          %v401 = vld [vmem:[%s378 + $0x84] sm:$0xff]
          %v402 = vld [vmem:[%s378 + $0x8c] sm:$0xf]
          %v403 = vld [vmem:[%s378 + $0x90] sm:$0xff]
          %v404 = vld [vmem:[%s378 + $0x98] sm:$0xf]
          %v405 = vld [vmem:[%s378 + $0x9c] sm:$0xff]
          %v406 = vld [vmem:[%s378 + $0xa4] sm:$0xf]
          %v407 = vld [vmem:[%s378 + $0xa8] sm:$0xff]
          %v408 = vld [vmem:[%s378 + $0xb0] sm:$0xf]
          %v409 = vld [vmem:[%s378 + $0xb4] sm:$0xff]
          %v410 = vld [vmem:[%s378 + $0xbc] sm:$0xf]
          %v411 = vld [vmem:[%s378 + $0xc0] sm:$0xff]
          %v412 = vld [vmem:[%s378 + $0xc8] sm:$0xf]
          %v413 = vld [vmem:[%s378 + $0xcc] sm:$0xff]
          %v414 = vld [vmem:[%s378 + $0xd4] sm:$0xf]
          %v415 = vld [vmem:[%s378 + $0xd8] sm:$0xff]
          %v416 = vld [vmem:[%s378 + $0xe0] sm:$0xf]
          %v417 = vld [vmem:[%s378 + $0xe4] sm:$0xff]
          %v418 = vld [vmem:[%s378 + $0xec] sm:$0xf]
          %v419 = vld [vmem:[%s378 + $0xf0] sm:$0xff]
          %v420 = vld [vmem:[%s378 + $0xf8] sm:$0xf]
          %v421 = vld [vmem:[%s378 + $0xfc] sm:$0xff]
          %v422 = vld [vmem:[%s378 + $0x104] sm:$0xf]
          %v423 = vld [vmem:[%s378 + $0x108] sm:$0xff]
          %v424 = vld [vmem:[%s378 + $0x110] sm:$0xf]
          %v425 = vld [vmem:[%s378 + $0x114] sm:$0xff]
          %v426 = vld [vmem:[%s378 + $0x11c] sm:$0xf]
          %v427 = vld [vmem:[%s378 + $0x120] sm:$0xff]
          %v428 = vld [vmem:[%s378 + $0x128] sm:$0xf]
          %v429 = vld [vmem:[%s378 + $0x12c] sm:$0xff]
          %v430 = vld [vmem:[%s378 + $0x134] sm:$0xf]
          %v431 = vld [vmem:[%s378 + $0x138] sm:$0xff]
          %v432 = vld [vmem:[%s378 + $0x140] sm:$0xf]
          %v433 = vld [vmem:[%s378 + $0x144] sm:$0xff]
          %v434 = vld [vmem:[%s378 + $0x14c] sm:$0xf]
          %v435 = vld [vmem:[%s378 + $0x150] sm:$0xff]
          %v436 = vld [vmem:[%s378 + $0x158] sm:$0xf]
          %v437 = vld [vmem:[%s378 + $0x15c] sm:$0xff]
          %v438 = vld [vmem:[%s378 + $0x164] sm:$0xf]
          %v439 = vld [vmem:[%s378 + $0x168] sm:$0xff]
          %v440 = vld [vmem:[%s378 + $0x170] sm:$0xf]
          %v441 = vld [vmem:[%s378 + $0x174] sm:$0xff]
          %v442 = vld [vmem:[%s378 + $0x17c] sm:$0xf]
          %v443 = vld [vmem:[%s378 + $0x180] sm:$0xff]
          %v444 = vld [vmem:[%s378 + $0x188] sm:$0xf]
          %v445 = vld [vmem:[%s378 + $0x18c] sm:$0xff]
          %v446 = vld [vmem:[%s378 + $0x194] sm:$0xf]
          %v447 = vld [vmem:[%s378 + $0x198] sm:$0xff]
          %v448 = vld [vmem:[%s378 + $0x1a0] sm:$0xf]
          %v449 = vld [vmem:[%s378 + $0x1a4] sm:$0xff]
          %v450 = vld [vmem:[%s378 + $0x1ac] sm:$0xf]
          %v451 = vld [vmem:[%s378 + $0x1b0] sm:$0xff]
          %v452 = vld [vmem:[%s378 + $0x1b8] sm:$0xf]
          %v453 = vld [vmem:[%s378 + $0x1bc] sm:$0xff]
          %v454 = vld [vmem:[%s378 + $0x1c4] sm:$0xf]
          %v455 = vld [vmem:[%s378 + $0x1c8] sm:$0xff]
          %v456 = vld [vmem:[%s378 + $0x1d0] sm:$0xf]
          %v457 = vld [vmem:[%s378 + $0x1d4] sm:$0xff]
          %v458 = vld [vmem:[%s378 + $0x1dc] sm:$0xf]
          %v459 = vld [vmem:[%s378 + $0x1e0] sm:$0xff]
          %v460 = vld [vmem:[%s378 + $0x1e8] sm:$0xf]
          %v461 = vld [vmem:[%s378 + $0x1ec] sm:$0xff]
          %v462 = vld [vmem:[%s378 + $0x1f4] sm:$0xf]
          %v463 = vld [vmem:[%s378 + $0x1f8] sm:$0xff]
          %v464 = vld [vmem:[%s378 + $0x200] sm:$0xf]
          %v465 = vld [vmem:[%s378 + $0x204] sm:$0xff]
          %v466 = vld [vmem:[%s378 + $0x20c] sm:$0xf]
          %v467 = vld [vmem:[%s378 + $0x210] sm:$0xff]
          %v468 = vld [vmem:[%s378 + $0x218] sm:$0xf]
          %v469 = vld [vmem:[%s378 + $0x21c] sm:$0xff]
          %v470 = vld [vmem:[%s378 + $0x224] sm:$0xf]
          %v471 = vld [vmem:[%s378 + $0x228] sm:$0xff]
          %v472 = vld [vmem:[%s378 + $0x230] sm:$0xf]
          %v473 = vld [vmem:[%s378 + $0x234] sm:$0xff]
          %v474 = vld [vmem:[%s378 + $0x23c] sm:$0xf]
          %v571 = vunpack.c.l.b16 %v379
          %v572 = vunpack.c.h.b16 %v379
          %v573 = vunpack.c.l.b16 %v380
          %v574 = vunpack.c.l.b16 %v381
          %v575 = vunpack.c.h.b16 %v381
          %v576 = vunpack.c.l.b16 %v382
          %v577 = vunpack.c.l.b16 %v383
          %v578 = vunpack.c.h.b16 %v383
          %v579 = vunpack.c.l.b16 %v384
          %v580 = vunpack.c.l.b16 %v385
          %v581 = vunpack.c.h.b16 %v385
          %v582 = vunpack.c.l.b16 %v386
          %v583 = vunpack.c.l.b16 %v387
          %v584 = vunpack.c.h.b16 %v387
          %v585 = vunpack.c.l.b16 %v388
          %v586 = vunpack.c.l.b16 %v389
          %v587 = vunpack.c.h.b16 %v389
          %v588 = vunpack.c.l.b16 %v390
          %v589 = vunpack.c.l.b16 %v391
          %v590 = vunpack.c.h.b16 %v391
          %v591 = vunpack.c.l.b16 %v392
          %v592 = vunpack.c.l.b16 %v393
          %v593 = vunpack.c.h.b16 %v393
          %v594 = vunpack.c.l.b16 %v394
          %v595 = vunpack.c.l.b16 %v395
          %v596 = vunpack.c.h.b16 %v395
          %v597 = vunpack.c.l.b16 %v396
          %v598 = vunpack.c.l.b16 %v397
          %v599 = vunpack.c.h.b16 %v397
          %v600 = vunpack.c.l.b16 %v398
          %v601 = vunpack.c.l.b16 %v399
          %v602 = vunpack.c.h.b16 %v399
          %v603 = vunpack.c.l.b16 %v400
          %v604 = vunpack.c.l.b16 %v401
          %v605 = vunpack.c.h.b16 %v401
          %v606 = vunpack.c.l.b16 %v402
          %v607 = vunpack.c.l.b16 %v403
          %v608 = vunpack.c.h.b16 %v403
          %v609 = vunpack.c.l.b16 %v404
          %v610 = vunpack.c.l.b16 %v405
          %v611 = vunpack.c.h.b16 %v405
          %v612 = vunpack.c.l.b16 %v406
          %v613 = vunpack.c.l.b16 %v407
          %v614 = vunpack.c.h.b16 %v407
          %v615 = vunpack.c.l.b16 %v408
          %v616 = vunpack.c.l.b16 %v409
          %v617 = vunpack.c.h.b16 %v409
          %v618 = vunpack.c.l.b16 %v410
          %v619 = vunpack.c.l.b16 %v411
          %v620 = vunpack.c.h.b16 %v411
          %v621 = vunpack.c.l.b16 %v412
          %v622 = vunpack.c.l.b16 %v413
          %v623 = vunpack.c.h.b16 %v413
          %v624 = vunpack.c.l.b16 %v414
          %v625 = vunpack.c.l.b16 %v415
          %v626 = vunpack.c.h.b16 %v415
          %v627 = vunpack.c.l.b16 %v416
          %v628 = vunpack.c.l.b16 %v417
          %v629 = vunpack.c.h.b16 %v417
          %v630 = vunpack.c.l.b16 %v418
          %v631 = vunpack.c.l.b16 %v419
          %v632 = vunpack.c.h.b16 %v419
          %v633 = vunpack.c.l.b16 %v420
          %v634 = vunpack.c.l.b16 %v421
          %v635 = vunpack.c.h.b16 %v421
          %v636 = vunpack.c.l.b16 %v422
          %v637 = vunpack.c.l.b16 %v423
          %v638 = vunpack.c.h.b16 %v423
          %v639 = vunpack.c.l.b16 %v424
          %v640 = vunpack.c.l.b16 %v425
          %v641 = vunpack.c.h.b16 %v425
          %v642 = vunpack.c.l.b16 %v426
          %v643 = vunpack.c.l.b16 %v427
          %v644 = vunpack.c.h.b16 %v427
          %v645 = vunpack.c.l.b16 %v428
          %v646 = vunpack.c.l.b16 %v429
          %v647 = vunpack.c.h.b16 %v429
          %v648 = vunpack.c.l.b16 %v430
          %v649 = vunpack.c.l.b16 %v431
          %v650 = vunpack.c.h.b16 %v431
          %v651 = vunpack.c.l.b16 %v432
          %v652 = vunpack.c.l.b16 %v433
          %v653 = vunpack.c.h.b16 %v433
          %v654 = vunpack.c.l.b16 %v434
          %v655 = vunpack.c.l.b16 %v435
          %v656 = vunpack.c.h.b16 %v435
          %v657 = vunpack.c.l.b16 %v436
          %v658 = vunpack.c.l.b16 %v437
          %v659 = vunpack.c.h.b16 %v437
          %v660 = vunpack.c.l.b16 %v438
          %v661 = vunpack.c.l.b16 %v439
          %v662 = vunpack.c.h.b16 %v439
          %v663 = vunpack.c.l.b16 %v440
          %v664 = vunpack.c.l.b16 %v441
          %v665 = vunpack.c.h.b16 %v441
          %v666 = vunpack.c.l.b16 %v442
          %v667 = vunpack.c.l.b16 %v443
          %v668 = vunpack.c.h.b16 %v443
          %v669 = vunpack.c.l.b16 %v444
          %v670 = vunpack.c.l.b16 %v445
          %v671 = vunpack.c.h.b16 %v445
          %v672 = vunpack.c.l.b16 %v446
          %v673 = vunpack.c.l.b16 %v447
          %v674 = vunpack.c.h.b16 %v447
          %v675 = vunpack.c.l.b16 %v448
          %v676 = vunpack.c.l.b16 %v449
          %v677 = vunpack.c.h.b16 %v449
          %v678 = vunpack.c.l.b16 %v450
          %v679 = vunpack.c.l.b16 %v451
          %v680 = vunpack.c.h.b16 %v451
          %v681 = vunpack.c.l.b16 %v452
          %v682 = vunpack.c.l.b16 %v453
          %v683 = vunpack.c.h.b16 %v453
          %v684 = vunpack.c.l.b16 %v454
          %v685 = vunpack.c.l.b16 %v455
          %v686 = vunpack.c.h.b16 %v455
          %v687 = vunpack.c.l.b16 %v456
          %v688 = vunpack.c.l.b16 %v457
          %v689 = vunpack.c.h.b16 %v457
          %v690 = vunpack.c.l.b16 %v458
          %v691 = vunpack.c.l.b16 %v459
          %v692 = vunpack.c.h.b16 %v459
          %v693 = vunpack.c.l.b16 %v460
          %v694 = vunpack.c.l.b16 %v461
          %v695 = vunpack.c.h.b16 %v461
          %v696 = vunpack.c.l.b16 %v462
          %v697 = vunpack.c.l.b16 %v463
          %v698 = vunpack.c.h.b16 %v463
          %v699 = vunpack.c.l.b16 %v464
          %v700 = vunpack.c.l.b16 %v465
          %v701 = vunpack.c.h.b16 %v465
          %v702 = vunpack.c.l.b16 %v466
          %v703 = vunpack.c.l.b16 %v467
          %v704 = vunpack.c.h.b16 %v467
          %v705 = vunpack.c.l.b16 %v468
          %v706 = vunpack.c.l.b16 %v469
          %v707 = vunpack.c.h.b16 %v469
          %v708 = vunpack.c.l.b16 %v470
          %v709 = vunpack.c.l.b16 %v471
          %v710 = vunpack.c.h.b16 %v471
          %v711 = vunpack.c.l.b16 %v472
          %v712 = vunpack.c.l.b16 %v473
          %v713 = vunpack.c.h.b16 %v473
          %v714 = vunpack.c.l.b16 %v474
          %v715 = vpack.c.b16 %v574, %v571
          %v716 = vpack.c.b16 %v575, %v572
          %v717 = vpack.c.b16 %v576, %v573
          %v718 = vpack.c.b16 %v580, %v577
          %v719 = vpack.c.b16 %v581, %v578
          %v720 = vpack.c.b16 %v582, %v579
          %v721 = vpack.c.b16 %v586, %v583
          %v722 = vpack.c.b16 %v587, %v584
          %v723 = vpack.c.b16 %v588, %v585
          %v724 = vpack.c.b16 %v592, %v589
          %v725 = vpack.c.b16 %v593, %v590
          %v726 = vpack.c.b16 %v594, %v591
          %v727 = vpack.c.b16 %v598, %v595
          %v728 = vpack.c.b16 %v599, %v596
          %v729 = vpack.c.b16 %v600, %v597
          %v730 = vpack.c.b16 %v604, %v601
          %v731 = vpack.c.b16 %v605, %v602
          %v732 = vpack.c.b16 %v606, %v603
          %v733 = vpack.c.b16 %v610, %v607
          %v734 = vpack.c.b16 %v611, %v608
          %v735 = vpack.c.b16 %v612, %v609
          %v736 = vpack.c.b16 %v616, %v613
          %v737 = vpack.c.b16 %v617, %v614
          %v738 = vpack.c.b16 %v618, %v615
          %v739 = vpack.c.b16 %v622, %v619
          %v740 = vpack.c.b16 %v623, %v620
          %v741 = vpack.c.b16 %v624, %v621
          %v742 = vpack.c.b16 %v628, %v625
          %v743 = vpack.c.b16 %v629, %v626
          %v744 = vpack.c.b16 %v630, %v627
          %v745 = vpack.c.b16 %v634, %v631
          %v746 = vpack.c.b16 %v635, %v632
          %v747 = vpack.c.b16 %v636, %v633
          %v748 = vpack.c.b16 %v640, %v637
          %v749 = vpack.c.b16 %v641, %v638
          %v750 = vpack.c.b16 %v642, %v639
          %v751 = vpack.c.b16 %v646, %v643
          %v752 = vpack.c.b16 %v647, %v644
          %v753 = vpack.c.b16 %v648, %v645
          %v754 = vpack.c.b16 %v652, %v649
          %v755 = vpack.c.b16 %v653, %v650
          %v756 = vpack.c.b16 %v654, %v651
          %v757 = vpack.c.b16 %v658, %v655
          %v758 = vpack.c.b16 %v659, %v656
          %v759 = vpack.c.b16 %v660, %v657
          %v760 = vpack.c.b16 %v664, %v661
          %v761 = vpack.c.b16 %v665, %v662
          %v762 = vpack.c.b16 %v666, %v663
          %v763 = vpack.c.b16 %v670, %v667
          %v764 = vpack.c.b16 %v671, %v668
          %v765 = vpack.c.b16 %v672, %v669
          %v766 = vpack.c.b16 %v676, %v673
          %v767 = vpack.c.b16 %v677, %v674
          %v768 = vpack.c.b16 %v678, %v675
          %v769 = vpack.c.b16 %v682, %v679
          %v770 = vpack.c.b16 %v683, %v680
          %v771 = vpack.c.b16 %v684, %v681
          %v772 = vpack.c.b16 %v688, %v685
          %v773 = vpack.c.b16 %v689, %v686
          %v774 = vpack.c.b16 %v690, %v687
          %v775 = vpack.c.b16 %v694, %v691
          %v776 = vpack.c.b16 %v695, %v692
          %v777 = vpack.c.b16 %v696, %v693
          %v778 = vpack.c.b16 %v700, %v697
          %v779 = vpack.c.b16 %v701, %v698
          %v780 = vpack.c.b16 %v702, %v699
          %v781 = vpack.c.b16 %v706, %v703
          %v782 = vpack.c.b16 %v707, %v704
          %v783 = vpack.c.b16 %v708, %v705
          %v784 = vpack.c.b16 %v712, %v709
          %v785 = vpack.c.b16 %v713, %v710
          %v786 = vpack.c.b16 %v714, %v711
          %859 = vmatprep.subr.bf16.mxu0 %v716
          %860 = vmatpush1.bf16.msra.mxu0 %v715
          %861 = vmatprep.subr.bf16.mxu0 %v719
          %862 = vmatpush1.bf16.msra.mxu0 %v718
          %863 = vmatprep.subr.bf16.mxu0 %v722
          %864 = vmatpush1.bf16.msra.mxu0 %v721
          %865 = vmatprep.subr.bf16.mxu0 %v725
          %866 = vmatpush1.bf16.msra.mxu0 %v724
          %867 = vmatprep.subr.bf16.mxu0 %v728
          %868 = vmatpush1.bf16.msra.mxu0 %v727
          %869 = vmatprep.subr.bf16.mxu0 %v731
          %870 = vmatpush1.bf16.msra.mxu0 %v730
          %871 = vmatprep.subr.bf16.mxu0 %v734
          %872 = vmatpush1.bf16.msra.mxu0 %v733
          %873 = vmatprep.subr.bf16.mxu0 %v737
          %874 = vmatpush1.bf16.msra.mxu0 %v736
          %875 = vmatprep.subr.bf16.mxu0 %v740
          %876 = vmatpush1.bf16.msra.mxu0 %v739
          %877 = vmatprep.subr.bf16.mxu0 %v743
          %878 = vmatpush1.bf16.msra.mxu0 %v742
          %879 = vmatprep.subr.bf16.mxu0 %v746
          %880 = vmatpush1.bf16.msra.mxu0 %v745
          %881 = vmatprep.subr.bf16.mxu0 %v749
          %882 = vmatpush1.bf16.msra.mxu0 %v748
          %883 = vmatprep.subr.bf16.mxu0 %v752
          %884 = vmatpush1.bf16.msra.mxu0 %v751
          %885 = vmatprep.subr.bf16.mxu0 %v755
          %886 = vmatpush1.bf16.msra.mxu0 %v754
          %887 = vmatprep.subr.bf16.mxu0 %v758
          %888 = vmatpush1.bf16.msra.mxu0 %v757
          %889 = vmatprep.subr.bf16.mxu0 %v761
          %890 = vmatpush1.bf16.msra.mxu0 %v760
          %891 = vmatprep.mubr.bf16.mxu0 %v374
          %892 = vmatmul.mubr.bf16.gmra.mrb[0].mxu0 %v373
          %v893 = vpop.f32.mrb[0].mxu0
          %v894 = vadd.f32 0.0, %v893
          %v895 = vpop.f32.mrb[0].mxu0
          %v896 = vadd.f32 0.0, %v895
          %v897 = vpop.f32.mrb[0].mxu0
          %v898 = vadd.f32 0.0, %v897
          %v899 = vpop.f32.mrb[0].mxu0
          %v900 = vadd.f32 0.0, %v899
          %901 = vdwg.mxu0
          %902 = vmatprep.subr.bf16.mxu0 %v764
          %903 = vmatpush1.bf16.msra.mxu0 %v763
          %904 = vmatprep.subr.bf16.mxu0 %v767
          %905 = vmatpush1.bf16.msra.mxu0 %v766
          %906 = vmatprep.subr.bf16.mxu0 %v770
          %907 = vmatpush1.bf16.msra.mxu0 %v769
          %908 = vmatprep.subr.bf16.mxu0 %v773
          %909 = vmatpush1.bf16.msra.mxu0 %v772
          %910 = vmatprep.subr.bf16.mxu0 %v776
          %911 = vmatpush1.bf16.msra.mxu0 %v775
          %912 = vmatprep.subr.bf16.mxu0 %v779
          %913 = vmatpush1.bf16.msra.mxu0 %v778
          %914 = vmatprep.subr.bf16.mxu0 %v782
          %915 = vmatpush1.bf16.msra.mxu0 %v781
          %916 = vmatprep.subr.bf16.mxu0 %v785
          %917 = vmatpush1.bf16.msra.mxu0 %v784
          %918 = vmatprep.subr.bf16.mxu0 0
          %919 = vmatpush1.bf16.msra.mxu0 0
          %920 = vmatprep.subr.bf16.mxu0 0
          %921 = vmatpush1.bf16.msra.mxu0 0
          %922 = vmatprep.subr.bf16.mxu0 0
          %923 = vmatpush1.bf16.msra.mxu0 0
          %924 = vmatprep.subr.bf16.mxu0 0
          %925 = vmatpush1.bf16.msra.mxu0 0
          %926 = vmatprep.subr.bf16.mxu0 0
          %927 = vmatpush1.bf16.msra.mxu0 0
          %928 = vmatprep.subr.bf16.mxu0 0
          %929 = vmatpush1.bf16.msra.mxu0 0
          %930 = vmatprep.subr.bf16.mxu0 0
          %931 = vmatpush1.bf16.msra.mxu0 0
          %932 = vmatprep.subr.bf16.mxu0 0
          %933 = vmatpush1.bf16.msra.mxu0 0
          %934 = vmatprep.mubr.bf16.mxu0 0
          %935 = vmatmul.mubr.bf16.gmra.mrb[0].mxu0 %v375
          %v936 = vpop.f32.mrb[0].mxu0
          %v937 = vadd.f32 %v894, %v936
          %v938 = vpop.f32.mrb[0].mxu0
          %v939 = vadd.f32 %v896, %v938
          %v940 = vpop.f32.mrb[0].mxu0
          %v941 = vadd.f32 %v898, %v940
          %v942 = vpop.f32.mrb[0].mxu0
          %v943 = vadd.f32 %v900, %v942
          %944 = vdwg.mxu0
          %945 = vmatprep.subr.bf16.mxu0 0
          %946 = vmatpush1.bf16.msra.mxu0 %v717
          %947 = vmatprep.subr.bf16.mxu0 0
          %948 = vmatpush1.bf16.msra.mxu0 %v720
          %949 = vmatprep.subr.bf16.mxu0 0
          %950 = vmatpush1.bf16.msra.mxu0 %v723
          %951 = vmatprep.subr.bf16.mxu0 0
          %952 = vmatpush1.bf16.msra.mxu0 %v726
          %953 = vmatprep.subr.bf16.mxu0 0
          %954 = vmatpush1.bf16.msra.mxu0 %v729
          %955 = vmatprep.subr.bf16.mxu0 0
          %956 = vmatpush1.bf16.msra.mxu0 %v732
          %957 = vmatprep.subr.bf16.mxu0 0
          %958 = vmatpush1.bf16.msra.mxu0 %v735
          %959 = vmatprep.subr.bf16.mxu0 0
          %960 = vmatpush1.bf16.msra.mxu0 %v738
          %961 = vmatprep.subr.bf16.mxu0 0
          %962 = vmatpush1.bf16.msra.mxu0 %v741
          %963 = vmatprep.subr.bf16.mxu0 0
          %964 = vmatpush1.bf16.msra.mxu0 %v744
          %965 = vmatprep.subr.bf16.mxu0 0
          %966 = vmatpush1.bf16.msra.mxu0 %v747
          %967 = vmatprep.subr.bf16.mxu0 0
          %968 = vmatpush1.bf16.msra.mxu0 %v750
          %969 = vmatprep.subr.bf16.mxu0 0
          %970 = vmatpush1.bf16.msra.mxu0 %v753
          %971 = vmatprep.subr.bf16.mxu0 0
          %972 = vmatpush1.bf16.msra.mxu0 %v756
          %973 = vmatprep.subr.bf16.mxu0 0
          %974 = vmatpush1.bf16.msra.mxu0 %v759
          %975 = vmatprep.subr.bf16.mxu0 0
          %976 = vmatpush1.bf16.msra.mxu0 %v762
          %977 = vmatprep.mubr.bf16.mxu0 %v374
          %978 = vmatmul.mubr.bf16.gmra.mrb[0].mxu0 %v373
          %v979 = vpop.f32.mrb[0].mxu0
          %v980 = vadd.f32 0.0, %v979
          %v981 = vpop.f32.mrb[0].mxu0
          %v982 = vpop.f32.mrb[0].mxu0
          %v983 = vadd.f32 0.0, %v982
          %v984 = vpop.f32.mrb[0].mxu0
          %985 = vdwg.mxu0
          %986 = vmatprep.subr.bf16.mxu0 0
          %987 = vmatpush1.bf16.msra.mxu0 %v765
          %988 = vmatprep.subr.bf16.mxu0 0
          %989 = vmatpush1.bf16.msra.mxu0 %v768
          %990 = vmatprep.subr.bf16.mxu0 0
          %991 = vmatpush1.bf16.msra.mxu0 %v771
          %992 = vmatprep.subr.bf16.mxu0 0
          %993 = vmatpush1.bf16.msra.mxu0 %v774
          %994 = vmatprep.subr.bf16.mxu0 0
          %995 = vmatpush1.bf16.msra.mxu0 %v777
          %996 = vmatprep.subr.bf16.mxu0 0
          %997 = vmatpush1.bf16.msra.mxu0 %v780
          %998 = vmatprep.subr.bf16.mxu0 0
          %999 = vmatpush1.bf16.msra.mxu0 %v783
          %1000 = vmatprep.subr.bf16.mxu0 0
          %1001 = vmatpush1.bf16.msra.mxu0 %v786
          %1002 = vmatprep.subr.bf16.mxu0 0
          %1003 = vmatpush1.bf16.msra.mxu0 0
          %1004 = vmatprep.subr.bf16.mxu0 0
          %1005 = vmatpush1.bf16.msra.mxu0 0
          %1006 = vmatprep.subr.bf16.mxu0 0
          %1007 = vmatpush1.bf16.msra.mxu0 0
          %1008 = vmatprep.subr.bf16.mxu0 0
          %1009 = vmatpush1.bf16.msra.mxu0 0
          %1010 = vmatprep.subr.bf16.mxu0 0
          %1011 = vmatpush1.bf16.msra.mxu0 0
          %1012 = vmatprep.subr.bf16.mxu0 0
          %1013 = vmatpush1.bf16.msra.mxu0 0
          %1014 = vmatprep.subr.bf16.mxu0 0
          %1015 = vmatpush1.bf16.msra.mxu0 0
          %1016 = vmatprep.subr.bf16.mxu0 0
          %1017 = vmatpush1.bf16.msra.mxu0 0
          %1018 = vmatprep.mubr.bf16.mxu0 0
          %1019 = vmatmul.mubr.bf16.gmra.mrb[0].mxu0 %v375
          %v1020 = vpop.f32.mrb[0].mxu0
          %v1021 = vadd.f32 %v980, %v1020
          %v1022 = vpop.f32.mrb[0].mxu0
          %v1023 = vpop.f32.mrb[0].mxu0
          %v1024 = vadd.f32 %v983, %v1023
          %v1025 = vpop.f32.mrb[0].mxu0
          %1026 = vdwg.mxu0
          %v1027 = vld [vmem:[%s349] sm:$0x7]
          %v1029 = vlaneseq
          %v1030 = vshrl.u32 %v1029, 7
          %v1031 = vsub.s32 0, %v1030
          %v1032 = vrot.slane %v1027, %v1031
          %v1033 = vlaneseq
          %v1034 = vshrl.u32 %v1033, 7
          %v1035 = vsub.s32 1, %v1034
          %v1036 = vrot.slane %v1027, %v1035
          %v1037 = vlaneseq
          %v1038 = vshrl.u32 %v1037, 7
          %v1039 = vsub.s32 2, %v1038
          %v1040 = vrot.slane %v1027, %v1039
          %v1044 = vmul.f32 %v937, %v1032
          %v1045 = vmul.f32 %v939, %v1036
          %v1046 = vmul.f32 %v1021, %v1040
          %v1047 = vmul.f32 %v941, %v1032
          %v1048 = vmul.f32 %v943, %v1036
          %v1049 = vmul.f32 %v1024, %v1040
          %s1050 = smul.u32 %s25, 6
          %s1051 = smul.addr %s1050, 8
          %s1052 = scalar_lea.vmem [#allocation7], %s1051
          %v1053 = vld [vmem:[%s1052] sm:$0xff]
          %v1054 = vld [vmem:[%s1052 + $0x8] sm:$0xff]
          %v1055 = vld [vmem:[%s1052 + $0x10] sm:$0xff]
          %v1056 = vld [vmem:[%s1052 + $0x18] sm:$0xff]
          %v1057 = vld [vmem:[%s1052 + $0x20] sm:$0xff]
          %v1058 = vld [vmem:[%s1052 + $0x28] sm:$0xff]
          %v1059 = vld [vmem:[%s355] sm:$0xff]
          %v1060 = vld [vmem:[%s355 + $0x8] sm:$0xff]
          %v1061 = vld [vmem:[%s308] sm:$0xff]
          %v1062 = vld [vmem:[%s308 + $0x8] sm:$0xff]
          %vm1063 = vcmask 130048
          %v1065 = vsel %vm1063, %v1061, 0
          %v1068 = vsel %vm1063, %v1062, 0
          %1070 = vmatprep.subr.mxu0 %v1054
          %1071 = vmatpush1.msra.mxu0 %v1053
          %1072 = vmatprep.subr.mxu0 %v1057
          %1073 = vmatpush1.msra.mxu0 %v1056
          %1074 = vmatprep.subr.mxu0 0.0
          %1075 = vmatpush1.msra.mxu0 0.0
          %1076 = vmatprep.subr.mxu0 0.0
          %1077 = vmatpush1.msra.mxu0 0.0
          %1078 = vmatprep.subr.mxu0 0.0
          %1079 = vmatpush1.msra.mxu0 0.0
          %1080 = vmatprep.subr.mxu0 0.0
          %1081 = vmatpush1.msra.mxu0 0.0
          %1082 = vmatprep.subr.mxu0 0.0
          %1083 = vmatpush1.msra.mxu0 0.0
          %1084 = vmatprep.subr.mxu0 0.0
          %1085 = vmatpush1.msra.mxu0 0.0
          %1086 = vmatprep.subr.mxu0 0.0
          %1087 = vmatpush1.msra.mxu0 0.0
          %1088 = vmatprep.subr.mxu0 0.0
          %1089 = vmatpush1.msra.mxu0 0.0
          %1090 = vmatprep.subr.mxu0 0.0
          %1091 = vmatpush1.msra.mxu0 0.0
          %1092 = vmatprep.subr.mxu0 0.0
          %1093 = vmatpush1.msra.mxu0 0.0
          %1094 = vmatprep.subr.mxu0 0.0
          %1095 = vmatpush1.msra.mxu0 0.0
          %1096 = vmatprep.subr.mxu0 0.0
          %1097 = vmatpush1.msra.mxu0 0.0
          %1098 = vmatprep.subr.mxu0 0.0
          %1099 = vmatpush1.msra.mxu0 0.0
          %1100 = vmatprep.subr.mxu0 0.0
          %1101 = vmatpush1.msra.mxu0 0.0
          %1102 = vmatprep.subr.mxu0 0.0
          %1103 = vmatpush1.msra.mxu0 0.0
          %1104 = vmatprep.subr.mxu0 0.0
          %1105 = vmatpush1.msra.mxu0 0.0
          %1106 = vmatprep.subr.mxu0 0.0
          %1107 = vmatpush1.msra.mxu0 0.0
          %1108 = vmatprep.subr.mxu0 0.0
          %1109 = vmatpush1.msra.mxu0 0.0
          %1110 = vmatprep.subr.mxu0 0.0
          %1111 = vmatpush1.msra.mxu0 0.0
          %1112 = vmatprep.subr.mxu0 0.0
          %1113 = vmatpush1.msra.mxu0 0.0
          %1114 = vmatprep.subr.mxu0 0.0
          %1115 = vmatpush1.msra.mxu0 0.0
          %1116 = vmatprep.subr.mxu0 0.0
          %1117 = vmatpush1.msra.mxu0 0.0
          %1118 = vmatprep.subr.mxu0 0.0
          %1119 = vmatpush1.msra.mxu0 0.0
          %1120 = vmatprep.subr.mxu0 0.0
          %1121 = vmatpush1.msra.mxu0 0.0
          %1122 = vmatprep.subr.mxu0 0.0
          %1123 = vmatpush1.msra.mxu0 0.0
          %1124 = vmatprep.subr.mxu0 0.0
          %1125 = vmatpush1.msra.mxu0 0.0
          %1126 = vmatprep.subr.mxu0 0.0
          %1127 = vmatpush1.msra.mxu0 0.0
          %1128 = vmatprep.subr.mxu0 0.0
          %1129 = vmatpush1.msra.mxu0 0.0
          %1130 = vmatprep.subr.mxu0 0.0
          %1131 = vmatpush1.msra.mxu0 0.0
          %1132 = vmatprep.subr.mxu0 0.0
          %1133 = vmatpush1.msra.mxu0 0.0
          %1134 = vmatprep.mubr.f32.mxu0 0.0
          %1135 = vmatmul.mubr.f32.gmra.mrb[0].mxu0 %v1065
          %v1136 = vpop.f32.mrb[0].mxu0
          %v1137 = vadd.f32 0.0, %v1136
          %v1138 = vpop.f32.mrb[0].mxu0
          %v1139 = vadd.f32 0.0, %v1138
          %1140 = vmatprep.mubr.f32.mxu0 0.0
          %1141 = vmatmul.mubr.f32.gmra.mrb[0].mxu0 %v1068
          %v1142 = vpop.f32.mrb[0].mxu0
          %v1143 = vadd.f32 0.0, %v1142
          %v1144 = vpop.f32.mrb[0].mxu0
          %v1145 = vadd.f32 0.0, %v1144
          %1146 = vdwg.mxu0
          %1147 = vmatprep.subr.mxu0 0.0
          %1148 = vmatpush1.msra.mxu0 %v1055
          %1149 = vmatprep.subr.mxu0 0.0
          %1150 = vmatpush1.msra.mxu0 %v1058
          %1151 = vmatprep.subr.mxu0 0.0
          %1152 = vmatpush1.msra.mxu0 0.0
          %1153 = vmatprep.subr.mxu0 0.0
          %1154 = vmatpush1.msra.mxu0 0.0
          %1155 = vmatprep.subr.mxu0 0.0
          %1156 = vmatpush1.msra.mxu0 0.0
          %1157 = vmatprep.subr.mxu0 0.0
          %1158 = vmatpush1.msra.mxu0 0.0
          %1159 = vmatprep.subr.mxu0 0.0
          %1160 = vmatpush1.msra.mxu0 0.0
          %1161 = vmatprep.subr.mxu0 0.0
          %1162 = vmatpush1.msra.mxu0 0.0
          %1163 = vmatprep.subr.mxu0 0.0
          %1164 = vmatpush1.msra.mxu0 0.0
          %1165 = vmatprep.subr.mxu0 0.0
          %1166 = vmatpush1.msra.mxu0 0.0
          %1167 = vmatprep.subr.mxu0 0.0
          %1168 = vmatpush1.msra.mxu0 0.0
          %1169 = vmatprep.subr.mxu0 0.0
          %1170 = vmatpush1.msra.mxu0 0.0
          %1171 = vmatprep.subr.mxu0 0.0
          %1172 = vmatpush1.msra.mxu0 0.0
          %1173 = vmatprep.subr.mxu0 0.0
          %1174 = vmatpush1.msra.mxu0 0.0
          %1175 = vmatprep.subr.mxu0 0.0
          %1176 = vmatpush1.msra.mxu0 0.0
          %1177 = vmatprep.subr.mxu0 0.0
          %1178 = vmatpush1.msra.mxu0 0.0
          %1179 = vmatprep.subr.mxu0 0.0
          %1180 = vmatpush1.msra.mxu0 0.0
          %1181 = vmatprep.subr.mxu0 0.0
          %1182 = vmatpush1.msra.mxu0 0.0
          %1183 = vmatprep.subr.mxu0 0.0
          %1184 = vmatpush1.msra.mxu0 0.0
          %1185 = vmatprep.subr.mxu0 0.0
          %1186 = vmatpush1.msra.mxu0 0.0
          %1187 = vmatprep.subr.mxu0 0.0
          %1188 = vmatpush1.msra.mxu0 0.0
          %1189 = vmatprep.subr.mxu0 0.0
          %1190 = vmatpush1.msra.mxu0 0.0
          %1191 = vmatprep.subr.mxu0 0.0
          %1192 = vmatpush1.msra.mxu0 0.0
          %1193 = vmatprep.subr.mxu0 0.0
          %1194 = vmatpush1.msra.mxu0 0.0
          %1195 = vmatprep.subr.mxu0 0.0
          %1196 = vmatpush1.msra.mxu0 0.0
          %1197 = vmatprep.subr.mxu0 0.0
          %1198 = vmatpush1.msra.mxu0 0.0
          %1199 = vmatprep.subr.mxu0 0.0
          %1200 = vmatpush1.msra.mxu0 0.0
          %1201 = vmatprep.subr.mxu0 0.0
          %1202 = vmatpush1.msra.mxu0 0.0
          %1203 = vmatprep.subr.mxu0 0.0
          %1204 = vmatpush1.msra.mxu0 0.0
          %1205 = vmatprep.subr.mxu0 0.0
          %1206 = vmatpush1.msra.mxu0 0.0
          %1207 = vmatprep.subr.mxu0 0.0
          %1208 = vmatpush1.msra.mxu0 0.0
          %1209 = vmatprep.subr.mxu0 0.0
          %1210 = vmatpush1.msra.mxu0 0.0
          %1211 = vmatprep.mubr.f32.mxu0 0.0
          %1212 = vmatmul.mubr.f32.gmra.mrb[0].mxu0 %v1065
          %v1213 = vpop.f32.mrb[0].mxu0
          %v1214 = vadd.f32 0.0, %v1213
          %v1215 = vpop.f32.mrb[0].mxu0
          %1216 = vmatprep.mubr.f32.mxu0 0.0
          %1217 = vmatmul.mubr.f32.gmra.mrb[0].mxu0 %v1068
          %v1218 = vpop.f32.mrb[0].mxu0
          %v1219 = vadd.f32 0.0, %v1218
          %v1220 = vpop.f32.mrb[0].mxu0
          %1221 = vdwg.mxu0
          %v1223 = vsel %vm1063, %v1059, 0
          %v1226 = vsel %vm1063, %v1060, 0
          %1228 = vmatprep.subr.mxu0 %v1045
          %1229 = vmatpush1.msra.mxu0 %v1044
          %1230 = vmatprep.subr.mxu0 %v1048
          %1231 = vmatpush1.msra.mxu0 %v1047
          %1232 = vmatprep.subr.mxu0 0.0
          %1233 = vmatpush1.msra.mxu0 0.0
          %1234 = vmatprep.subr.mxu0 0.0
          %1235 = vmatpush1.msra.mxu0 0.0
          %1236 = vmatprep.subr.mxu0 0.0
          %1237 = vmatpush1.msra.mxu0 0.0
          %1238 = vmatprep.subr.mxu0 0.0
          %1239 = vmatpush1.msra.mxu0 0.0
          %1240 = vmatprep.subr.mxu0 0.0
          %1241 = vmatpush1.msra.mxu0 0.0
          %1242 = vmatprep.subr.mxu0 0.0
          %1243 = vmatpush1.msra.mxu0 0.0
          %1244 = vmatprep.subr.mxu0 0.0
          %1245 = vmatpush1.msra.mxu0 0.0
          %1246 = vmatprep.subr.mxu0 0.0
          %1247 = vmatpush1.msra.mxu0 0.0
          %1248 = vmatprep.subr.mxu0 0.0
          %1249 = vmatpush1.msra.mxu0 0.0
          %1250 = vmatprep.subr.mxu0 0.0
          %1251 = vmatpush1.msra.mxu0 0.0
          %1252 = vmatprep.subr.mxu0 0.0
          %1253 = vmatpush1.msra.mxu0 0.0
          %1254 = vmatprep.subr.mxu0 0.0
          %1255 = vmatpush1.msra.mxu0 0.0
          %1256 = vmatprep.subr.mxu0 0.0
          %1257 = vmatpush1.msra.mxu0 0.0
          %1258 = vmatprep.subr.mxu0 0.0
          %1259 = vmatpush1.msra.mxu0 0.0
          %1260 = vmatprep.subr.mxu0 0.0
          %1261 = vmatpush1.msra.mxu0 0.0
          %1262 = vmatprep.subr.mxu0 0.0
          %1263 = vmatpush1.msra.mxu0 0.0
          %1264 = vmatprep.subr.mxu0 0.0
          %1265 = vmatpush1.msra.mxu0 0.0
          %1266 = vmatprep.subr.mxu0 0.0
          %1267 = vmatpush1.msra.mxu0 0.0
          %1268 = vmatprep.subr.mxu0 0.0
          %1269 = vmatpush1.msra.mxu0 0.0
          %1270 = vmatprep.subr.mxu0 0.0
          %1271 = vmatpush1.msra.mxu0 0.0
          %1272 = vmatprep.subr.mxu0 0.0
          %1273 = vmatpush1.msra.mxu0 0.0
          %1274 = vmatprep.subr.mxu0 0.0
          %1275 = vmatpush1.msra.mxu0 0.0
          %1276 = vmatprep.subr.mxu0 0.0
          %1277 = vmatpush1.msra.mxu0 0.0
          %1278 = vmatprep.subr.mxu0 0.0
          %1279 = vmatpush1.msra.mxu0 0.0
          %1280 = vmatprep.subr.mxu0 0.0
          %1281 = vmatpush1.msra.mxu0 0.0
          %1282 = vmatprep.subr.mxu0 0.0
          %1283 = vmatpush1.msra.mxu0 0.0
          %1284 = vmatprep.subr.mxu0 0.0
          %1285 = vmatpush1.msra.mxu0 0.0
          %1286 = vmatprep.subr.mxu0 0.0
          %1287 = vmatpush1.msra.mxu0 0.0
          %1288 = vmatprep.subr.mxu0 0.0
          %1289 = vmatpush1.msra.mxu0 0.0
          %1290 = vmatprep.subr.mxu0 0.0
          %1291 = vmatpush1.msra.mxu0 0.0
          %1292 = vmatprep.mubr.f32.mxu0 0.0
          %1293 = vmatmul.mubr.f32.gmra.mrb[0].mxu0 %v1223
          %v1294 = vpop.f32.mrb[0].mxu0
          %v1295 = vadd.f32 %v1137, %v1294
          %v1296 = vpop.f32.mrb[0].mxu0
          %v1297 = vadd.f32 %v1139, %v1296
          %1298 = vmatprep.mubr.f32.mxu0 0.0
          %1299 = vmatmul.mubr.f32.gmra.mrb[0].mxu0 %v1226
          %v1300 = vpop.f32.mrb[0].mxu0
          %v1301 = vadd.f32 %v1143, %v1300
          %v1302 = vpop.f32.mrb[0].mxu0
          %v1303 = vadd.f32 %v1145, %v1302
          %1304 = vdwg.mxu0
          %1305 = vmatprep.subr.mxu0 0.0
          %1306 = vmatpush1.msra.mxu0 %v1046
          %1307 = vmatprep.subr.mxu0 0.0
          %1308 = vmatpush1.msra.mxu0 %v1049
          %1309 = vmatprep.subr.mxu0 0.0
          %1310 = vmatpush1.msra.mxu0 0.0
          %1311 = vmatprep.subr.mxu0 0.0
          %1312 = vmatpush1.msra.mxu0 0.0
          %1313 = vmatprep.subr.mxu0 0.0
          %1314 = vmatpush1.msra.mxu0 0.0
          %1315 = vmatprep.subr.mxu0 0.0
          %1316 = vmatpush1.msra.mxu0 0.0
          %1317 = vmatprep.subr.mxu0 0.0
          %1318 = vmatpush1.msra.mxu0 0.0
          %1319 = vmatprep.subr.mxu0 0.0
          %1320 = vmatpush1.msra.mxu0 0.0
          %1321 = vmatprep.subr.mxu0 0.0
          %1322 = vmatpush1.msra.mxu0 0.0
          %1323 = vmatprep.subr.mxu0 0.0
          %1324 = vmatpush1.msra.mxu0 0.0
          %1325 = vmatprep.subr.mxu0 0.0
          %1326 = vmatpush1.msra.mxu0 0.0
          %1327 = vmatprep.subr.mxu0 0.0
          %1328 = vmatpush1.msra.mxu0 0.0
          %1329 = vmatprep.subr.mxu0 0.0
          %1330 = vmatpush1.msra.mxu0 0.0
          %1331 = vmatprep.subr.mxu0 0.0
          %1332 = vmatpush1.msra.mxu0 0.0
          %1333 = vmatprep.subr.mxu0 0.0
          %1334 = vmatpush1.msra.mxu0 0.0
          %1335 = vmatprep.subr.mxu0 0.0
          %1336 = vmatpush1.msra.mxu0 0.0
          %1337 = vmatprep.subr.mxu0 0.0
          %1338 = vmatpush1.msra.mxu0 0.0
          %1339 = vmatprep.subr.mxu0 0.0
          %1340 = vmatpush1.msra.mxu0 0.0
          %1341 = vmatprep.subr.mxu0 0.0
          %1342 = vmatpush1.msra.mxu0 0.0
          %1343 = vmatprep.subr.mxu0 0.0
          %1344 = vmatpush1.msra.mxu0 0.0
          %1345 = vmatprep.subr.mxu0 0.0
          %1346 = vmatpush1.msra.mxu0 0.0
          %1347 = vmatprep.subr.mxu0 0.0
          %1348 = vmatpush1.msra.mxu0 0.0
          %1349 = vmatprep.subr.mxu0 0.0
          %1350 = vmatpush1.msra.mxu0 0.0
          %1351 = vmatprep.subr.mxu0 0.0
          %1352 = vmatpush1.msra.mxu0 0.0
          %1353 = vmatprep.subr.mxu0 0.0
          %1354 = vmatpush1.msra.mxu0 0.0
          %1355 = vmatprep.subr.mxu0 0.0
          %1356 = vmatpush1.msra.mxu0 0.0
          %1357 = vmatprep.subr.mxu0 0.0
          %1358 = vmatpush1.msra.mxu0 0.0
          %1359 = vmatprep.subr.mxu0 0.0
          %1360 = vmatpush1.msra.mxu0 0.0
          %1361 = vmatprep.subr.mxu0 0.0
          %1362 = vmatpush1.msra.mxu0 0.0
          %1363 = vmatprep.subr.mxu0 0.0
          %1364 = vmatpush1.msra.mxu0 0.0
          %1365 = vmatprep.subr.mxu0 0.0
          %1366 = vmatpush1.msra.mxu0 0.0
          %1367 = vmatprep.subr.mxu0 0.0
          %1368 = vmatpush1.msra.mxu0 0.0
          %1369 = vmatprep.mubr.f32.mxu0 0.0
          %1370 = vmatmul.mubr.f32.gmra.mrb[0].mxu0 %v1223
          %v1371 = vpop.f32.mrb[0].mxu0
          %v1372 = vadd.f32 %v1214, %v1371
          %v1373 = vpop.f32.mrb[0].mxu0
          %1374 = vmatprep.mubr.f32.mxu0 0.0
          %1375 = vmatmul.mubr.f32.gmra.mrb[0].mxu0 %v1226
          %v1376 = vpop.f32.mrb[0].mxu0
          %v1377 = vadd.f32 %v1219, %v1376
          %v1378 = vpop.f32.mrb[0].mxu0
          %1379 = vdwg.mxu0
          %v1380 = vld [vmem:[%s360] sm:$0xff]
          %v1381 = vld [vmem:[%s360 + $0x8] sm:$0xff]
          %1383 = vset.pattern.permute.xlu0 0
          %1384 = vperm.xlu0 %1383, %v1380
          %v1385 = vpop.permute.xlu0 %1384
          %1388 = vset.pattern.permute.xlu0 0
          %1389 = vperm.xlu0 %1388, %v1381
          %v1390 = vpop.permute.xlu0 %1389
          %v1392 = vadd.f32 %v1295, %v1385
          %v1393 = vadd.f32 %v1297, %v1385
          %v1394 = vadd.f32 %v1372, %v1385
          %v1395 = vadd.f32 %v1301, %v1390
          %v1396 = vadd.f32 %v1303, %v1390
          %v1397 = vadd.f32 %v1377, %v1390
          %v1398 = vpack.c.bf16 %v1395, %v1392
          %v1399 = vpack.c.bf16 %v1396, %v1393
          %v1400 = vpack.c.bf16 %v1397, %v1394
          %s1401 = smul.u32 %s25, 3
          %s1402 = smul.addr %s1401, 8
          %s1403 = scalar_lea.vmem [#allocation2], %s1402
          %1404 = vst [vmem:[%s1403] sm:$0xff] %v1398
          %1405 = vst [vmem:[%s1403 + $0x8] sm:$0xff] %v1399
          %1406 = vst [vmem:[%s1403 + $0x10] sm:$0xff] %v1400
          %1407 = vst [vmem:[#allocation10] sm:$0xff] %v1392
          %1408 = vst [vmem:[#allocation10 + $0x8] sm:$0xff] %v1393
          %1409 = vst [vmem:[#allocation10 + $0x10] sm:$0xff] %v1394
          %1410 = vst [vmem:[#allocation10 + $0x18] sm:$0xff] %v1395
          %1411 = vst [vmem:[#allocation10 + $0x20] sm:$0xff] %v1396
          %1412 = vst [vmem:[#allocation10 + $0x28] sm:$0xff] %v1397
        $region60: #{tpu_custom_call.1} parent=43 // pred_fallthru
          _
        %p1413 = scmp.lt.s32.totalorder %s24, 0
        %s1414 = ssub.s32 0, %s24
        %s1415 = scalar_select %p1413, %s1414, %s24
        %s1416 = sand.u32 %s1415, 1
        %s1417 = ssub.s32 0, %s1416
        %s1418 = scalar_select %p1413, %s1417, %s1416
        %p1419 = scmp.ne.s32.totalorder %s1418, 0
        %p1420 = scmp.lt.s32.totalorder %s1418, 0
        %p1421 = pnand %p1420, %p1419
        %p1422 = pneg %p1421
        %s1423 = sadd.s32 %s1418, 2
        %s1424 = scalar_select %p1422, %s1423, %s1418
        %p1425 = scmp.eq.s32.totalorder %s1424, 1
        // Predicated region
        $region61: #{tpu_custom_call.1} parent=43 // pred_check
          %p1426 = pneg %p1425
        $region62: #{tpu_custom_call.1} parent=43 // pred_check_branch
          %1428 = sbr.rel (%p1426) target = $region64
        $region63: #{tpu_custom_call.1} parent=43 // pred_region
          %v1429 = vld [vmem:[#allocation2] sm:$0xff]
          %v1430 = vld [vmem:[#allocation2 + $0x8] sm:$0xff]
          %v1431 = vld [vmem:[#allocation2 + $0x10] sm:$0xff]
          %s1432 = smul.u32 %s25, 144
          %s1433 = smul.addr %s1432, 4
          %s1434 = scalar_lea.vmem [#allocation4], %s1433
          %v1435 = vld [vmem:[%s1434] sm:$0xff]
          %v1436 = vld [vmem:[%s1434 + $0x8] sm:$0xf]
          %v1437 = vld [vmem:[%s1434 + $0xc] sm:$0xff]
          %v1438 = vld [vmem:[%s1434 + $0x14] sm:$0xf]
          %v1439 = vld [vmem:[%s1434 + $0x18] sm:$0xff]
          %v1440 = vld [vmem:[%s1434 + $0x20] sm:$0xf]
          %v1441 = vld [vmem:[%s1434 + $0x24] sm:$0xff]
          %v1442 = vld [vmem:[%s1434 + $0x2c] sm:$0xf]
          %v1443 = vld [vmem:[%s1434 + $0x30] sm:$0xff]
          %v1444 = vld [vmem:[%s1434 + $0x38] sm:$0xf]
          %v1445 = vld [vmem:[%s1434 + $0x3c] sm:$0xff]
          %v1446 = vld [vmem:[%s1434 + $0x44] sm:$0xf]
          %v1447 = vld [vmem:[%s1434 + $0x48] sm:$0xff]
          %v1448 = vld [vmem:[%s1434 + $0x50] sm:$0xf]
          %v1449 = vld [vmem:[%s1434 + $0x54] sm:$0xff]
          %v1450 = vld [vmem:[%s1434 + $0x5c] sm:$0xf]
          %v1451 = vld [vmem:[%s1434 + $0x60] sm:$0xff]
          %v1452 = vld [vmem:[%s1434 + $0x68] sm:$0xf]
          %v1453 = vld [vmem:[%s1434 + $0x6c] sm:$0xff]
          %v1454 = vld [vmem:[%s1434 + $0x74] sm:$0xf]
          %v1455 = vld [vmem:[%s1434 + $0x78] sm:$0xff]
          %v1456 = vld [vmem:[%s1434 + $0x80] sm:$0xf]
          %v1457 = vld [vmem:[%s1434 + $0x84] sm:$0xff]
          %v1458 = vld [vmem:[%s1434 + $0x8c] sm:$0xf]
          %v1459 = vld [vmem:[%s1434 + $0x90] sm:$0xff]
          %v1460 = vld [vmem:[%s1434 + $0x98] sm:$0xf]
          %v1461 = vld [vmem:[%s1434 + $0x9c] sm:$0xff]
          %v1462 = vld [vmem:[%s1434 + $0xa4] sm:$0xf]
          %v1463 = vld [vmem:[%s1434 + $0xa8] sm:$0xff]
          %v1464 = vld [vmem:[%s1434 + $0xb0] sm:$0xf]
          %v1465 = vld [vmem:[%s1434 + $0xb4] sm:$0xff]
          %v1466 = vld [vmem:[%s1434 + $0xbc] sm:$0xf]
          %v1467 = vld [vmem:[%s1434 + $0xc0] sm:$0xff]
          %v1468 = vld [vmem:[%s1434 + $0xc8] sm:$0xf]
          %v1469 = vld [vmem:[%s1434 + $0xcc] sm:$0xff]
          %v1470 = vld [vmem:[%s1434 + $0xd4] sm:$0xf]
          %v1471 = vld [vmem:[%s1434 + $0xd8] sm:$0xff]
          %v1472 = vld [vmem:[%s1434 + $0xe0] sm:$0xf]
          %v1473 = vld [vmem:[%s1434 + $0xe4] sm:$0xff]
          %v1474 = vld [vmem:[%s1434 + $0xec] sm:$0xf]
          %v1475 = vld [vmem:[%s1434 + $0xf0] sm:$0xff]
          %v1476 = vld [vmem:[%s1434 + $0xf8] sm:$0xf]
          %v1477 = vld [vmem:[%s1434 + $0xfc] sm:$0xff]
          %v1478 = vld [vmem:[%s1434 + $0x104] sm:$0xf]
          %v1479 = vld [vmem:[%s1434 + $0x108] sm:$0xff]
          %v1480 = vld [vmem:[%s1434 + $0x110] sm:$0xf]
          %v1481 = vld [vmem:[%s1434 + $0x114] sm:$0xff]
          %v1482 = vld [vmem:[%s1434 + $0x11c] sm:$0xf]
          %v1483 = vld [vmem:[%s1434 + $0x120] sm:$0xff]
          %v1484 = vld [vmem:[%s1434 + $0x128] sm:$0xf]
          %v1485 = vld [vmem:[%s1434 + $0x12c] sm:$0xff]
          %v1486 = vld [vmem:[%s1434 + $0x134] sm:$0xf]
          %v1487 = vld [vmem:[%s1434 + $0x138] sm:$0xff]
          %v1488 = vld [vmem:[%s1434 + $0x140] sm:$0xf]
          %v1489 = vld [vmem:[%s1434 + $0x144] sm:$0xff]
          %v1490 = vld [vmem:[%s1434 + $0x14c] sm:$0xf]
          %v1491 = vld [vmem:[%s1434 + $0x150] sm:$0xff]
          %v1492 = vld [vmem:[%s1434 + $0x158] sm:$0xf]
          %v1493 = vld [vmem:[%s1434 + $0x15c] sm:$0xff]
          %v1494 = vld [vmem:[%s1434 + $0x164] sm:$0xf]
          %v1495 = vld [vmem:[%s1434 + $0x168] sm:$0xff]
          %v1496 = vld [vmem:[%s1434 + $0x170] sm:$0xf]
          %v1497 = vld [vmem:[%s1434 + $0x174] sm:$0xff]
          %v1498 = vld [vmem:[%s1434 + $0x17c] sm:$0xf]
          %v1499 = vld [vmem:[%s1434 + $0x180] sm:$0xff]
          %v1500 = vld [vmem:[%s1434 + $0x188] sm:$0xf]
          %v1501 = vld [vmem:[%s1434 + $0x18c] sm:$0xff]
          %v1502 = vld [vmem:[%s1434 + $0x194] sm:$0xf]
          %v1503 = vld [vmem:[%s1434 + $0x198] sm:$0xff]
          %v1504 = vld [vmem:[%s1434 + $0x1a0] sm:$0xf]
          %v1505 = vld [vmem:[%s1434 + $0x1a4] sm:$0xff]
          %v1506 = vld [vmem:[%s1434 + $0x1ac] sm:$0xf]
          %v1507 = vld [vmem:[%s1434 + $0x1b0] sm:$0xff]
          %v1508 = vld [vmem:[%s1434 + $0x1b8] sm:$0xf]
          %v1509 = vld [vmem:[%s1434 + $0x1bc] sm:$0xff]
          %v1510 = vld [vmem:[%s1434 + $0x1c4] sm:$0xf]
          %v1511 = vld [vmem:[%s1434 + $0x1c8] sm:$0xff]
          %v1512 = vld [vmem:[%s1434 + $0x1d0] sm:$0xf]
          %v1513 = vld [vmem:[%s1434 + $0x1d4] sm:$0xff]
          %v1514 = vld [vmem:[%s1434 + $0x1dc] sm:$0xf]
          %v1515 = vld [vmem:[%s1434 + $0x1e0] sm:$0xff]
          %v1516 = vld [vmem:[%s1434 + $0x1e8] sm:$0xf]
          %v1517 = vld [vmem:[%s1434 + $0x1ec] sm:$0xff]
          %v1518 = vld [vmem:[%s1434 + $0x1f4] sm:$0xf]
          %v1519 = vld [vmem:[%s1434 + $0x1f8] sm:$0xff]
          %v1520 = vld [vmem:[%s1434 + $0x200] sm:$0xf]
          %v1521 = vld [vmem:[%s1434 + $0x204] sm:$0xff]
          %v1522 = vld [vmem:[%s1434 + $0x20c] sm:$0xf]
          %v1523 = vld [vmem:[%s1434 + $0x210] sm:$0xff]
          %v1524 = vld [vmem:[%s1434 + $0x218] sm:$0xf]
          %v1525 = vld [vmem:[%s1434 + $0x21c] sm:$0xff]
          %v1526 = vld [vmem:[%s1434 + $0x224] sm:$0xf]
          %v1527 = vld [vmem:[%s1434 + $0x228] sm:$0xff]
          %v1528 = vld [vmem:[%s1434 + $0x230] sm:$0xf]
          %v1529 = vld [vmem:[%s1434 + $0x234] sm:$0xff]
          %v1530 = vld [vmem:[%s1434 + $0x23c] sm:$0xf]
          %v1627 = vunpack.c.l.b16 %v1435
          %v1628 = vunpack.c.h.b16 %v1435
          %v1629 = vunpack.c.l.b16 %v1436
          %v1630 = vunpack.c.l.b16 %v1437
          %v1631 = vunpack.c.h.b16 %v1437
          %v1632 = vunpack.c.l.b16 %v1438
          %v1633 = vunpack.c.l.b16 %v1439
          %v1634 = vunpack.c.h.b16 %v1439
          %v1635 = vunpack.c.l.b16 %v1440
          %v1636 = vunpack.c.l.b16 %v1441
          %v1637 = vunpack.c.h.b16 %v1441
          %v1638 = vunpack.c.l.b16 %v1442
          %v1639 = vunpack.c.l.b16 %v1443
          %v1640 = vunpack.c.h.b16 %v1443
          %v1641 = vunpack.c.l.b16 %v1444
          %v1642 = vunpack.c.l.b16 %v1445
          %v1643 = vunpack.c.h.b16 %v1445
          %v1644 = vunpack.c.l.b16 %v1446
          %v1645 = vunpack.c.l.b16 %v1447
          %v1646 = vunpack.c.h.b16 %v1447
          %v1647 = vunpack.c.l.b16 %v1448
          %v1648 = vunpack.c.l.b16 %v1449
          %v1649 = vunpack.c.h.b16 %v1449
          %v1650 = vunpack.c.l.b16 %v1450
          %v1651 = vunpack.c.l.b16 %v1451
          %v1652 = vunpack.c.h.b16 %v1451
          %v1653 = vunpack.c.l.b16 %v1452
          %v1654 = vunpack.c.l.b16 %v1453
          %v1655 = vunpack.c.h.b16 %v1453
          %v1656 = vunpack.c.l.b16 %v1454
          %v1657 = vunpack.c.l.b16 %v1455
          %v1658 = vunpack.c.h.b16 %v1455
          %v1659 = vunpack.c.l.b16 %v1456
          %v1660 = vunpack.c.l.b16 %v1457
          %v1661 = vunpack.c.h.b16 %v1457
          %v1662 = vunpack.c.l.b16 %v1458
          %v1663 = vunpack.c.l.b16 %v1459
          %v1664 = vunpack.c.h.b16 %v1459
          %v1665 = vunpack.c.l.b16 %v1460
          %v1666 = vunpack.c.l.b16 %v1461
          %v1667 = vunpack.c.h.b16 %v1461
          %v1668 = vunpack.c.l.b16 %v1462
          %v1669 = vunpack.c.l.b16 %v1463
          %v1670 = vunpack.c.h.b16 %v1463
          %v1671 = vunpack.c.l.b16 %v1464
          %v1672 = vunpack.c.l.b16 %v1465
          %v1673 = vunpack.c.h.b16 %v1465
          %v1674 = vunpack.c.l.b16 %v1466
          %v1675 = vunpack.c.l.b16 %v1467
          %v1676 = vunpack.c.h.b16 %v1467
          %v1677 = vunpack.c.l.b16 %v1468
          %v1678 = vunpack.c.l.b16 %v1469
          %v1679 = vunpack.c.h.b16 %v1469
          %v1680 = vunpack.c.l.b16 %v1470
          %v1681 = vunpack.c.l.b16 %v1471
          %v1682 = vunpack.c.h.b16 %v1471
          %v1683 = vunpack.c.l.b16 %v1472
          %v1684 = vunpack.c.l.b16 %v1473
          %v1685 = vunpack.c.h.b16 %v1473
          %v1686 = vunpack.c.l.b16 %v1474
          %v1687 = vunpack.c.l.b16 %v1475
          %v1688 = vunpack.c.h.b16 %v1475
          %v1689 = vunpack.c.l.b16 %v1476
          %v1690 = vunpack.c.l.b16 %v1477
          %v1691 = vunpack.c.h.b16 %v1477
          %v1692 = vunpack.c.l.b16 %v1478
          %v1693 = vunpack.c.l.b16 %v1479
          %v1694 = vunpack.c.h.b16 %v1479
          %v1695 = vunpack.c.l.b16 %v1480
          %v1696 = vunpack.c.l.b16 %v1481
          %v1697 = vunpack.c.h.b16 %v1481
          %v1698 = vunpack.c.l.b16 %v1482
          %v1699 = vunpack.c.l.b16 %v1483
          %v1700 = vunpack.c.h.b16 %v1483
          %v1701 = vunpack.c.l.b16 %v1484
          %v1702 = vunpack.c.l.b16 %v1485
          %v1703 = vunpack.c.h.b16 %v1485
          %v1704 = vunpack.c.l.b16 %v1486
          %v1705 = vunpack.c.l.b16 %v1487
          %v1706 = vunpack.c.h.b16 %v1487
          %v1707 = vunpack.c.l.b16 %v1488
          %v1708 = vunpack.c.l.b16 %v1489
          %v1709 = vunpack.c.h.b16 %v1489
          %v1710 = vunpack.c.l.b16 %v1490
          %v1711 = vunpack.c.l.b16 %v1491
          %v1712 = vunpack.c.h.b16 %v1491
          %v1713 = vunpack.c.l.b16 %v1492
          %v1714 = vunpack.c.l.b16 %v1493
          %v1715 = vunpack.c.h.b16 %v1493
          %v1716 = vunpack.c.l.b16 %v1494
          %v1717 = vunpack.c.l.b16 %v1495
          %v1718 = vunpack.c.h.b16 %v1495
          %v1719 = vunpack.c.l.b16 %v1496
          %v1720 = vunpack.c.l.b16 %v1497
          %v1721 = vunpack.c.h.b16 %v1497
          %v1722 = vunpack.c.l.b16 %v1498
          %v1723 = vunpack.c.l.b16 %v1499
          %v1724 = vunpack.c.h.b16 %v1499
          %v1725 = vunpack.c.l.b16 %v1500
          %v1726 = vunpack.c.l.b16 %v1501
          %v1727 = vunpack.c.h.b16 %v1501
          %v1728 = vunpack.c.l.b16 %v1502
          %v1729 = vunpack.c.l.b16 %v1503
          %v1730 = vunpack.c.h.b16 %v1503
          %v1731 = vunpack.c.l.b16 %v1504
          %v1732 = vunpack.c.l.b16 %v1505
          %v1733 = vunpack.c.h.b16 %v1505
          %v1734 = vunpack.c.l.b16 %v1506
          %v1735 = vunpack.c.l.b16 %v1507
          %v1736 = vunpack.c.h.b16 %v1507
          %v1737 = vunpack.c.l.b16 %v1508
          %v1738 = vunpack.c.l.b16 %v1509
          %v1739 = vunpack.c.h.b16 %v1509
          %v1740 = vunpack.c.l.b16 %v1510
          %v1741 = vunpack.c.l.b16 %v1511
          %v1742 = vunpack.c.h.b16 %v1511
          %v1743 = vunpack.c.l.b16 %v1512
          %v1744 = vunpack.c.l.b16 %v1513
          %v1745 = vunpack.c.h.b16 %v1513
          %v1746 = vunpack.c.l.b16 %v1514
          %v1747 = vunpack.c.l.b16 %v1515
          %v1748 = vunpack.c.h.b16 %v1515
          %v1749 = vunpack.c.l.b16 %v1516
          %v1750 = vunpack.c.l.b16 %v1517
          %v1751 = vunpack.c.h.b16 %v1517
          %v1752 = vunpack.c.l.b16 %v1518
          %v1753 = vunpack.c.l.b16 %v1519
          %v1754 = vunpack.c.h.b16 %v1519
          %v1755 = vunpack.c.l.b16 %v1520
          %v1756 = vunpack.c.l.b16 %v1521
          %v1757 = vunpack.c.h.b16 %v1521
          %v1758 = vunpack.c.l.b16 %v1522
          %v1759 = vunpack.c.l.b16 %v1523
          %v1760 = vunpack.c.h.b16 %v1523
          %v1761 = vunpack.c.l.b16 %v1524
          %v1762 = vunpack.c.l.b16 %v1525
          %v1763 = vunpack.c.h.b16 %v1525
          %v1764 = vunpack.c.l.b16 %v1526
          %v1765 = vunpack.c.l.b16 %v1527
          %v1766 = vunpack.c.h.b16 %v1527
          %v1767 = vunpack.c.l.b16 %v1528
          %v1768 = vunpack.c.l.b16 %v1529
          %v1769 = vunpack.c.h.b16 %v1529
          %v1770 = vunpack.c.l.b16 %v1530
          %v1771 = vpack.c.b16 %v1630, %v1627
          %v1772 = vpack.c.b16 %v1631, %v1628
          %v1773 = vpack.c.b16 %v1632, %v1629
          %v1774 = vpack.c.b16 %v1636, %v1633
          %v1775 = vpack.c.b16 %v1637, %v1634
          %v1776 = vpack.c.b16 %v1638, %v1635
          %v1777 = vpack.c.b16 %v1642, %v1639
          %v1778 = vpack.c.b16 %v1643, %v1640
          %v1779 = vpack.c.b16 %v1644, %v1641
          %v1780 = vpack.c.b16 %v1648, %v1645
          %v1781 = vpack.c.b16 %v1649, %v1646
          %v1782 = vpack.c.b16 %v1650, %v1647
          %v1783 = vpack.c.b16 %v1654, %v1651
          %v1784 = vpack.c.b16 %v1655, %v1652
          %v1785 = vpack.c.b16 %v1656, %v1653
          %v1786 = vpack.c.b16 %v1660, %v1657
          %v1787 = vpack.c.b16 %v1661, %v1658
          %v1788 = vpack.c.b16 %v1662, %v1659
          %v1789 = vpack.c.b16 %v1666, %v1663
          %v1790 = vpack.c.b16 %v1667, %v1664
          %v1791 = vpack.c.b16 %v1668, %v1665
          %v1792 = vpack.c.b16 %v1672, %v1669
          %v1793 = vpack.c.b16 %v1673, %v1670
          %v1794 = vpack.c.b16 %v1674, %v1671
          %v1795 = vpack.c.b16 %v1678, %v1675
          %v1796 = vpack.c.b16 %v1679, %v1676
          %v1797 = vpack.c.b16 %v1680, %v1677
          %v1798 = vpack.c.b16 %v1684, %v1681
          %v1799 = vpack.c.b16 %v1685, %v1682
          %v1800 = vpack.c.b16 %v1686, %v1683
          %v1801 = vpack.c.b16 %v1690, %v1687
          %v1802 = vpack.c.b16 %v1691, %v1688
          %v1803 = vpack.c.b16 %v1692, %v1689
          %v1804 = vpack.c.b16 %v1696, %v1693
          %v1805 = vpack.c.b16 %v1697, %v1694
          %v1806 = vpack.c.b16 %v1698, %v1695
          %v1807 = vpack.c.b16 %v1702, %v1699
          %v1808 = vpack.c.b16 %v1703, %v1700
          %v1809 = vpack.c.b16 %v1704, %v1701
          %v1810 = vpack.c.b16 %v1708, %v1705
          %v1811 = vpack.c.b16 %v1709, %v1706
          %v1812 = vpack.c.b16 %v1710, %v1707
          %v1813 = vpack.c.b16 %v1714, %v1711
          %v1814 = vpack.c.b16 %v1715, %v1712
          %v1815 = vpack.c.b16 %v1716, %v1713
          %v1816 = vpack.c.b16 %v1720, %v1717
          %v1817 = vpack.c.b16 %v1721, %v1718
          %v1818 = vpack.c.b16 %v1722, %v1719
          %v1819 = vpack.c.b16 %v1726, %v1723
          %v1820 = vpack.c.b16 %v1727, %v1724
          %v1821 = vpack.c.b16 %v1728, %v1725
          %v1822 = vpack.c.b16 %v1732, %v1729
          %v1823 = vpack.c.b16 %v1733, %v1730
          %v1824 = vpack.c.b16 %v1734, %v1731
          %v1825 = vpack.c.b16 %v1738, %v1735
          %v1826 = vpack.c.b16 %v1739, %v1736
          %v1827 = vpack.c.b16 %v1740, %v1737
          %v1828 = vpack.c.b16 %v1744, %v1741
          %v1829 = vpack.c.b16 %v1745, %v1742
          %v1830 = vpack.c.b16 %v1746, %v1743
          %v1831 = vpack.c.b16 %v1750, %v1747
          %v1832 = vpack.c.b16 %v1751, %v1748
          %v1833 = vpack.c.b16 %v1752, %v1749
          %v1834 = vpack.c.b16 %v1756, %v1753
          %v1835 = vpack.c.b16 %v1757, %v1754
          %v1836 = vpack.c.b16 %v1758, %v1755
          %v1837 = vpack.c.b16 %v1762, %v1759
          %v1838 = vpack.c.b16 %v1763, %v1760
          %v1839 = vpack.c.b16 %v1764, %v1761
          %v1840 = vpack.c.b16 %v1768, %v1765
          %v1841 = vpack.c.b16 %v1769, %v1766
          %v1842 = vpack.c.b16 %v1770, %v1767
          %1915 = vmatprep.subr.bf16.mxu0 %v1772
          %1916 = vmatpush1.bf16.msra.mxu0 %v1771
          %1917 = vmatprep.subr.bf16.mxu0 %v1775
          %1918 = vmatpush1.bf16.msra.mxu0 %v1774
          %1919 = vmatprep.subr.bf16.mxu0 %v1778
          %1920 = vmatpush1.bf16.msra.mxu0 %v1777
          %1921 = vmatprep.subr.bf16.mxu0 %v1781
          %1922 = vmatpush1.bf16.msra.mxu0 %v1780
          %1923 = vmatprep.subr.bf16.mxu0 %v1784
          %1924 = vmatpush1.bf16.msra.mxu0 %v1783
          %1925 = vmatprep.subr.bf16.mxu0 %v1787
          %1926 = vmatpush1.bf16.msra.mxu0 %v1786
          %1927 = vmatprep.subr.bf16.mxu0 %v1790
          %1928 = vmatpush1.bf16.msra.mxu0 %v1789
          %1929 = vmatprep.subr.bf16.mxu0 %v1793
          %1930 = vmatpush1.bf16.msra.mxu0 %v1792
          %1931 = vmatprep.subr.bf16.mxu0 %v1796
          %1932 = vmatpush1.bf16.msra.mxu0 %v1795
          %1933 = vmatprep.subr.bf16.mxu0 %v1799
          %1934 = vmatpush1.bf16.msra.mxu0 %v1798
          %1935 = vmatprep.subr.bf16.mxu0 %v1802
          %1936 = vmatpush1.bf16.msra.mxu0 %v1801
          %1937 = vmatprep.subr.bf16.mxu0 %v1805
          %1938 = vmatpush1.bf16.msra.mxu0 %v1804
          %1939 = vmatprep.subr.bf16.mxu0 %v1808
          %1940 = vmatpush1.bf16.msra.mxu0 %v1807
          %1941 = vmatprep.subr.bf16.mxu0 %v1811
          %1942 = vmatpush1.bf16.msra.mxu0 %v1810
          %1943 = vmatprep.subr.bf16.mxu0 %v1814
          %1944 = vmatpush1.bf16.msra.mxu0 %v1813
          %1945 = vmatprep.subr.bf16.mxu0 %v1817
          %1946 = vmatpush1.bf16.msra.mxu0 %v1816
          %1947 = vmatprep.mubr.bf16.mxu0 %v1430
          %1948 = vmatmul.mubr.bf16.gmra.mrb[0].mxu0 %v1429
          %v1949 = vpop.f32.mrb[0].mxu0
          %v1950 = vadd.f32 0.0, %v1949
          %v1951 = vpop.f32.mrb[0].mxu0
          %v1952 = vadd.f32 0.0, %v1951
          %v1953 = vpop.f32.mrb[0].mxu0
          %v1954 = vadd.f32 0.0, %v1953
          %v1955 = vpop.f32.mrb[0].mxu0
          %v1956 = vadd.f32 0.0, %v1955
          %1957 = vdwg.mxu0
          %1958 = vmatprep.subr.bf16.mxu0 %v1820
          %1959 = vmatpush1.bf16.msra.mxu0 %v1819
          %1960 = vmatprep.subr.bf16.mxu0 %v1823
          %1961 = vmatpush1.bf16.msra.mxu0 %v1822
          %1962 = vmatprep.subr.bf16.mxu0 %v1826
          %1963 = vmatpush1.bf16.msra.mxu0 %v1825
          %1964 = vmatprep.subr.bf16.mxu0 %v1829
          %1965 = vmatpush1.bf16.msra.mxu0 %v1828
          %1966 = vmatprep.subr.bf16.mxu0 %v1832
          %1967 = vmatpush1.bf16.msra.mxu0 %v1831
          %1968 = vmatprep.subr.bf16.mxu0 %v1835
          %1969 = vmatpush1.bf16.msra.mxu0 %v1834
          %1970 = vmatprep.subr.bf16.mxu0 %v1838
          %1971 = vmatpush1.bf16.msra.mxu0 %v1837
          %1972 = vmatprep.subr.bf16.mxu0 %v1841
          %1973 = vmatpush1.bf16.msra.mxu0 %v1840
          %1974 = vmatprep.subr.bf16.mxu0 0
          %1975 = vmatpush1.bf16.msra.mxu0 0
          %1976 = vmatprep.subr.bf16.mxu0 0
          %1977 = vmatpush1.bf16.msra.mxu0 0
          %1978 = vmatprep.subr.bf16.mxu0 0
          %1979 = vmatpush1.bf16.msra.mxu0 0
          %1980 = vmatprep.subr.bf16.mxu0 0
          %1981 = vmatpush1.bf16.msra.mxu0 0
          %1982 = vmatprep.subr.bf16.mxu0 0
          %1983 = vmatpush1.bf16.msra.mxu0 0
          %1984 = vmatprep.subr.bf16.mxu0 0
          %1985 = vmatpush1.bf16.msra.mxu0 0
          %1986 = vmatprep.subr.bf16.mxu0 0
          %1987 = vmatpush1.bf16.msra.mxu0 0
          %1988 = vmatprep.subr.bf16.mxu0 0
          %1989 = vmatpush1.bf16.msra.mxu0 0
          %1990 = vmatprep.mubr.bf16.mxu0 0
          %1991 = vmatmul.mubr.bf16.gmra.mrb[0].mxu0 %v1431
          %v1992 = vpop.f32.mrb[0].mxu0
          %v1993 = vadd.f32 %v1950, %v1992
          %v1994 = vpop.f32.mrb[0].mxu0
          %v1995 = vadd.f32 %v1952, %v1994
          %v1996 = vpop.f32.mrb[0].mxu0
          %v1997 = vadd.f32 %v1954, %v1996
          %v1998 = vpop.f32.mrb[0].mxu0
          %v1999 = vadd.f32 %v1956, %v1998
          %2000 = vdwg.mxu0
          %2001 = vmatprep.subr.bf16.mxu0 0
          %2002 = vmatpush1.bf16.msra.mxu0 %v1773
          %2003 = vmatprep.subr.bf16.mxu0 0
          %2004 = vmatpush1.bf16.msra.mxu0 %v1776
          %2005 = vmatprep.subr.bf16.mxu0 0
          %2006 = vmatpush1.bf16.msra.mxu0 %v1779
          %2007 = vmatprep.subr.bf16.mxu0 0
          %2008 = vmatpush1.bf16.msra.mxu0 %v1782
          %2009 = vmatprep.subr.bf16.mxu0 0
          %2010 = vmatpush1.bf16.msra.mxu0 %v1785
          %2011 = vmatprep.subr.bf16.mxu0 0
          %2012 = vmatpush1.bf16.msra.mxu0 %v1788
          %2013 = vmatprep.subr.bf16.mxu0 0
          %2014 = vmatpush1.bf16.msra.mxu0 %v1791
          %2015 = vmatprep.subr.bf16.mxu0 0
          %2016 = vmatpush1.bf16.msra.mxu0 %v1794
          %2017 = vmatprep.subr.bf16.mxu0 0
          %2018 = vmatpush1.bf16.msra.mxu0 %v1797
          %2019 = vmatprep.subr.bf16.mxu0 0
          %2020 = vmatpush1.bf16.msra.mxu0 %v1800
          %2021 = vmatprep.subr.bf16.mxu0 0
          %2022 = vmatpush1.bf16.msra.mxu0 %v1803
          %2023 = vmatprep.subr.bf16.mxu0 0
          %2024 = vmatpush1.bf16.msra.mxu0 %v1806
          %2025 = vmatprep.subr.bf16.mxu0 0
          %2026 = vmatpush1.bf16.msra.mxu0 %v1809
          %2027 = vmatprep.subr.bf16.mxu0 0
          %2028 = vmatpush1.bf16.msra.mxu0 %v1812
          %2029 = vmatprep.subr.bf16.mxu0 0
          %2030 = vmatpush1.bf16.msra.mxu0 %v1815
          %2031 = vmatprep.subr.bf16.mxu0 0
          %2032 = vmatpush1.bf16.msra.mxu0 %v1818
          %2033 = vmatprep.mubr.bf16.mxu0 %v1430
          %2034 = vmatmul.mubr.bf16.gmra.mrb[0].mxu0 %v1429
          %v2035 = vpop.f32.mrb[0].mxu0
          %v2036 = vadd.f32 0.0, %v2035
          %v2037 = vpop.f32.mrb[0].mxu0
          %v2038 = vpop.f32.mrb[0].mxu0
          %v2039 = vadd.f32 0.0, %v2038
          %v2040 = vpop.f32.mrb[0].mxu0
          %2041 = vdwg.mxu0
          %2042 = vmatprep.subr.bf16.mxu0 0
          %2043 = vmatpush1.bf16.msra.mxu0 %v1821
          %2044 = vmatprep.subr.bf16.mxu0 0
          %2045 = vmatpush1.bf16.msra.mxu0 %v1824
          %2046 = vmatprep.subr.bf16.mxu0 0
          %2047 = vmatpush1.bf16.msra.mxu0 %v1827
          %2048 = vmatprep.subr.bf16.mxu0 0
          %2049 = vmatpush1.bf16.msra.mxu0 %v1830
          %2050 = vmatprep.subr.bf16.mxu0 0
          %2051 = vmatpush1.bf16.msra.mxu0 %v1833
          %2052 = vmatprep.subr.bf16.mxu0 0
          %2053 = vmatpush1.bf16.msra.mxu0 %v1836
          %2054 = vmatprep.subr.bf16.mxu0 0
          %2055 = vmatpush1.bf16.msra.mxu0 %v1839
          %2056 = vmatprep.subr.bf16.mxu0 0
          %2057 = vmatpush1.bf16.msra.mxu0 %v1842
          %2058 = vmatprep.subr.bf16.mxu0 0
          %2059 = vmatpush1.bf16.msra.mxu0 0
          %2060 = vmatprep.subr.bf16.mxu0 0
          %2061 = vmatpush1.bf16.msra.mxu0 0
          %2062 = vmatprep.subr.bf16.mxu0 0
          %2063 = vmatpush1.bf16.msra.mxu0 0
          %2064 = vmatprep.subr.bf16.mxu0 0
          %2065 = vmatpush1.bf16.msra.mxu0 0
          %2066 = vmatprep.subr.bf16.mxu0 0
          %2067 = vmatpush1.bf16.msra.mxu0 0
          %2068 = vmatprep.subr.bf16.mxu0 0
          %2069 = vmatpush1.bf16.msra.mxu0 0
          %2070 = vmatprep.subr.bf16.mxu0 0
          %2071 = vmatpush1.bf16.msra.mxu0 0
          %2072 = vmatprep.subr.bf16.mxu0 0
          %2073 = vmatpush1.bf16.msra.mxu0 0
          %2074 = vmatprep.mubr.bf16.mxu0 0
          %2075 = vmatmul.mubr.bf16.gmra.mrb[0].mxu0 %v1431
          %v2076 = vpop.f32.mrb[0].mxu0
          %v2077 = vadd.f32 %v2036, %v2076
          %v2078 = vpop.f32.mrb[0].mxu0
          %v2079 = vpop.f32.mrb[0].mxu0
          %v2080 = vadd.f32 %v2039, %v2079
          %v2081 = vpop.f32.mrb[0].mxu0
          %2082 = vdwg.mxu0
          %v2083 = vld [vmem:[%s349] sm:$0x7]
          %v2085 = vlaneseq
          %v2086 = vshrl.u32 %v2085, 7
          %v2087 = vsub.s32 0, %v2086
          %v2088 = vrot.slane %v2083, %v2087
          %v2089 = vlaneseq
          %v2090 = vshrl.u32 %v2089, 7
          %v2091 = vsub.s32 1, %v2090
          %v2092 = vrot.slane %v2083, %v2091
          %v2093 = vlaneseq
          %v2094 = vshrl.u32 %v2093, 7
          %v2095 = vsub.s32 2, %v2094
          %v2096 = vrot.slane %v2083, %v2095
          %v2100 = vmul.f32 %v1993, %v2088
          %v2101 = vmul.f32 %v1995, %v2092
          %v2102 = vmul.f32 %v2077, %v2096
          %v2103 = vmul.f32 %v1997, %v2088
          %v2104 = vmul.f32 %v1999, %v2092
          %v2105 = vmul.f32 %v2080, %v2096
          %s2106 = smul.u32 %s25, 3
          %s2107 = smul.addr %s2106, 8
          %s2108 = scalar_lea.vmem [#allocation2], %s2107
          %v2109 = vld [vmem:[%s2108] sm:$0xff]
          %v2110 = vld [vmem:[%s2108 + $0x8] sm:$0xff]
          %v2111 = vld [vmem:[%s2108 + $0x10] sm:$0xff]
          %v2112 = vunpack.c.l.bf16 %v2109
          %v2113 = vunpack.c.l.bf16 %v2110
          %v2114 = vunpack.c.l.bf16 %v2111
          %v2115 = vunpack.c.h.bf16 %v2109
          %v2116 = vunpack.c.h.bf16 %v2110
          %v2117 = vunpack.c.h.bf16 %v2111
          %v2118 = vld [vmem:[%s355] sm:$0xff]
          %v2119 = vld [vmem:[%s355 + $0x8] sm:$0xff]
          %v2120 = vld [vmem:[%s308] sm:$0xff]
          %v2121 = vld [vmem:[%s308 + $0x8] sm:$0xff]
          %vm2122 = vcmask 130048
          %v2124 = vsel %vm2122, %v2120, 0
          %v2127 = vsel %vm2122, %v2121, 0
          %2129 = vmatprep.subr.mxu0 %v2113
          %2130 = vmatpush1.msra.mxu0 %v2112
          %2131 = vmatprep.subr.mxu0 %v2116
          %2132 = vmatpush1.msra.mxu0 %v2115
          %2133 = vmatprep.subr.mxu0 0.0
          %2134 = vmatpush1.msra.mxu0 0.0
          %2135 = vmatprep.subr.mxu0 0.0
          %2136 = vmatpush1.msra.mxu0 0.0
          %2137 = vmatprep.subr.mxu0 0.0
          %2138 = vmatpush1.msra.mxu0 0.0
          %2139 = vmatprep.subr.mxu0 0.0
          %2140 = vmatpush1.msra.mxu0 0.0
          %2141 = vmatprep.subr.mxu0 0.0
          %2142 = vmatpush1.msra.mxu0 0.0
          %2143 = vmatprep.subr.mxu0 0.0
          %2144 = vmatpush1.msra.mxu0 0.0
          %2145 = vmatprep.subr.mxu0 0.0
          %2146 = vmatpush1.msra.mxu0 0.0
          %2147 = vmatprep.subr.mxu0 0.0
          %2148 = vmatpush1.msra.mxu0 0.0
          %2149 = vmatprep.subr.mxu0 0.0
          %2150 = vmatpush1.msra.mxu0 0.0
          %2151 = vmatprep.subr.mxu0 0.0
          %2152 = vmatpush1.msra.mxu0 0.0
          %2153 = vmatprep.subr.mxu0 0.0
          %2154 = vmatpush1.msra.mxu0 0.0
          %2155 = vmatprep.subr.mxu0 0.0
          %2156 = vmatpush1.msra.mxu0 0.0
          %2157 = vmatprep.subr.mxu0 0.0
          %2158 = vmatpush1.msra.mxu0 0.0
          %2159 = vmatprep.subr.mxu0 0.0
          %2160 = vmatpush1.msra.mxu0 0.0
          %2161 = vmatprep.subr.mxu0 0.0
          %2162 = vmatpush1.msra.mxu0 0.0
          %2163 = vmatprep.subr.mxu0 0.0
          %2164 = vmatpush1.msra.mxu0 0.0
          %2165 = vmatprep.subr.mxu0 0.0
          %2166 = vmatpush1.msra.mxu0 0.0
          %2167 = vmatprep.subr.mxu0 0.0
          %2168 = vmatpush1.msra.mxu0 0.0
          %2169 = vmatprep.subr.mxu0 0.0
          %2170 = vmatpush1.msra.mxu0 0.0
          %2171 = vmatprep.subr.mxu0 0.0
          %2172 = vmatpush1.msra.mxu0 0.0
          %2173 = vmatprep.subr.mxu0 0.0
          %2174 = vmatpush1.msra.mxu0 0.0
          %2175 = vmatprep.subr.mxu0 0.0
          %2176 = vmatpush1.msra.mxu0 0.0
          %2177 = vmatprep.subr.mxu0 0.0
          %2178 = vmatpush1.msra.mxu0 0.0
          %2179 = vmatprep.subr.mxu0 0.0
          %2180 = vmatpush1.msra.mxu0 0.0
          %2181 = vmatprep.subr.mxu0 0.0
          %2182 = vmatpush1.msra.mxu0 0.0
          %2183 = vmatprep.subr.mxu0 0.0
          %2184 = vmatpush1.msra.mxu0 0.0
          %2185 = vmatprep.subr.mxu0 0.0
          %2186 = vmatpush1.msra.mxu0 0.0
          %2187 = vmatprep.subr.mxu0 0.0
          %2188 = vmatpush1.msra.mxu0 0.0
          %2189 = vmatprep.subr.mxu0 0.0
          %2190 = vmatpush1.msra.mxu0 0.0
          %2191 = vmatprep.subr.mxu0 0.0
          %2192 = vmatpush1.msra.mxu0 0.0
          %2193 = vmatprep.mubr.f32.mxu0 0.0
          %2194 = vmatmul.mubr.f32.gmra.mrb[0].mxu0 %v2124
          %v2195 = vpop.f32.mrb[0].mxu0
          %v2196 = vadd.f32 0.0, %v2195
          %v2197 = vpop.f32.mrb[0].mxu0
          %v2198 = vadd.f32 0.0, %v2197
          %2199 = vmatprep.mubr.f32.mxu0 0.0
          %2200 = vmatmul.mubr.f32.gmra.mrb[0].mxu0 %v2127
          %v2201 = vpop.f32.mrb[0].mxu0
          %v2202 = vadd.f32 0.0, %v2201
          %v2203 = vpop.f32.mrb[0].mxu0
          %v2204 = vadd.f32 0.0, %v2203
          %2205 = vdwg.mxu0
          %2206 = vmatprep.subr.mxu0 0.0
          %2207 = vmatpush1.msra.mxu0 %v2114
          %2208 = vmatprep.subr.mxu0 0.0
          %2209 = vmatpush1.msra.mxu0 %v2117
          %2210 = vmatprep.subr.mxu0 0.0
          %2211 = vmatpush1.msra.mxu0 0.0
          %2212 = vmatprep.subr.mxu0 0.0
          %2213 = vmatpush1.msra.mxu0 0.0
          %2214 = vmatprep.subr.mxu0 0.0
          %2215 = vmatpush1.msra.mxu0 0.0
          %2216 = vmatprep.subr.mxu0 0.0
          %2217 = vmatpush1.msra.mxu0 0.0
          %2218 = vmatprep.subr.mxu0 0.0
          %2219 = vmatpush1.msra.mxu0 0.0
          %2220 = vmatprep.subr.mxu0 0.0
          %2221 = vmatpush1.msra.mxu0 0.0
          %2222 = vmatprep.subr.mxu0 0.0
          %2223 = vmatpush1.msra.mxu0 0.0
          %2224 = vmatprep.subr.mxu0 0.0
          %2225 = vmatpush1.msra.mxu0 0.0
          %2226 = vmatprep.subr.mxu0 0.0
          %2227 = vmatpush1.msra.mxu0 0.0
          %2228 = vmatprep.subr.mxu0 0.0
          %2229 = vmatpush1.msra.mxu0 0.0
          %2230 = vmatprep.subr.mxu0 0.0
          %2231 = vmatpush1.msra.mxu0 0.0
          %2232 = vmatprep.subr.mxu0 0.0
          %2233 = vmatpush1.msra.mxu0 0.0
          %2234 = vmatprep.subr.mxu0 0.0
          %2235 = vmatpush1.msra.mxu0 0.0
          %2236 = vmatprep.subr.mxu0 0.0
          %2237 = vmatpush1.msra.mxu0 0.0
          %2238 = vmatprep.subr.mxu0 0.0
          %2239 = vmatpush1.msra.mxu0 0.0
          %2240 = vmatprep.subr.mxu0 0.0
          %2241 = vmatpush1.msra.mxu0 0.0
          %2242 = vmatprep.subr.mxu0 0.0
          %2243 = vmatpush1.msra.mxu0 0.0
          %2244 = vmatprep.subr.mxu0 0.0
          %2245 = vmatpush1.msra.mxu0 0.0
          %2246 = vmatprep.subr.mxu0 0.0
          %2247 = vmatpush1.msra.mxu0 0.0
          %2248 = vmatprep.subr.mxu0 0.0
          %2249 = vmatpush1.msra.mxu0 0.0
          %2250 = vmatprep.subr.mxu0 0.0
          %2251 = vmatpush1.msra.mxu0 0.0
          %2252 = vmatprep.subr.mxu0 0.0
          %2253 = vmatpush1.msra.mxu0 0.0
          %2254 = vmatprep.subr.mxu0 0.0
          %2255 = vmatpush1.msra.mxu0 0.0
          %2256 = vmatprep.subr.mxu0 0.0
          %2257 = vmatpush1.msra.mxu0 0.0
          %2258 = vmatprep.subr.mxu0 0.0
          %2259 = vmatpush1.msra.mxu0 0.0
          %2260 = vmatprep.subr.mxu0 0.0
          %2261 = vmatpush1.msra.mxu0 0.0
          %2262 = vmatprep.subr.mxu0 0.0
          %2263 = vmatpush1.msra.mxu0 0.0
          %2264 = vmatprep.subr.mxu0 0.0
          %2265 = vmatpush1.msra.mxu0 0.0
          %2266 = vmatprep.subr.mxu0 0.0
          %2267 = vmatpush1.msra.mxu0 0.0
          %2268 = vmatprep.subr.mxu0 0.0
          %2269 = vmatpush1.msra.mxu0 0.0
          %2270 = vmatprep.mubr.f32.mxu0 0.0
          %2271 = vmatmul.mubr.f32.gmra.mrb[0].mxu0 %v2124
          %v2272 = vpop.f32.mrb[0].mxu0
          %v2273 = vadd.f32 0.0, %v2272
          %v2274 = vpop.f32.mrb[0].mxu0
          %2275 = vmatprep.mubr.f32.mxu0 0.0
          %2276 = vmatmul.mubr.f32.gmra.mrb[0].mxu0 %v2127
          %v2277 = vpop.f32.mrb[0].mxu0
          %v2278 = vadd.f32 0.0, %v2277
          %v2279 = vpop.f32.mrb[0].mxu0
          %2280 = vdwg.mxu0
          %v2282 = vsel %vm2122, %v2118, 0
          %v2285 = vsel %vm2122, %v2119, 0
          %2287 = vmatprep.subr.mxu0 %v2101
          %2288 = vmatpush1.msra.mxu0 %v2100
          %2289 = vmatprep.subr.mxu0 %v2104
          %2290 = vmatpush1.msra.mxu0 %v2103
          %2291 = vmatprep.subr.mxu0 0.0
          %2292 = vmatpush1.msra.mxu0 0.0
          %2293 = vmatprep.subr.mxu0 0.0
          %2294 = vmatpush1.msra.mxu0 0.0
          %2295 = vmatprep.subr.mxu0 0.0
          %2296 = vmatpush1.msra.mxu0 0.0
          %2297 = vmatprep.subr.mxu0 0.0
          %2298 = vmatpush1.msra.mxu0 0.0
          %2299 = vmatprep.subr.mxu0 0.0
          %2300 = vmatpush1.msra.mxu0 0.0
          %2301 = vmatprep.subr.mxu0 0.0
          %2302 = vmatpush1.msra.mxu0 0.0
          %2303 = vmatprep.subr.mxu0 0.0
          %2304 = vmatpush1.msra.mxu0 0.0
          %2305 = vmatprep.subr.mxu0 0.0
          %2306 = vmatpush1.msra.mxu0 0.0
          %2307 = vmatprep.subr.mxu0 0.0
          %2308 = vmatpush1.msra.mxu0 0.0
          %2309 = vmatprep.subr.mxu0 0.0
          %2310 = vmatpush1.msra.mxu0 0.0
          %2311 = vmatprep.subr.mxu0 0.0
          %2312 = vmatpush1.msra.mxu0 0.0
          %2313 = vmatprep.subr.mxu0 0.0
          %2314 = vmatpush1.msra.mxu0 0.0
          %2315 = vmatprep.subr.mxu0 0.0
          %2316 = vmatpush1.msra.mxu0 0.0
          %2317 = vmatprep.subr.mxu0 0.0
          %2318 = vmatpush1.msra.mxu0 0.0
          %2319 = vmatprep.subr.mxu0 0.0
          %2320 = vmatpush1.msra.mxu0 0.0
          %2321 = vmatprep.subr.mxu0 0.0
          %2322 = vmatpush1.msra.mxu0 0.0
          %2323 = vmatprep.subr.mxu0 0.0
          %2324 = vmatpush1.msra.mxu0 0.0
          %2325 = vmatprep.subr.mxu0 0.0
          %2326 = vmatpush1.msra.mxu0 0.0
          %2327 = vmatprep.subr.mxu0 0.0
          %2328 = vmatpush1.msra.mxu0 0.0
          %2329 = vmatprep.subr.mxu0 0.0
          %2330 = vmatpush1.msra.mxu0 0.0
          %2331 = vmatprep.subr.mxu0 0.0
          %2332 = vmatpush1.msra.mxu0 0.0
          %2333 = vmatprep.subr.mxu0 0.0
          %2334 = vmatpush1.msra.mxu0 0.0
          %2335 = vmatprep.subr.mxu0 0.0
          %2336 = vmatpush1.msra.mxu0 0.0
          %2337 = vmatprep.subr.mxu0 0.0
          %2338 = vmatpush1.msra.mxu0 0.0
          %2339 = vmatprep.subr.mxu0 0.0
          %2340 = vmatpush1.msra.mxu0 0.0
          %2341 = vmatprep.subr.mxu0 0.0
          %2342 = vmatpush1.msra.mxu0 0.0
          %2343 = vmatprep.subr.mxu0 0.0
          %2344 = vmatpush1.msra.mxu0 0.0
          %2345 = vmatprep.subr.mxu0 0.0
          %2346 = vmatpush1.msra.mxu0 0.0
          %2347 = vmatprep.subr.mxu0 0.0
          %2348 = vmatpush1.msra.mxu0 0.0
          %2349 = vmatprep.subr.mxu0 0.0
          %2350 = vmatpush1.msra.mxu0 0.0
          %2351 = vmatprep.mubr.f32.mxu0 0.0
          %2352 = vmatmul.mubr.f32.gmra.mrb[0].mxu0 %v2282
          %v2353 = vpop.f32.mrb[0].mxu0
          %v2354 = vadd.f32 %v2196, %v2353
          %v2355 = vpop.f32.mrb[0].mxu0
          %v2356 = vadd.f32 %v2198, %v2355
          %2357 = vmatprep.mubr.f32.mxu0 0.0
          %2358 = vmatmul.mubr.f32.gmra.mrb[0].mxu0 %v2285
          %v2359 = vpop.f32.mrb[0].mxu0
          %v2360 = vadd.f32 %v2202, %v2359
          %v2361 = vpop.f32.mrb[0].mxu0
          %v2362 = vadd.f32 %v2204, %v2361
          %2363 = vdwg.mxu0
          %2364 = vmatprep.subr.mxu0 0.0
          %2365 = vmatpush1.msra.mxu0 %v2102
          %2366 = vmatprep.subr.mxu0 0.0
          %2367 = vmatpush1.msra.mxu0 %v2105
          %2368 = vmatprep.subr.mxu0 0.0
          %2369 = vmatpush1.msra.mxu0 0.0
          %2370 = vmatprep.subr.mxu0 0.0
          %2371 = vmatpush1.msra.mxu0 0.0
          %2372 = vmatprep.subr.mxu0 0.0
          %2373 = vmatpush1.msra.mxu0 0.0
          %2374 = vmatprep.subr.mxu0 0.0
          %2375 = vmatpush1.msra.mxu0 0.0
          %2376 = vmatprep.subr.mxu0 0.0
          %2377 = vmatpush1.msra.mxu0 0.0
          %2378 = vmatprep.subr.mxu0 0.0
          %2379 = vmatpush1.msra.mxu0 0.0
          %2380 = vmatprep.subr.mxu0 0.0
          %2381 = vmatpush1.msra.mxu0 0.0
          %2382 = vmatprep.subr.mxu0 0.0
          %2383 = vmatpush1.msra.mxu0 0.0
          %2384 = vmatprep.subr.mxu0 0.0
          %2385 = vmatpush1.msra.mxu0 0.0
          %2386 = vmatprep.subr.mxu0 0.0
          %2387 = vmatpush1.msra.mxu0 0.0
          %2388 = vmatprep.subr.mxu0 0.0
          %2389 = vmatpush1.msra.mxu0 0.0
          %2390 = vmatprep.subr.mxu0 0.0
          %2391 = vmatpush1.msra.mxu0 0.0
          %2392 = vmatprep.subr.mxu0 0.0
          %2393 = vmatpush1.msra.mxu0 0.0
          %2394 = vmatprep.subr.mxu0 0.0
          %2395 = vmatpush1.msra.mxu0 0.0
          %2396 = vmatprep.subr.mxu0 0.0
          %2397 = vmatpush1.msra.mxu0 0.0
          %2398 = vmatprep.subr.mxu0 0.0
          %2399 = vmatpush1.msra.mxu0 0.0
          %2400 = vmatprep.subr.mxu0 0.0
          %2401 = vmatpush1.msra.mxu0 0.0
          %2402 = vmatprep.subr.mxu0 0.0
          %2403 = vmatpush1.msra.mxu0 0.0
          %2404 = vmatprep.subr.mxu0 0.0
          %2405 = vmatpush1.msra.mxu0 0.0
          %2406 = vmatprep.subr.mxu0 0.0
          %2407 = vmatpush1.msra.mxu0 0.0
          %2408 = vmatprep.subr.mxu0 0.0
          %2409 = vmatpush1.msra.mxu0 0.0
          %2410 = vmatprep.subr.mxu0 0.0
          %2411 = vmatpush1.msra.mxu0 0.0
          %2412 = vmatprep.subr.mxu0 0.0
          %2413 = vmatpush1.msra.mxu0 0.0
          %2414 = vmatprep.subr.mxu0 0.0
          %2415 = vmatpush1.msra.mxu0 0.0
          %2416 = vmatprep.subr.mxu0 0.0
          %2417 = vmatpush1.msra.mxu0 0.0
          %2418 = vmatprep.subr.mxu0 0.0
          %2419 = vmatpush1.msra.mxu0 0.0
          %2420 = vmatprep.subr.mxu0 0.0
          %2421 = vmatpush1.msra.mxu0 0.0
          %2422 = vmatprep.subr.mxu0 0.0
          %2423 = vmatpush1.msra.mxu0 0.0
          %2424 = vmatprep.subr.mxu0 0.0
          %2425 = vmatpush1.msra.mxu0 0.0
          %2426 = vmatprep.subr.mxu0 0.0
          %2427 = vmatpush1.msra.mxu0 0.0
          %2428 = vmatprep.mubr.f32.mxu0 0.0
          %2429 = vmatmul.mubr.f32.gmra.mrb[0].mxu0 %v2282
          %v2430 = vpop.f32.mrb[0].mxu0
          %v2431 = vadd.f32 %v2273, %v2430
          %v2432 = vpop.f32.mrb[0].mxu0
          %2433 = vmatprep.mubr.f32.mxu0 0.0
          %2434 = vmatmul.mubr.f32.gmra.mrb[0].mxu0 %v2285
          %v2435 = vpop.f32.mrb[0].mxu0
          %v2436 = vadd.f32 %v2278, %v2435
          %v2437 = vpop.f32.mrb[0].mxu0
          %2438 = vdwg.mxu0
          %v2439 = vld [vmem:[%s360] sm:$0xff]
          %v2440 = vld [vmem:[%s360 + $0x8] sm:$0xff]
          %2442 = vset.pattern.permute.xlu0 0
          %2443 = vperm.xlu0 %2442, %v2439
          %v2444 = vpop.permute.xlu0 %2443
          %2447 = vset.pattern.permute.xlu0 0
          %2448 = vperm.xlu0 %2447, %v2440
          %v2449 = vpop.permute.xlu0 %2448
          %v2451 = vadd.f32 %v2354, %v2444
          %v2452 = vadd.f32 %v2356, %v2444
          %v2453 = vadd.f32 %v2431, %v2444
          %v2454 = vadd.f32 %v2360, %v2449
          %v2455 = vadd.f32 %v2362, %v2449
          %v2456 = vadd.f32 %v2436, %v2449
          %v2457 = vpack.c.bf16 %v2454, %v2451
          %v2458 = vpack.c.bf16 %v2455, %v2452
          %v2459 = vpack.c.bf16 %v2456, %v2453
          %s2460 = smul.addr %s2106, 8
          %s2461 = scalar_lea.vmem [#allocation3], %s2460
          %2462 = vst [vmem:[%s2461] sm:$0xff] %v2457
          %2463 = vst [vmem:[%s2461 + $0x8] sm:$0xff] %v2458
          %2464 = vst [vmem:[%s2461 + $0x10] sm:$0xff] %v2459
          %2465 = vst [vmem:[#allocation10] sm:$0xff] %v2451
          %2466 = vst [vmem:[#allocation10 + $0x8] sm:$0xff] %v2452
          %2467 = vst [vmem:[#allocation10 + $0x10] sm:$0xff] %v2453
          %2468 = vst [vmem:[#allocation10 + $0x18] sm:$0xff] %v2454
          %2469 = vst [vmem:[#allocation10 + $0x20] sm:$0xff] %v2455
          %2470 = vst [vmem:[#allocation10 + $0x28] sm:$0xff] %v2456
        $region64: #{tpu_custom_call.1} parent=43 // pred_fallthru
          _
        %p2471 = scmp.gt.s32.totalorder %s24, 0
        %p2472 = scmp.eq.s32.totalorder %s1424, 0
        %p2473 = pnand %p2471, %p2472
        %p2474 = pneg %p2473
        // Predicated region
        $region65: #{tpu_custom_call.1} parent=43 // pred_check
          _
        $region66: #{tpu_custom_call.1} parent=43 // pred_check_branch
          %2476 = sbr.rel (%p2473) target = $region68
        $region67: #{tpu_custom_call.1} parent=43 // pred_region
          %v2477 = vld [vmem:[#allocation3] sm:$0xff]
          %v2478 = vld [vmem:[#allocation3 + $0x8] sm:$0xff]
          %v2479 = vld [vmem:[#allocation3 + $0x10] sm:$0xff]
          %s2480 = smul.u32 %s25, 144
          %s2481 = smul.addr %s2480, 4
          %s2482 = scalar_lea.vmem [#allocation4], %s2481
          %v2483 = vld [vmem:[%s2482] sm:$0xff]
          %v2484 = vld [vmem:[%s2482 + $0x8] sm:$0xf]
          %v2485 = vld [vmem:[%s2482 + $0xc] sm:$0xff]
          %v2486 = vld [vmem:[%s2482 + $0x14] sm:$0xf]
          %v2487 = vld [vmem:[%s2482 + $0x18] sm:$0xff]
          %v2488 = vld [vmem:[%s2482 + $0x20] sm:$0xf]
          %v2489 = vld [vmem:[%s2482 + $0x24] sm:$0xff]
          %v2490 = vld [vmem:[%s2482 + $0x2c] sm:$0xf]
          %v2491 = vld [vmem:[%s2482 + $0x30] sm:$0xff]
          %v2492 = vld [vmem:[%s2482 + $0x38] sm:$0xf]
          %v2493 = vld [vmem:[%s2482 + $0x3c] sm:$0xff]
          %v2494 = vld [vmem:[%s2482 + $0x44] sm:$0xf]
          %v2495 = vld [vmem:[%s2482 + $0x48] sm:$0xff]
          %v2496 = vld [vmem:[%s2482 + $0x50] sm:$0xf]
          %v2497 = vld [vmem:[%s2482 + $0x54] sm:$0xff]
          %v2498 = vld [vmem:[%s2482 + $0x5c] sm:$0xf]
          %v2499 = vld [vmem:[%s2482 + $0x60] sm:$0xff]
          %v2500 = vld [vmem:[%s2482 + $0x68] sm:$0xf]
          %v2501 = vld [vmem:[%s2482 + $0x6c] sm:$0xff]
          %v2502 = vld [vmem:[%s2482 + $0x74] sm:$0xf]
          %v2503 = vld [vmem:[%s2482 + $0x78] sm:$0xff]
          %v2504 = vld [vmem:[%s2482 + $0x80] sm:$0xf]
          %v2505 = vld [vmem:[%s2482 + $0x84] sm:$0xff]
          %v2506 = vld [vmem:[%s2482 + $0x8c] sm:$0xf]
          %v2507 = vld [vmem:[%s2482 + $0x90] sm:$0xff]
          %v2508 = vld [vmem:[%s2482 + $0x98] sm:$0xf]
          %v2509 = vld [vmem:[%s2482 + $0x9c] sm:$0xff]
          %v2510 = vld [vmem:[%s2482 + $0xa4] sm:$0xf]
          %v2511 = vld [vmem:[%s2482 + $0xa8] sm:$0xff]
          %v2512 = vld [vmem:[%s2482 + $0xb0] sm:$0xf]
          %v2513 = vld [vmem:[%s2482 + $0xb4] sm:$0xff]
          %v2514 = vld [vmem:[%s2482 + $0xbc] sm:$0xf]
          %v2515 = vld [vmem:[%s2482 + $0xc0] sm:$0xff]
          %v2516 = vld [vmem:[%s2482 + $0xc8] sm:$0xf]
          %v2517 = vld [vmem:[%s2482 + $0xcc] sm:$0xff]
          %v2518 = vld [vmem:[%s2482 + $0xd4] sm:$0xf]
          %v2519 = vld [vmem:[%s2482 + $0xd8] sm:$0xff]
          %v2520 = vld [vmem:[%s2482 + $0xe0] sm:$0xf]
          %v2521 = vld [vmem:[%s2482 + $0xe4] sm:$0xff]
          %v2522 = vld [vmem:[%s2482 + $0xec] sm:$0xf]
          %v2523 = vld [vmem:[%s2482 + $0xf0] sm:$0xff]
          %v2524 = vld [vmem:[%s2482 + $0xf8] sm:$0xf]
          %v2525 = vld [vmem:[%s2482 + $0xfc] sm:$0xff]
          %v2526 = vld [vmem:[%s2482 + $0x104] sm:$0xf]
          %v2527 = vld [vmem:[%s2482 + $0x108] sm:$0xff]
          %v2528 = vld [vmem:[%s2482 + $0x110] sm:$0xf]
          %v2529 = vld [vmem:[%s2482 + $0x114] sm:$0xff]
          %v2530 = vld [vmem:[%s2482 + $0x11c] sm:$0xf]
          %v2531 = vld [vmem:[%s2482 + $0x120] sm:$0xff]
          %v2532 = vld [vmem:[%s2482 + $0x128] sm:$0xf]
          %v2533 = vld [vmem:[%s2482 + $0x12c] sm:$0xff]
          %v2534 = vld [vmem:[%s2482 + $0x134] sm:$0xf]
          %v2535 = vld [vmem:[%s2482 + $0x138] sm:$0xff]
          %v2536 = vld [vmem:[%s2482 + $0x140] sm:$0xf]
          %v2537 = vld [vmem:[%s2482 + $0x144] sm:$0xff]
          %v2538 = vld [vmem:[%s2482 + $0x14c] sm:$0xf]
          %v2539 = vld [vmem:[%s2482 + $0x150] sm:$0xff]
          %v2540 = vld [vmem:[%s2482 + $0x158] sm:$0xf]
          %v2541 = vld [vmem:[%s2482 + $0x15c] sm:$0xff]
          %v2542 = vld [vmem:[%s2482 + $0x164] sm:$0xf]
          %v2543 = vld [vmem:[%s2482 + $0x168] sm:$0xff]
          %v2544 = vld [vmem:[%s2482 + $0x170] sm:$0xf]
          %v2545 = vld [vmem:[%s2482 + $0x174] sm:$0xff]
          %v2546 = vld [vmem:[%s2482 + $0x17c] sm:$0xf]
          %v2547 = vld [vmem:[%s2482 + $0x180] sm:$0xff]
          %v2548 = vld [vmem:[%s2482 + $0x188] sm:$0xf]
          %v2549 = vld [vmem:[%s2482 + $0x18c] sm:$0xff]
          %v2550 = vld [vmem:[%s2482 + $0x194] sm:$0xf]
          %v2551 = vld [vmem:[%s2482 + $0x198] sm:$0xff]
          %v2552 = vld [vmem:[%s2482 + $0x1a0] sm:$0xf]
          %v2553 = vld [vmem:[%s2482 + $0x1a4] sm:$0xff]
          %v2554 = vld [vmem:[%s2482 + $0x1ac] sm:$0xf]
          %v2555 = vld [vmem:[%s2482 + $0x1b0] sm:$0xff]
          %v2556 = vld [vmem:[%s2482 + $0x1b8] sm:$0xf]
          %v2557 = vld [vmem:[%s2482 + $0x1bc] sm:$0xff]
          %v2558 = vld [vmem:[%s2482 + $0x1c4] sm:$0xf]
          %v2559 = vld [vmem:[%s2482 + $0x1c8] sm:$0xff]
          %v2560 = vld [vmem:[%s2482 + $0x1d0] sm:$0xf]
          %v2561 = vld [vmem:[%s2482 + $0x1d4] sm:$0xff]
          %v2562 = vld [vmem:[%s2482 + $0x1dc] sm:$0xf]
          %v2563 = vld [vmem:[%s2482 + $0x1e0] sm:$0xff]
          %v2564 = vld [vmem:[%s2482 + $0x1e8] sm:$0xf]
          %v2565 = vld [vmem:[%s2482 + $0x1ec] sm:$0xff]
          %v2566 = vld [vmem:[%s2482 + $0x1f4] sm:$0xf]
          %v2567 = vld [vmem:[%s2482 + $0x1f8] sm:$0xff]
          %v2568 = vld [vmem:[%s2482 + $0x200] sm:$0xf]
          %v2569 = vld [vmem:[%s2482 + $0x204] sm:$0xff]
          %v2570 = vld [vmem:[%s2482 + $0x20c] sm:$0xf]
          %v2571 = vld [vmem:[%s2482 + $0x210] sm:$0xff]
          %v2572 = vld [vmem:[%s2482 + $0x218] sm:$0xf]
          %v2573 = vld [vmem:[%s2482 + $0x21c] sm:$0xff]
          %v2574 = vld [vmem:[%s2482 + $0x224] sm:$0xf]
          %v2575 = vld [vmem:[%s2482 + $0x228] sm:$0xff]
          %v2576 = vld [vmem:[%s2482 + $0x230] sm:$0xf]
          %v2577 = vld [vmem:[%s2482 + $0x234] sm:$0xff]
          %v2578 = vld [vmem:[%s2482 + $0x23c] sm:$0xf]
          %v2675 = vunpack.c.l.b16 %v2483
          %v2676 = vunpack.c.h.b16 %v2483
          %v2677 = vunpack.c.l.b16 %v2484
          %v2678 = vunpack.c.l.b16 %v2485
          %v2679 = vunpack.c.h.b16 %v2485
          %v2680 = vunpack.c.l.b16 %v2486
          %v2681 = vunpack.c.l.b16 %v2487
          %v2682 = vunpack.c.h.b16 %v2487
          %v2683 = vunpack.c.l.b16 %v2488
          %v2684 = vunpack.c.l.b16 %v2489
          %v2685 = vunpack.c.h.b16 %v2489
          %v2686 = vunpack.c.l.b16 %v2490
          %v2687 = vunpack.c.l.b16 %v2491
          %v2688 = vunpack.c.h.b16 %v2491
          %v2689 = vunpack.c.l.b16 %v2492
          %v2690 = vunpack.c.l.b16 %v2493
          %v2691 = vunpack.c.h.b16 %v2493
          %v2692 = vunpack.c.l.b16 %v2494
          %v2693 = vunpack.c.l.b16 %v2495
          %v2694 = vunpack.c.h.b16 %v2495
          %v2695 = vunpack.c.l.b16 %v2496
          %v2696 = vunpack.c.l.b16 %v2497
          %v2697 = vunpack.c.h.b16 %v2497
          %v2698 = vunpack.c.l.b16 %v2498
          %v2699 = vunpack.c.l.b16 %v2499
          %v2700 = vunpack.c.h.b16 %v2499
          %v2701 = vunpack.c.l.b16 %v2500
          %v2702 = vunpack.c.l.b16 %v2501
          %v2703 = vunpack.c.h.b16 %v2501
          %v2704 = vunpack.c.l.b16 %v2502
          %v2705 = vunpack.c.l.b16 %v2503
          %v2706 = vunpack.c.h.b16 %v2503
          %v2707 = vunpack.c.l.b16 %v2504
          %v2708 = vunpack.c.l.b16 %v2505
          %v2709 = vunpack.c.h.b16 %v2505
          %v2710 = vunpack.c.l.b16 %v2506
          %v2711 = vunpack.c.l.b16 %v2507
          %v2712 = vunpack.c.h.b16 %v2507
          %v2713 = vunpack.c.l.b16 %v2508
          %v2714 = vunpack.c.l.b16 %v2509
          %v2715 = vunpack.c.h.b16 %v2509
          %v2716 = vunpack.c.l.b16 %v2510
          %v2717 = vunpack.c.l.b16 %v2511
          %v2718 = vunpack.c.h.b16 %v2511
          %v2719 = vunpack.c.l.b16 %v2512
          %v2720 = vunpack.c.l.b16 %v2513
          %v2721 = vunpack.c.h.b16 %v2513
          %v2722 = vunpack.c.l.b16 %v2514
          %v2723 = vunpack.c.l.b16 %v2515
          %v2724 = vunpack.c.h.b16 %v2515
          %v2725 = vunpack.c.l.b16 %v2516
          %v2726 = vunpack.c.l.b16 %v2517
          %v2727 = vunpack.c.h.b16 %v2517
          %v2728 = vunpack.c.l.b16 %v2518
          %v2729 = vunpack.c.l.b16 %v2519
          %v2730 = vunpack.c.h.b16 %v2519
          %v2731 = vunpack.c.l.b16 %v2520
          %v2732 = vunpack.c.l.b16 %v2521
          %v2733 = vunpack.c.h.b16 %v2521
          %v2734 = vunpack.c.l.b16 %v2522
          %v2735 = vunpack.c.l.b16 %v2523
          %v2736 = vunpack.c.h.b16 %v2523
          %v2737 = vunpack.c.l.b16 %v2524
          %v2738 = vunpack.c.l.b16 %v2525
          %v2739 = vunpack.c.h.b16 %v2525
          %v2740 = vunpack.c.l.b16 %v2526
          %v2741 = vunpack.c.l.b16 %v2527
          %v2742 = vunpack.c.h.b16 %v2527
          %v2743 = vunpack.c.l.b16 %v2528
          %v2744 = vunpack.c.l.b16 %v2529
          %v2745 = vunpack.c.h.b16 %v2529
          %v2746 = vunpack.c.l.b16 %v2530
          %v2747 = vunpack.c.l.b16 %v2531
          %v2748 = vunpack.c.h.b16 %v2531
          %v2749 = vunpack.c.l.b16 %v2532
          %v2750 = vunpack.c.l.b16 %v2533
          %v2751 = vunpack.c.h.b16 %v2533
          %v2752 = vunpack.c.l.b16 %v2534
          %v2753 = vunpack.c.l.b16 %v2535
          %v2754 = vunpack.c.h.b16 %v2535
          %v2755 = vunpack.c.l.b16 %v2536
          %v2756 = vunpack.c.l.b16 %v2537
          %v2757 = vunpack.c.h.b16 %v2537
          %v2758 = vunpack.c.l.b16 %v2538
          %v2759 = vunpack.c.l.b16 %v2539
          %v2760 = vunpack.c.h.b16 %v2539
          %v2761 = vunpack.c.l.b16 %v2540
          %v2762 = vunpack.c.l.b16 %v2541
          %v2763 = vunpack.c.h.b16 %v2541
          %v2764 = vunpack.c.l.b16 %v2542
          %v2765 = vunpack.c.l.b16 %v2543
          %v2766 = vunpack.c.h.b16 %v2543
          %v2767 = vunpack.c.l.b16 %v2544
          %v2768 = vunpack.c.l.b16 %v2545
          %v2769 = vunpack.c.h.b16 %v2545
          %v2770 = vunpack.c.l.b16 %v2546
          %v2771 = vunpack.c.l.b16 %v2547
          %v2772 = vunpack.c.h.b16 %v2547
          %v2773 = vunpack.c.l.b16 %v2548
          %v2774 = vunpack.c.l.b16 %v2549
          %v2775 = vunpack.c.h.b16 %v2549
          %v2776 = vunpack.c.l.b16 %v2550
          %v2777 = vunpack.c.l.b16 %v2551
          %v2778 = vunpack.c.h.b16 %v2551
          %v2779 = vunpack.c.l.b16 %v2552
          %v2780 = vunpack.c.l.b16 %v2553
          %v2781 = vunpack.c.h.b16 %v2553
          %v2782 = vunpack.c.l.b16 %v2554
          %v2783 = vunpack.c.l.b16 %v2555
          %v2784 = vunpack.c.h.b16 %v2555
          %v2785 = vunpack.c.l.b16 %v2556
          %v2786 = vunpack.c.l.b16 %v2557
          %v2787 = vunpack.c.h.b16 %v2557
          %v2788 = vunpack.c.l.b16 %v2558
          %v2789 = vunpack.c.l.b16 %v2559
          %v2790 = vunpack.c.h.b16 %v2559
          %v2791 = vunpack.c.l.b16 %v2560
          %v2792 = vunpack.c.l.b16 %v2561
          %v2793 = vunpack.c.h.b16 %v2561
          %v2794 = vunpack.c.l.b16 %v2562
          %v2795 = vunpack.c.l.b16 %v2563
          %v2796 = vunpack.c.h.b16 %v2563
          %v2797 = vunpack.c.l.b16 %v2564
          %v2798 = vunpack.c.l.b16 %v2565
          %v2799 = vunpack.c.h.b16 %v2565
          %v2800 = vunpack.c.l.b16 %v2566
          %v2801 = vunpack.c.l.b16 %v2567
          %v2802 = vunpack.c.h.b16 %v2567
          %v2803 = vunpack.c.l.b16 %v2568
          %v2804 = vunpack.c.l.b16 %v2569
          %v2805 = vunpack.c.h.b16 %v2569
          %v2806 = vunpack.c.l.b16 %v2570
          %v2807 = vunpack.c.l.b16 %v2571
          %v2808 = vunpack.c.h.b16 %v2571
          %v2809 = vunpack.c.l.b16 %v2572
          %v2810 = vunpack.c.l.b16 %v2573
          %v2811 = vunpack.c.h.b16 %v2573
          %v2812 = vunpack.c.l.b16 %v2574
          %v2813 = vunpack.c.l.b16 %v2575
          %v2814 = vunpack.c.h.b16 %v2575
          %v2815 = vunpack.c.l.b16 %v2576
          %v2816 = vunpack.c.l.b16 %v2577
          %v2817 = vunpack.c.h.b16 %v2577
          %v2818 = vunpack.c.l.b16 %v2578
          %v2819 = vpack.c.b16 %v2678, %v2675
          %v2820 = vpack.c.b16 %v2679, %v2676
          %v2821 = vpack.c.b16 %v2680, %v2677
          %v2822 = vpack.c.b16 %v2684, %v2681
          %v2823 = vpack.c.b16 %v2685, %v2682
          %v2824 = vpack.c.b16 %v2686, %v2683
          %v2825 = vpack.c.b16 %v2690, %v2687
          %v2826 = vpack.c.b16 %v2691, %v2688
          %v2827 = vpack.c.b16 %v2692, %v2689
          %v2828 = vpack.c.b16 %v2696, %v2693
          %v2829 = vpack.c.b16 %v2697, %v2694
          %v2830 = vpack.c.b16 %v2698, %v2695
          %v2831 = vpack.c.b16 %v2702, %v2699
          %v2832 = vpack.c.b16 %v2703, %v2700
          %v2833 = vpack.c.b16 %v2704, %v2701
          %v2834 = vpack.c.b16 %v2708, %v2705
          %v2835 = vpack.c.b16 %v2709, %v2706
          %v2836 = vpack.c.b16 %v2710, %v2707
          %v2837 = vpack.c.b16 %v2714, %v2711
          %v2838 = vpack.c.b16 %v2715, %v2712
          %v2839 = vpack.c.b16 %v2716, %v2713
          %v2840 = vpack.c.b16 %v2720, %v2717
          %v2841 = vpack.c.b16 %v2721, %v2718
          %v2842 = vpack.c.b16 %v2722, %v2719
          %v2843 = vpack.c.b16 %v2726, %v2723
          %v2844 = vpack.c.b16 %v2727, %v2724
          %v2845 = vpack.c.b16 %v2728, %v2725
          %v2846 = vpack.c.b16 %v2732, %v2729
          %v2847 = vpack.c.b16 %v2733, %v2730
          %v2848 = vpack.c.b16 %v2734, %v2731
          %v2849 = vpack.c.b16 %v2738, %v2735
          %v2850 = vpack.c.b16 %v2739, %v2736
          %v2851 = vpack.c.b16 %v2740, %v2737
          %v2852 = vpack.c.b16 %v2744, %v2741
          %v2853 = vpack.c.b16 %v2745, %v2742
          %v2854 = vpack.c.b16 %v2746, %v2743
          %v2855 = vpack.c.b16 %v2750, %v2747
          %v2856 = vpack.c.b16 %v2751, %v2748
          %v2857 = vpack.c.b16 %v2752, %v2749
          %v2858 = vpack.c.b16 %v2756, %v2753
          %v2859 = vpack.c.b16 %v2757, %v2754
          %v2860 = vpack.c.b16 %v2758, %v2755
          %v2861 = vpack.c.b16 %v2762, %v2759
          %v2862 = vpack.c.b16 %v2763, %v2760
          %v2863 = vpack.c.b16 %v2764, %v2761
          %v2864 = vpack.c.b16 %v2768, %v2765
          %v2865 = vpack.c.b16 %v2769, %v2766
          %v2866 = vpack.c.b16 %v2770, %v2767
          %v2867 = vpack.c.b16 %v2774, %v2771
          %v2868 = vpack.c.b16 %v2775, %v2772
          %v2869 = vpack.c.b16 %v2776, %v2773
          %v2870 = vpack.c.b16 %v2780, %v2777
          %v2871 = vpack.c.b16 %v2781, %v2778
          %v2872 = vpack.c.b16 %v2782, %v2779
          %v2873 = vpack.c.b16 %v2786, %v2783
          %v2874 = vpack.c.b16 %v2787, %v2784
          %v2875 = vpack.c.b16 %v2788, %v2785
          %v2876 = vpack.c.b16 %v2792, %v2789
          %v2877 = vpack.c.b16 %v2793, %v2790
          %v2878 = vpack.c.b16 %v2794, %v2791
          %v2879 = vpack.c.b16 %v2798, %v2795
          %v2880 = vpack.c.b16 %v2799, %v2796
          %v2881 = vpack.c.b16 %v2800, %v2797
          %v2882 = vpack.c.b16 %v2804, %v2801
          %v2883 = vpack.c.b16 %v2805, %v2802
          %v2884 = vpack.c.b16 %v2806, %v2803
          %v2885 = vpack.c.b16 %v2810, %v2807
          %v2886 = vpack.c.b16 %v2811, %v2808
          %v2887 = vpack.c.b16 %v2812, %v2809
          %v2888 = vpack.c.b16 %v2816, %v2813
          %v2889 = vpack.c.b16 %v2817, %v2814
          %v2890 = vpack.c.b16 %v2818, %v2815
          %2963 = vmatprep.subr.bf16.mxu0 %v2820
          %2964 = vmatpush1.bf16.msra.mxu0 %v2819
          %2965 = vmatprep.subr.bf16.mxu0 %v2823
          %2966 = vmatpush1.bf16.msra.mxu0 %v2822
          %2967 = vmatprep.subr.bf16.mxu0 %v2826
          %2968 = vmatpush1.bf16.msra.mxu0 %v2825
          %2969 = vmatprep.subr.bf16.mxu0 %v2829
          %2970 = vmatpush1.bf16.msra.mxu0 %v2828
          %2971 = vmatprep.subr.bf16.mxu0 %v2832
          %2972 = vmatpush1.bf16.msra.mxu0 %v2831
          %2973 = vmatprep.subr.bf16.mxu0 %v2835
          %2974 = vmatpush1.bf16.msra.mxu0 %v2834
          %2975 = vmatprep.subr.bf16.mxu0 %v2838
          %2976 = vmatpush1.bf16.msra.mxu0 %v2837
          %2977 = vmatprep.subr.bf16.mxu0 %v2841
          %2978 = vmatpush1.bf16.msra.mxu0 %v2840
          %2979 = vmatprep.subr.bf16.mxu0 %v2844
          %2980 = vmatpush1.bf16.msra.mxu0 %v2843
          %2981 = vmatprep.subr.bf16.mxu0 %v2847
          %2982 = vmatpush1.bf16.msra.mxu0 %v2846
          %2983 = vmatprep.subr.bf16.mxu0 %v2850
          %2984 = vmatpush1.bf16.msra.mxu0 %v2849
          %2985 = vmatprep.subr.bf16.mxu0 %v2853
          %2986 = vmatpush1.bf16.msra.mxu0 %v2852
          %2987 = vmatprep.subr.bf16.mxu0 %v2856
          %2988 = vmatpush1.bf16.msra.mxu0 %v2855
          %2989 = vmatprep.subr.bf16.mxu0 %v2859
          %2990 = vmatpush1.bf16.msra.mxu0 %v2858
          %2991 = vmatprep.subr.bf16.mxu0 %v2862
          %2992 = vmatpush1.bf16.msra.mxu0 %v2861
          %2993 = vmatprep.subr.bf16.mxu0 %v2865
          %2994 = vmatpush1.bf16.msra.mxu0 %v2864
          %2995 = vmatprep.mubr.bf16.mxu0 %v2478
          %2996 = vmatmul.mubr.bf16.gmra.mrb[0].mxu0 %v2477
          %v2997 = vpop.f32.mrb[0].mxu0
          %v2998 = vadd.f32 0.0, %v2997
          %v2999 = vpop.f32.mrb[0].mxu0
          %v3000 = vadd.f32 0.0, %v2999
          %v3001 = vpop.f32.mrb[0].mxu0
          %v3002 = vadd.f32 0.0, %v3001
          %v3003 = vpop.f32.mrb[0].mxu0
          %v3004 = vadd.f32 0.0, %v3003
          %3005 = vdwg.mxu0
          %3006 = vmatprep.subr.bf16.mxu0 %v2868
          %3007 = vmatpush1.bf16.msra.mxu0 %v2867
          %3008 = vmatprep.subr.bf16.mxu0 %v2871
          %3009 = vmatpush1.bf16.msra.mxu0 %v2870
          %3010 = vmatprep.subr.bf16.mxu0 %v2874
          %3011 = vmatpush1.bf16.msra.mxu0 %v2873
          %3012 = vmatprep.subr.bf16.mxu0 %v2877
          %3013 = vmatpush1.bf16.msra.mxu0 %v2876
          %3014 = vmatprep.subr.bf16.mxu0 %v2880
          %3015 = vmatpush1.bf16.msra.mxu0 %v2879
          %3016 = vmatprep.subr.bf16.mxu0 %v2883
          %3017 = vmatpush1.bf16.msra.mxu0 %v2882
          %3018 = vmatprep.subr.bf16.mxu0 %v2886
          %3019 = vmatpush1.bf16.msra.mxu0 %v2885
          %3020 = vmatprep.subr.bf16.mxu0 %v2889
          %3021 = vmatpush1.bf16.msra.mxu0 %v2888
          %3022 = vmatprep.subr.bf16.mxu0 0
          %3023 = vmatpush1.bf16.msra.mxu0 0
          %3024 = vmatprep.subr.bf16.mxu0 0
          %3025 = vmatpush1.bf16.msra.mxu0 0
          %3026 = vmatprep.subr.bf16.mxu0 0
          %3027 = vmatpush1.bf16.msra.mxu0 0
          %3028 = vmatprep.subr.bf16.mxu0 0
          %3029 = vmatpush1.bf16.msra.mxu0 0
          %3030 = vmatprep.subr.bf16.mxu0 0
          %3031 = vmatpush1.bf16.msra.mxu0 0
          %3032 = vmatprep.subr.bf16.mxu0 0
          %3033 = vmatpush1.bf16.msra.mxu0 0
          %3034 = vmatprep.subr.bf16.mxu0 0
          %3035 = vmatpush1.bf16.msra.mxu0 0
          %3036 = vmatprep.subr.bf16.mxu0 0
          %3037 = vmatpush1.bf16.msra.mxu0 0
          %3038 = vmatprep.mubr.bf16.mxu0 0
          %3039 = vmatmul.mubr.bf16.gmra.mrb[0].mxu0 %v2479
          %v3040 = vpop.f32.mrb[0].mxu0
          %v3041 = vadd.f32 %v2998, %v3040
          %v3042 = vpop.f32.mrb[0].mxu0
          %v3043 = vadd.f32 %v3000, %v3042
          %v3044 = vpop.f32.mrb[0].mxu0
          %v3045 = vadd.f32 %v3002, %v3044
          %v3046 = vpop.f32.mrb[0].mxu0
          %v3047 = vadd.f32 %v3004, %v3046
          %3048 = vdwg.mxu0
          %3049 = vmatprep.subr.bf16.mxu0 0
          %3050 = vmatpush1.bf16.msra.mxu0 %v2821
          %3051 = vmatprep.subr.bf16.mxu0 0
          %3052 = vmatpush1.bf16.msra.mxu0 %v2824
          %3053 = vmatprep.subr.bf16.mxu0 0
          %3054 = vmatpush1.bf16.msra.mxu0 %v2827
          %3055 = vmatprep.subr.bf16.mxu0 0
          %3056 = vmatpush1.bf16.msra.mxu0 %v2830
          %3057 = vmatprep.subr.bf16.mxu0 0
          %3058 = vmatpush1.bf16.msra.mxu0 %v2833
          %3059 = vmatprep.subr.bf16.mxu0 0
          %3060 = vmatpush1.bf16.msra.mxu0 %v2836
          %3061 = vmatprep.subr.bf16.mxu0 0
          %3062 = vmatpush1.bf16.msra.mxu0 %v2839
          %3063 = vmatprep.subr.bf16.mxu0 0
          %3064 = vmatpush1.bf16.msra.mxu0 %v2842
          %3065 = vmatprep.subr.bf16.mxu0 0
          %3066 = vmatpush1.bf16.msra.mxu0 %v2845
          %3067 = vmatprep.subr.bf16.mxu0 0
          %3068 = vmatpush1.bf16.msra.mxu0 %v2848
          %3069 = vmatprep.subr.bf16.mxu0 0
          %3070 = vmatpush1.bf16.msra.mxu0 %v2851
          %3071 = vmatprep.subr.bf16.mxu0 0
          %3072 = vmatpush1.bf16.msra.mxu0 %v2854
          %3073 = vmatprep.subr.bf16.mxu0 0
          %3074 = vmatpush1.bf16.msra.mxu0 %v2857
          %3075 = vmatprep.subr.bf16.mxu0 0
          %3076 = vmatpush1.bf16.msra.mxu0 %v2860
          %3077 = vmatprep.subr.bf16.mxu0 0
          %3078 = vmatpush1.bf16.msra.mxu0 %v2863
          %3079 = vmatprep.subr.bf16.mxu0 0
          %3080 = vmatpush1.bf16.msra.mxu0 %v2866
          %3081 = vmatprep.mubr.bf16.mxu0 %v2478
          %3082 = vmatmul.mubr.bf16.gmra.mrb[0].mxu0 %v2477
          %v3083 = vpop.f32.mrb[0].mxu0
          %v3084 = vadd.f32 0.0, %v3083
          %v3085 = vpop.f32.mrb[0].mxu0
          %v3086 = vpop.f32.mrb[0].mxu0
          %v3087 = vadd.f32 0.0, %v3086
          %v3088 = vpop.f32.mrb[0].mxu0
          %3089 = vdwg.mxu0
          %3090 = vmatprep.subr.bf16.mxu0 0
          %3091 = vmatpush1.bf16.msra.mxu0 %v2869
          %3092 = vmatprep.subr.bf16.mxu0 0
          %3093 = vmatpush1.bf16.msra.mxu0 %v2872
          %3094 = vmatprep.subr.bf16.mxu0 0
          %3095 = vmatpush1.bf16.msra.mxu0 %v2875
          %3096 = vmatprep.subr.bf16.mxu0 0
          %3097 = vmatpush1.bf16.msra.mxu0 %v2878
          %3098 = vmatprep.subr.bf16.mxu0 0
          %3099 = vmatpush1.bf16.msra.mxu0 %v2881
          %3100 = vmatprep.subr.bf16.mxu0 0
          %3101 = vmatpush1.bf16.msra.mxu0 %v2884
          %3102 = vmatprep.subr.bf16.mxu0 0
          %3103 = vmatpush1.bf16.msra.mxu0 %v2887
          %3104 = vmatprep.subr.bf16.mxu0 0
          %3105 = vmatpush1.bf16.msra.mxu0 %v2890
          %3106 = vmatprep.subr.bf16.mxu0 0
          %3107 = vmatpush1.bf16.msra.mxu0 0
          %3108 = vmatprep.subr.bf16.mxu0 0
          %3109 = vmatpush1.bf16.msra.mxu0 0
          %3110 = vmatprep.subr.bf16.mxu0 0
          %3111 = vmatpush1.bf16.msra.mxu0 0
          %3112 = vmatprep.subr.bf16.mxu0 0
          %3113 = vmatpush1.bf16.msra.mxu0 0
          %3114 = vmatprep.subr.bf16.mxu0 0
          %3115 = vmatpush1.bf16.msra.mxu0 0
          %3116 = vmatprep.subr.bf16.mxu0 0
          %3117 = vmatpush1.bf16.msra.mxu0 0
          %3118 = vmatprep.subr.bf16.mxu0 0
          %3119 = vmatpush1.bf16.msra.mxu0 0
          %3120 = vmatprep.subr.bf16.mxu0 0
          %3121 = vmatpush1.bf16.msra.mxu0 0
          %3122 = vmatprep.mubr.bf16.mxu0 0
          %3123 = vmatmul.mubr.bf16.gmra.mrb[0].mxu0 %v2479
          %v3124 = vpop.f32.mrb[0].mxu0
          %v3125 = vadd.f32 %v3084, %v3124
          %v3126 = vpop.f32.mrb[0].mxu0
          %v3127 = vpop.f32.mrb[0].mxu0
          %v3128 = vadd.f32 %v3087, %v3127
          %v3129 = vpop.f32.mrb[0].mxu0
          %3130 = vdwg.mxu0
          %v3131 = vld [vmem:[%s349] sm:$0x7]
          %v3133 = vlaneseq
          %v3134 = vshrl.u32 %v3133, 7
          %v3135 = vsub.s32 0, %v3134
          %v3136 = vrot.slane %v3131, %v3135
          %v3137 = vlaneseq
          %v3138 = vshrl.u32 %v3137, 7
          %v3139 = vsub.s32 1, %v3138
          %v3140 = vrot.slane %v3131, %v3139
          %v3141 = vlaneseq
          %v3142 = vshrl.u32 %v3141, 7
          %v3143 = vsub.s32 2, %v3142
          %v3144 = vrot.slane %v3131, %v3143
          %v3148 = vmul.f32 %v3041, %v3136
          %v3149 = vmul.f32 %v3043, %v3140
          %v3150 = vmul.f32 %v3125, %v3144
          %v3151 = vmul.f32 %v3045, %v3136
          %v3152 = vmul.f32 %v3047, %v3140
          %v3153 = vmul.f32 %v3128, %v3144
          %s3154 = smul.u32 %s25, 3
          %s3155 = smul.addr %s3154, 8
          %s3156 = scalar_lea.vmem [#allocation3], %s3155
          %v3157 = vld [vmem:[%s3156] sm:$0xff]
          %v3158 = vld [vmem:[%s3156 + $0x8] sm:$0xff]
          %v3159 = vld [vmem:[%s3156 + $0x10] sm:$0xff]
          %v3160 = vunpack.c.l.bf16 %v3157
          %v3161 = vunpack.c.l.bf16 %v3158
          %v3162 = vunpack.c.l.bf16 %v3159
          %v3163 = vunpack.c.h.bf16 %v3157
          %v3164 = vunpack.c.h.bf16 %v3158
          %v3165 = vunpack.c.h.bf16 %v3159
          %v3166 = vld [vmem:[%s355] sm:$0xff]
          %v3167 = vld [vmem:[%s355 + $0x8] sm:$0xff]
          %v3168 = vld [vmem:[%s308] sm:$0xff]
          %v3169 = vld [vmem:[%s308 + $0x8] sm:$0xff]
          %vm3170 = vcmask 130048
          %v3172 = vsel %vm3170, %v3168, 0
          %v3175 = vsel %vm3170, %v3169, 0
          %3177 = vmatprep.subr.mxu0 %v3161
          %3178 = vmatpush1.msra.mxu0 %v3160
          %3179 = vmatprep.subr.mxu0 %v3164
          %3180 = vmatpush1.msra.mxu0 %v3163
          %3181 = vmatprep.subr.mxu0 0.0
          %3182 = vmatpush1.msra.mxu0 0.0
          %3183 = vmatprep.subr.mxu0 0.0
          %3184 = vmatpush1.msra.mxu0 0.0
          %3185 = vmatprep.subr.mxu0 0.0
          %3186 = vmatpush1.msra.mxu0 0.0
          %3187 = vmatprep.subr.mxu0 0.0
          %3188 = vmatpush1.msra.mxu0 0.0
          %3189 = vmatprep.subr.mxu0 0.0
          %3190 = vmatpush1.msra.mxu0 0.0
          %3191 = vmatprep.subr.mxu0 0.0
          %3192 = vmatpush1.msra.mxu0 0.0
          %3193 = vmatprep.subr.mxu0 0.0
          %3194 = vmatpush1.msra.mxu0 0.0
          %3195 = vmatprep.subr.mxu0 0.0
          %3196 = vmatpush1.msra.mxu0 0.0
          %3197 = vmatprep.subr.mxu0 0.0
          %3198 = vmatpush1.msra.mxu0 0.0
          %3199 = vmatprep.subr.mxu0 0.0
          %3200 = vmatpush1.msra.mxu0 0.0
          %3201 = vmatprep.subr.mxu0 0.0
          %3202 = vmatpush1.msra.mxu0 0.0
          %3203 = vmatprep.subr.mxu0 0.0
          %3204 = vmatpush1.msra.mxu0 0.0
          %3205 = vmatprep.subr.mxu0 0.0
          %3206 = vmatpush1.msra.mxu0 0.0
          %3207 = vmatprep.subr.mxu0 0.0
          %3208 = vmatpush1.msra.mxu0 0.0
          %3209 = vmatprep.subr.mxu0 0.0
          %3210 = vmatpush1.msra.mxu0 0.0
          %3211 = vmatprep.subr.mxu0 0.0
          %3212 = vmatpush1.msra.mxu0 0.0
          %3213 = vmatprep.subr.mxu0 0.0
          %3214 = vmatpush1.msra.mxu0 0.0
          %3215 = vmatprep.subr.mxu0 0.0
          %3216 = vmatpush1.msra.mxu0 0.0
          %3217 = vmatprep.subr.mxu0 0.0
          %3218 = vmatpush1.msra.mxu0 0.0
          %3219 = vmatprep.subr.mxu0 0.0
          %3220 = vmatpush1.msra.mxu0 0.0
          %3221 = vmatprep.subr.mxu0 0.0
          %3222 = vmatpush1.msra.mxu0 0.0
          %3223 = vmatprep.subr.mxu0 0.0
          %3224 = vmatpush1.msra.mxu0 0.0
          %3225 = vmatprep.subr.mxu0 0.0
          %3226 = vmatpush1.msra.mxu0 0.0
          %3227 = vmatprep.subr.mxu0 0.0
          %3228 = vmatpush1.msra.mxu0 0.0
          %3229 = vmatprep.subr.mxu0 0.0
          %3230 = vmatpush1.msra.mxu0 0.0
          %3231 = vmatprep.subr.mxu0 0.0
          %3232 = vmatpush1.msra.mxu0 0.0
          %3233 = vmatprep.subr.mxu0 0.0
          %3234 = vmatpush1.msra.mxu0 0.0
          %3235 = vmatprep.subr.mxu0 0.0
          %3236 = vmatpush1.msra.mxu0 0.0
          %3237 = vmatprep.subr.mxu0 0.0
          %3238 = vmatpush1.msra.mxu0 0.0
          %3239 = vmatprep.subr.mxu0 0.0
          %3240 = vmatpush1.msra.mxu0 0.0
          %3241 = vmatprep.mubr.f32.mxu0 0.0
          %3242 = vmatmul.mubr.f32.gmra.mrb[0].mxu0 %v3172
          %v3243 = vpop.f32.mrb[0].mxu0
          %v3244 = vadd.f32 0.0, %v3243
          %v3245 = vpop.f32.mrb[0].mxu0
          %v3246 = vadd.f32 0.0, %v3245
          %3247 = vmatprep.mubr.f32.mxu0 0.0
          %3248 = vmatmul.mubr.f32.gmra.mrb[0].mxu0 %v3175
          %v3249 = vpop.f32.mrb[0].mxu0
          %v3250 = vadd.f32 0.0, %v3249
          %v3251 = vpop.f32.mrb[0].mxu0
          %v3252 = vadd.f32 0.0, %v3251
          %3253 = vdwg.mxu0
          %3254 = vmatprep.subr.mxu0 0.0
          %3255 = vmatpush1.msra.mxu0 %v3162
          %3256 = vmatprep.subr.mxu0 0.0
          %3257 = vmatpush1.msra.mxu0 %v3165
          %3258 = vmatprep.subr.mxu0 0.0
          %3259 = vmatpush1.msra.mxu0 0.0
          %3260 = vmatprep.subr.mxu0 0.0
          %3261 = vmatpush1.msra.mxu0 0.0
          %3262 = vmatprep.subr.mxu0 0.0
          %3263 = vmatpush1.msra.mxu0 0.0
          %3264 = vmatprep.subr.mxu0 0.0
          %3265 = vmatpush1.msra.mxu0 0.0
          %3266 = vmatprep.subr.mxu0 0.0
          %3267 = vmatpush1.msra.mxu0 0.0
          %3268 = vmatprep.subr.mxu0 0.0
          %3269 = vmatpush1.msra.mxu0 0.0
          %3270 = vmatprep.subr.mxu0 0.0
          %3271 = vmatpush1.msra.mxu0 0.0
          %3272 = vmatprep.subr.mxu0 0.0
          %3273 = vmatpush1.msra.mxu0 0.0
          %3274 = vmatprep.subr.mxu0 0.0
          %3275 = vmatpush1.msra.mxu0 0.0
          %3276 = vmatprep.subr.mxu0 0.0
          %3277 = vmatpush1.msra.mxu0 0.0
          %3278 = vmatprep.subr.mxu0 0.0
          %3279 = vmatpush1.msra.mxu0 0.0
          %3280 = vmatprep.subr.mxu0 0.0
          %3281 = vmatpush1.msra.mxu0 0.0
          %3282 = vmatprep.subr.mxu0 0.0
          %3283 = vmatpush1.msra.mxu0 0.0
          %3284 = vmatprep.subr.mxu0 0.0
          %3285 = vmatpush1.msra.mxu0 0.0
          %3286 = vmatprep.subr.mxu0 0.0
          %3287 = vmatpush1.msra.mxu0 0.0
          %3288 = vmatprep.subr.mxu0 0.0
          %3289 = vmatpush1.msra.mxu0 0.0
          %3290 = vmatprep.subr.mxu0 0.0
          %3291 = vmatpush1.msra.mxu0 0.0
          %3292 = vmatprep.subr.mxu0 0.0
          %3293 = vmatpush1.msra.mxu0 0.0
          %3294 = vmatprep.subr.mxu0 0.0
          %3295 = vmatpush1.msra.mxu0 0.0
          %3296 = vmatprep.subr.mxu0 0.0
          %3297 = vmatpush1.msra.mxu0 0.0
          %3298 = vmatprep.subr.mxu0 0.0
          %3299 = vmatpush1.msra.mxu0 0.0
          %3300 = vmatprep.subr.mxu0 0.0
          %3301 = vmatpush1.msra.mxu0 0.0
          %3302 = vmatprep.subr.mxu0 0.0
          %3303 = vmatpush1.msra.mxu0 0.0
          %3304 = vmatprep.subr.mxu0 0.0
          %3305 = vmatpush1.msra.mxu0 0.0
          %3306 = vmatprep.subr.mxu0 0.0
          %3307 = vmatpush1.msra.mxu0 0.0
          %3308 = vmatprep.subr.mxu0 0.0
          %3309 = vmatpush1.msra.mxu0 0.0
          %3310 = vmatprep.subr.mxu0 0.0
          %3311 = vmatpush1.msra.mxu0 0.0
          %3312 = vmatprep.subr.mxu0 0.0
          %3313 = vmatpush1.msra.mxu0 0.0
          %3314 = vmatprep.subr.mxu0 0.0
          %3315 = vmatpush1.msra.mxu0 0.0
          %3316 = vmatprep.subr.mxu0 0.0
          %3317 = vmatpush1.msra.mxu0 0.0
          %3318 = vmatprep.mubr.f32.mxu0 0.0
          %3319 = vmatmul.mubr.f32.gmra.mrb[0].mxu0 %v3172
          %v3320 = vpop.f32.mrb[0].mxu0
          %v3321 = vadd.f32 0.0, %v3320
          %v3322 = vpop.f32.mrb[0].mxu0
          %3323 = vmatprep.mubr.f32.mxu0 0.0
          %3324 = vmatmul.mubr.f32.gmra.mrb[0].mxu0 %v3175
          %v3325 = vpop.f32.mrb[0].mxu0
          %v3326 = vadd.f32 0.0, %v3325
          %v3327 = vpop.f32.mrb[0].mxu0
          %3328 = vdwg.mxu0
          %v3330 = vsel %vm3170, %v3166, 0
          %v3333 = vsel %vm3170, %v3167, 0
          %3335 = vmatprep.subr.mxu0 %v3149
          %3336 = vmatpush1.msra.mxu0 %v3148
          %3337 = vmatprep.subr.mxu0 %v3152
          %3338 = vmatpush1.msra.mxu0 %v3151
          %3339 = vmatprep.subr.mxu0 0.0
          %3340 = vmatpush1.msra.mxu0 0.0
          %3341 = vmatprep.subr.mxu0 0.0
          %3342 = vmatpush1.msra.mxu0 0.0
          %3343 = vmatprep.subr.mxu0 0.0
          %3344 = vmatpush1.msra.mxu0 0.0
          %3345 = vmatprep.subr.mxu0 0.0
          %3346 = vmatpush1.msra.mxu0 0.0
          %3347 = vmatprep.subr.mxu0 0.0
          %3348 = vmatpush1.msra.mxu0 0.0
          %3349 = vmatprep.subr.mxu0 0.0
          %3350 = vmatpush1.msra.mxu0 0.0
          %3351 = vmatprep.subr.mxu0 0.0
          %3352 = vmatpush1.msra.mxu0 0.0
          %3353 = vmatprep.subr.mxu0 0.0
          %3354 = vmatpush1.msra.mxu0 0.0
          %3355 = vmatprep.subr.mxu0 0.0
          %3356 = vmatpush1.msra.mxu0 0.0
          %3357 = vmatprep.subr.mxu0 0.0
          %3358 = vmatpush1.msra.mxu0 0.0
          %3359 = vmatprep.subr.mxu0 0.0
          %3360 = vmatpush1.msra.mxu0 0.0
          %3361 = vmatprep.subr.mxu0 0.0
          %3362 = vmatpush1.msra.mxu0 0.0
          %3363 = vmatprep.subr.mxu0 0.0
          %3364 = vmatpush1.msra.mxu0 0.0
          %3365 = vmatprep.subr.mxu0 0.0
          %3366 = vmatpush1.msra.mxu0 0.0
          %3367 = vmatprep.subr.mxu0 0.0
          %3368 = vmatpush1.msra.mxu0 0.0
          %3369 = vmatprep.subr.mxu0 0.0
          %3370 = vmatpush1.msra.mxu0 0.0
          %3371 = vmatprep.subr.mxu0 0.0
          %3372 = vmatpush1.msra.mxu0 0.0
          %3373 = vmatprep.subr.mxu0 0.0
          %3374 = vmatpush1.msra.mxu0 0.0
          %3375 = vmatprep.subr.mxu0 0.0
          %3376 = vmatpush1.msra.mxu0 0.0
          %3377 = vmatprep.subr.mxu0 0.0
          %3378 = vmatpush1.msra.mxu0 0.0
          %3379 = vmatprep.subr.mxu0 0.0
          %3380 = vmatpush1.msra.mxu0 0.0
          %3381 = vmatprep.subr.mxu0 0.0
          %3382 = vmatpush1.msra.mxu0 0.0
          %3383 = vmatprep.subr.mxu0 0.0
          %3384 = vmatpush1.msra.mxu0 0.0
          %3385 = vmatprep.subr.mxu0 0.0
          %3386 = vmatpush1.msra.mxu0 0.0
          %3387 = vmatprep.subr.mxu0 0.0
          %3388 = vmatpush1.msra.mxu0 0.0
          %3389 = vmatprep.subr.mxu0 0.0
          %3390 = vmatpush1.msra.mxu0 0.0
          %3391 = vmatprep.subr.mxu0 0.0
          %3392 = vmatpush1.msra.mxu0 0.0
          %3393 = vmatprep.subr.mxu0 0.0
          %3394 = vmatpush1.msra.mxu0 0.0
          %3395 = vmatprep.subr.mxu0 0.0
          %3396 = vmatpush1.msra.mxu0 0.0
          %3397 = vmatprep.subr.mxu0 0.0
          %3398 = vmatpush1.msra.mxu0 0.0
          %3399 = vmatprep.mubr.f32.mxu0 0.0
          %3400 = vmatmul.mubr.f32.gmra.mrb[0].mxu0 %v3330
          %v3401 = vpop.f32.mrb[0].mxu0
          %v3402 = vadd.f32 %v3244, %v3401
          %v3403 = vpop.f32.mrb[0].mxu0
          %v3404 = vadd.f32 %v3246, %v3403
          %3405 = vmatprep.mubr.f32.mxu0 0.0
          %3406 = vmatmul.mubr.f32.gmra.mrb[0].mxu0 %v3333
          %v3407 = vpop.f32.mrb[0].mxu0
          %v3408 = vadd.f32 %v3250, %v3407
          %v3409 = vpop.f32.mrb[0].mxu0
          %v3410 = vadd.f32 %v3252, %v3409
          %3411 = vdwg.mxu0
          %3412 = vmatprep.subr.mxu0 0.0
          %3413 = vmatpush1.msra.mxu0 %v3150
          %3414 = vmatprep.subr.mxu0 0.0
          %3415 = vmatpush1.msra.mxu0 %v3153
          %3416 = vmatprep.subr.mxu0 0.0
          %3417 = vmatpush1.msra.mxu0 0.0
          %3418 = vmatprep.subr.mxu0 0.0
          %3419 = vmatpush1.msra.mxu0 0.0
          %3420 = vmatprep.subr.mxu0 0.0
          %3421 = vmatpush1.msra.mxu0 0.0
          %3422 = vmatprep.subr.mxu0 0.0
          %3423 = vmatpush1.msra.mxu0 0.0
          %3424 = vmatprep.subr.mxu0 0.0
          %3425 = vmatpush1.msra.mxu0 0.0
          %3426 = vmatprep.subr.mxu0 0.0
          %3427 = vmatpush1.msra.mxu0 0.0
          %3428 = vmatprep.subr.mxu0 0.0
          %3429 = vmatpush1.msra.mxu0 0.0
          %3430 = vmatprep.subr.mxu0 0.0
          %3431 = vmatpush1.msra.mxu0 0.0
          %3432 = vmatprep.subr.mxu0 0.0
          %3433 = vmatpush1.msra.mxu0 0.0
          %3434 = vmatprep.subr.mxu0 0.0
          %3435 = vmatpush1.msra.mxu0 0.0
          %3436 = vmatprep.subr.mxu0 0.0
          %3437 = vmatpush1.msra.mxu0 0.0
          %3438 = vmatprep.subr.mxu0 0.0
          %3439 = vmatpush1.msra.mxu0 0.0
          %3440 = vmatprep.subr.mxu0 0.0
          %3441 = vmatpush1.msra.mxu0 0.0
          %3442 = vmatprep.subr.mxu0 0.0
          %3443 = vmatpush1.msra.mxu0 0.0
          %3444 = vmatprep.subr.mxu0 0.0
          %3445 = vmatpush1.msra.mxu0 0.0
          %3446 = vmatprep.subr.mxu0 0.0
          %3447 = vmatpush1.msra.mxu0 0.0
          %3448 = vmatprep.subr.mxu0 0.0
          %3449 = vmatpush1.msra.mxu0 0.0
          %3450 = vmatprep.subr.mxu0 0.0
          %3451 = vmatpush1.msra.mxu0 0.0
          %3452 = vmatprep.subr.mxu0 0.0
          %3453 = vmatpush1.msra.mxu0 0.0
          %3454 = vmatprep.subr.mxu0 0.0
          %3455 = vmatpush1.msra.mxu0 0.0
          %3456 = vmatprep.subr.mxu0 0.0
          %3457 = vmatpush1.msra.mxu0 0.0
          %3458 = vmatprep.subr.mxu0 0.0
          %3459 = vmatpush1.msra.mxu0 0.0
          %3460 = vmatprep.subr.mxu0 0.0
          %3461 = vmatpush1.msra.mxu0 0.0
          %3462 = vmatprep.subr.mxu0 0.0
          %3463 = vmatpush1.msra.mxu0 0.0
          %3464 = vmatprep.subr.mxu0 0.0
          %3465 = vmatpush1.msra.mxu0 0.0
          %3466 = vmatprep.subr.mxu0 0.0
          %3467 = vmatpush1.msra.mxu0 0.0
          %3468 = vmatprep.subr.mxu0 0.0
          %3469 = vmatpush1.msra.mxu0 0.0
          %3470 = vmatprep.subr.mxu0 0.0
          %3471 = vmatpush1.msra.mxu0 0.0
          %3472 = vmatprep.subr.mxu0 0.0
          %3473 = vmatpush1.msra.mxu0 0.0
          %3474 = vmatprep.subr.mxu0 0.0
          %3475 = vmatpush1.msra.mxu0 0.0
          %3476 = vmatprep.mubr.f32.mxu0 0.0
          %3477 = vmatmul.mubr.f32.gmra.mrb[0].mxu0 %v3330
          %v3478 = vpop.f32.mrb[0].mxu0
          %v3479 = vadd.f32 %v3321, %v3478
          %v3480 = vpop.f32.mrb[0].mxu0
          %3481 = vmatprep.mubr.f32.mxu0 0.0
          %3482 = vmatmul.mubr.f32.gmra.mrb[0].mxu0 %v3333
          %v3483 = vpop.f32.mrb[0].mxu0
          %v3484 = vadd.f32 %v3326, %v3483
          %v3485 = vpop.f32.mrb[0].mxu0
          %3486 = vdwg.mxu0
          %v3487 = vld [vmem:[%s360] sm:$0xff]
          %v3488 = vld [vmem:[%s360 + $0x8] sm:$0xff]
          %3490 = vset.pattern.permute.xlu0 0
          %3491 = vperm.xlu0 %3490, %v3487
          %v3492 = vpop.permute.xlu0 %3491
          %3495 = vset.pattern.permute.xlu0 0
          %3496 = vperm.xlu0 %3495, %v3488
          %v3497 = vpop.permute.xlu0 %3496
          %v3499 = vadd.f32 %v3402, %v3492
          %v3500 = vadd.f32 %v3404, %v3492
          %v3501 = vadd.f32 %v3479, %v3492
          %v3502 = vadd.f32 %v3408, %v3497
          %v3503 = vadd.f32 %v3410, %v3497
          %v3504 = vadd.f32 %v3484, %v3497
          %v3505 = vpack.c.bf16 %v3502, %v3499
          %v3506 = vpack.c.bf16 %v3503, %v3500
          %v3507 = vpack.c.bf16 %v3504, %v3501
          %s3508 = smul.addr %s3154, 8
          %s3509 = scalar_lea.vmem [#allocation2], %s3508
          %3510 = vst [vmem:[%s3509] sm:$0xff] %v3505
          %3511 = vst [vmem:[%s3509 + $0x8] sm:$0xff] %v3506
          %3512 = vst [vmem:[%s3509 + $0x10] sm:$0xff] %v3507
          %3513 = vst [vmem:[#allocation10] sm:$0xff] %v3499
          %3514 = vst [vmem:[#allocation10 + $0x8] sm:$0xff] %v3500
          %3515 = vst [vmem:[#allocation10 + $0x10] sm:$0xff] %v3501
          %3516 = vst [vmem:[#allocation10 + $0x18] sm:$0xff] %v3502
          %3517 = vst [vmem:[#allocation10 + $0x20] sm:$0xff] %v3503
          %3518 = vst [vmem:[#allocation10 + $0x28] sm:$0xff] %v3504
        $region68: #{tpu_custom_call.1} parent=43 // pred_fallthru
          _
        // Predicated region
        $region69: #{tpu_custom_call.1} parent=43 // pred_check
          %p3519 = pneg %p196
        $region70: #{tpu_custom_call.1} parent=43 // pred_check_branch
          %3521 = sbr.rel (%p3519) target = $region72
        $region71: #{tpu_custom_call.1} parent=43 // pred_region
          %s3522 = smul.u32 3, %s25
          %s3524 = ssub.s32 768, 768
          %3525 = vsyncadd [#allocation6], %s3524
          %s3526 = smul.addr %s3522, 128
          %s3527 = scalar_lea.hbm %s6, %s3526
          %s3528 = sshll.u32 [#allocation10], 4
          %s3529 = int_to_ptr.vmem [resolvable:$true] %s3528
          %3534 = dma.vmem_to_hbm [thread:$0]  %s3529, 768, %s3527, [#allocation6], 384, 384, 24
        $region72: #{tpu_custom_call.1} parent=43 // pred_fallthru
          _
        // Predicated region
        $region73: #{tpu_custom_call.1} parent=43 // pred_check
          %p3535 = pneg %p196
        $region74: #{tpu_custom_call.1} parent=43 // pred_check_branch
          %3537 = sbr.rel (%p3535) target = $region76
        $region75: #{tpu_custom_call.1} parent=43 // pred_region
          %3538 = dma.done [#allocation6], 768
        $region76: #{tpu_custom_call.1} parent=43 // pred_fallthru
          _
      $region44: #{tpu_custom_call.1} parent=5 // pred_fallthru
        _
      %p3539 = scmp.le.s32.totalorder 2, %s15
      // Predicated region
      $region77: #{tpu_custom_call.1} parent=5 // pred_check
        %p3540 = pneg %p3539
      $region78: #{tpu_custom_call.1} parent=5 // pred_check_branch
        %3542 = sbr.rel (%p3540) target = $region80
      $region79: #{tpu_custom_call.1} parent=5 // pred_region
        %s3543 = ssub.s32 %s15, 2
      $region80: #{tpu_custom_call.1} parent=5 // pred_fallthru
        _
    $region6: #{tpu_custom_call.1} parent=1 // loop_footer
      %s19 = sadd.s32 1, %s15
    $region7: #{tpu_custom_call.1} parent=1 // loop_footer_branch
      %14 = sbr.rel target = $region3
    $region8: #{tpu_custom_call.1} parent=1 // loop_exit
      _
    %3544 = vsyncpa [#allocation5], 1
    %s3545 = scalar_lea.sflag [#allocation5], 1
    %3546 = vsyncpa %s3545, 1
    %3547 = vsyncpa [#allocation8], 1
    %3548 = vsyncpa [#allocation6], 1
    %s3549 = scalar_lea.sflag [#allocation6], 1
    %3550 = vsyncpa %s3549, 1

</llo_original>
